<compile_context>
chip_gen: v6e
topology: v6e:2x2x1
jax: 0.10.0
libtpu: 0.0.40
codegen_flags: <defaults>
</compile_context>

<pallas_src>
import math

import numpy as np
import jax
import jax.numpy as jnp
from jax.experimental import pallas as pl
from jax.experimental.pallas import tpu as pltpu


# --------------------------------------------------------------------------
# Fused kernel
# --------------------------------------------------------------------------
#
# Layout encoding (per 32-row sample block, bt samples per grid step):
#   x      : (bt*32, 96)   row = b*32 + h,        lane = w*3  + c   (bf16 in HBM)
#   conv1  : (bt*32, 168)  valid rows b*32+oh,    lane = ow*6 + oc
#   pool1  : valid rows b*32 + 2*ph,              lane = 12*pw + c  (uncompacted)
#   conv2  : (bt*32, 160)  valid rows b*32+2*oh2, lane = ow2*16 + oc2
#   pool2  : valid rows b*32 + 4*ph2,             lane = 32*pw2 + oc2
#   fc1    : valid row    b*32                    lanes 0..119
#   fc2/3  : compacted to (bt, ...) rows; output padded to 128 lanes.
# Row/lane shifts needed by conv taps and pooling never reach a valid output
# position of another sample, so pltpu.roll wrap-around only lands in padding
# rows/lanes that are never read downstream.

def _lenet_fused_kernel(x_ref, a1_ref, b1_ref, a2_ref, b2_ref,
                        w1_ref, c1_ref, w2_ref, c2_ref, w3_ref, c3_ref,
                        o_ref, hs_ref, hc_ref):
    f32 = jnp.float32
    bf16 = jnp.bfloat16
    # bf16 DMA; upcast once so sublane rolls stay on a 32-bit layout.
    x = x_ref[...].astype(f32)                      # (rows, 96)
    rows = x.shape[0]
    bt = rows // 32

    def shift_up(v, k, axis):
        # y[i] = v[i + k] along `axis` (k static, positive modular shift).
        if k == 0:
            return v
        return pltpu.roll(v, shift=v.shape[axis] - k, axis=axis)

    # ---- conv1 + bias + ReLU: 5 shifted lane-matmuls (one per kernel row ki)
    acc = jnp.zeros((rows, 168), f32)
    for ki in range(5):
        acc += jnp.dot(shift_up(x, ki, 0).astype(bf16), a1_ref[ki],
                       preferred_element_type=f32)
    acc = jnp.maximum(acc + b1_ref[...], 0.0)

    # ---- maxpool 2x2 #1 (lane roll pools ow pairs, sublane roll pools oh pairs)
    acc = jnp.maximum(acc, shift_up(acc, 6, 1))
    p1 = jnp.maximum(acc, shift_up(acc, 1, 0))

    # ---- conv2 + bias + ReLU (reads the uncompacted pooled map directly)
    acc2 = jnp.zeros((rows, 160), f32)
    for ki in range(5):
        acc2 += jnp.dot(shift_up(p1, 2 * ki, 0).astype(bf16), a2_ref[ki],
                        preferred_element_type=f32)
    acc2 = jnp.maximum(acc2 + b2_ref[...], 0.0)

    # ---- maxpool 2x2 #2
    acc2 = jnp.maximum(acc2, shift_up(acc2, 16, 1))
    q = jnp.maximum(acc2, shift_up(acc2, 2, 0))

    # ---- flatten (torch (c,h,w) order) + fc1 + ReLU, folded into 5 matmuls
    h = jnp.zeros((rows, 120), f32)
    for ph in range(5):
        h += jnp.dot(shift_up(q, 4 * ph, 0).astype(bf16), w1_ref[ph],
                     preferred_element_type=f32)
    h = jnp.maximum(h + c1_ref[...], 0.0)

    # ---- compact: only row 32*b of each sample block carries the fc1 result.
    # Round-trip through VMEM scratch and gather the bt valid rows so fc2/fc3
    # and the HBM store run on a dense (bt, ...) slab.
    hs_ref[...] = h
    for b in range(bt):
        hc_ref[pl.ds(b, 1), :] = hs_ref[pl.ds(32 * b, 1), :]
    hc = hc_ref[...]                                # (bt, 120) f32

    # ---- fc2 + ReLU, fc3 (output padded to 128 lanes -> dense store)
    h2 = jnp.maximum(jnp.dot(hc.astype(bf16), w2_ref[...],
                             preferred_element_type=f32) + c2_ref[...], 0.0)
    o_ref[...] = jnp.dot(h2.astype(bf16), w3_ref[...],
                         preferred_element_type=f32) + c3_ref[...]


# --------------------------------------------------------------------------
# Wrapper
# --------------------------------------------------------------------------

def _choose_tiling(B, cap=32):
    """Pick (batch_tile, padded_batch, grid_steps).

    * batch tile up to `cap` samples (rows = bt*32 <= 1024) to amortize the
      ~0.35us/step pipeline overhead and grow matmul M,
    * bt is a multiple of 8 whenever grid > 1 (keeps the (bt, 128) output
      block tiling-legal); awkward batches are padded up, never degraded to
      a tiny tile,
    * aim for >= 2 grid steps so the "parallel" axis spans both v7x cores.
    """
    if B <= 8:
        return B, B, 1                      # single step; block == full array
    bt = max(8, min(cap, (B // 2) // 8 * 8))
    grid = -(-B // bt)                      # cdiv
    return bt, bt * grid, grid


def net_forward(x_nchw, prepped):
    a1, b1, a2, b2, w1e, c1, w2, c2, w3, c3 = prepped
    B = x_nchw.shape[0]
    assert x_nchw.shape[1:] == (3, 32, 32), "Net expects (B, 3, 32, 32) inputs"

    bt, Bp, gsteps = _choose_tiling(B)
    if Bp != B:
        x_nchw = jnp.pad(x_nchw, ((0, Bp - B), (0, 0), (0, 0), (0, 0)))

    # Single cheap input relayout: NCHW -> rows=(sample, h), lanes=(w, c), bf16.
    x2d = (jnp.transpose(x_nchw, (0, 2, 3, 1))
           .reshape(Bp * 32, 32 * 3)
           .astype(jnp.bfloat16))

    rows = bt * 32
    const2 = lambda i: (0, 0)
    const3 = lambda i: (0, 0, 0)

    out = pl.pallas_call(
        _lenet_fused_kernel,
        out_shape=jax.ShapeDtypeStruct((Bp, 128), jnp.float32),
        grid=(gsteps,),
        in_specs=[
            pl.BlockSpec((rows, 96), lambda i: (i, 0)),      # input tile (bf16)
            pl.BlockSpec((5, 96, 168), const3),              # conv1 taps (resident)
            pl.BlockSpec((1, 168), const2),
            pl.BlockSpec((5, 168, 160), const3),             # conv2 taps
            pl.BlockSpec((1, 160), const2),
            pl.BlockSpec((5, 160, 120), const3),             # flatten+fc1 folded
            pl.BlockSpec((1, 120), const2),
            pl.BlockSpec((120, 84), const2),                 # fc2
            pl.BlockSpec((1, 84), const2),
            pl.BlockSpec((84, 128), const2),                 # fc3 (lane-padded)
            pl.BlockSpec((1, 128), const2),
        ],
        out_specs=pl.BlockSpec((bt, 128), lambda i: (i, 0)),  # compact logits
        scratch_shapes=[pltpu.VMEM((rows, 120), jnp.float32),  # fc1 staging
                        pltpu.VMEM((bt, 120), jnp.float32)],   # compacted rows
        compiler_params=pltpu.CompilerParams(
            dimension_semantics=("parallel",),
            vmem_limit_bytes=32 * 1024 * 1024,
        ),
    )(x2d, a1, b1, a2, b2, w1e, c1, w2, c2, w3, c3)

    return out[:B, :10]


# --------------------------------------------------------------------------
# Parameters (torch layout) and one-time host-side weight folding
# --------------------------------------------------------------------------

def init_params(key):
    """PyTorch-default U(-1/sqrt(fan_in), +1/sqrt(fan_in)) init, torch layouts."""
    def u(k, shape, fan_in):
        b = 1.0 / math.sqrt(fan_in)
        return jax.random.uniform(k, shape, jnp.float32, -b, b)

    ks = jax.random.split(key, 10)
    return dict(
        conv1_w=u(ks[0], (6, 3, 5, 5), 3 * 25),  conv1_b=u(ks[1], (6,), 3 * 25),
        conv2_w=u(ks[2], (16, 6, 5, 5), 6 * 25), conv2_b=u(ks[3], (16,), 6 * 25),
        fc1_w=u(ks[4], (120, 400), 400),         fc1_b=u(ks[5], (120,), 400),
        fc2_w=u(ks[6], (84, 120), 120),          fc2_b=u(ks[7], (84,), 120),
        fc3_w=u(ks[8], (10, 84), 84),            fc3_b=u(ks[9], (10,), 84),
    )


def prepare_params(params):
    """Fold im2col / pooling layout / NCHW-flatten into constant matmul operands."""
    w1 = np.asarray(params["conv1_w"], np.float32)
    w2 = np.asarray(params["conv2_w"], np.float32)
    f1 = np.asarray(params["fc1_w"], np.float32)
    f2 = np.asarray(params["fc2_w"], np.float32)
    f3 = np.asarray(params["fc3_w"], np.float32)

    # conv1 taps: per kernel row ki, lane transform (w*3+c) -> (ow*6+oc).
    a1 = np.zeros((5, 96, 168), np.float32)
    for ki in range(5):
        for ow in range(28):
            for kj in range(5):
                a1[ki, (ow + kj) * 3:(ow + kj) * 3 + 3,
                   ow * 6:ow * 6 + 6] = w1[:, :, ki, kj].T
    # conv2 taps: read un-compacted pooled lanes (12*pw+c) -> (ow2*16+oc2).
    a2 = np.zeros((5, 168, 160), np.float32)
    for ki in range(5):
        for ow in range(10):
            for kj in range(5):
                a2[ki, (ow + kj) * 12:(ow + kj) * 12 + 6,
                   ow * 16:ow * 16 + 16] = w2[:, :, ki, kj].T
    # flatten (torch c,h,w order) + fc1, one slab per pooled row ph:
    # lane 32*pw + oc  corresponds to torch flat index oc*25 + ph*5 + pw.
    w1e = np.zeros((5, 160, 120), np.float32)
    for ph in range(5):
        for pw in range(5):
            cols = np.arange(16) * 25 + ph * 5 + pw
            w1e[ph, 32 * pw:32 * pw + 16, :] = f1[:, cols].T

    b1 = np.tile(np.asarray(params["conv1_b"], np.float32), 28)[None, :]   # (1, 168)
    b2 = np.tile(np.asarray(params["conv2_b"], np.float32), 10)[None, :]   # (1, 160)
    c1 = np.asarray(params["fc1_b"], np.float32)[None, :]                  # (1, 120)
    c2 = np.asarray(params["fc2_b"], np.float32)[None, :]                  # (1, 84)
    w3 = np.zeros((84, 128), np.float32)
    w3[:, :10] = f3.T                                                      # lane-dense fc3
    c3 = np.zeros((1, 128), np.float32)
    c3[0, :10] = np.asarray(params["fc3_b"], np.float32)

    bf = jnp.bfloat16
    return (jnp.asarray(a1, bf), jnp.asarray(b1), jnp.asarray(a2, bf), jnp.asarray(b2),
            jnp.asarray(w1e, bf), jnp.asarray(c1), jnp.asarray(f2.T, bf), jnp.asarray(c2),
            jnp.asarray(w3, bf), jnp.asarray(c3))


# --------------------------------------------------------------------------

if __name__ == "__main__":
    key = jax.random.PRNGKey(0)
    kx, kp = jax.random.split(key)
    x = jax.random.normal(kx, (2, 3, 32, 32), jnp.float32)   # batch=2, CIFAR-sized input
    params = init_params(kp)
    prepped = prepare_params(params)                         # one-time weight folding

    fwd = jax.jit(net_forward)
    out = jax.block_until_ready(fwd(x, prepped))

    assert out.shape == (2, 10), out.shape
    assert bool(jnp.all(jnp.isfinite(out)))
    print("KERNEL_OK")
</pallas_src>

<mosaic_0001>
module attributes {stable_mosaic.version = 11 : i64} {
  func.func @_lenet_fused_kernel(%arg0: i32, %arg1: memref<64x96xbf16, #tpu.memory_space<vmem>>, %arg2: memref<5x96x168xbf16, #tpu.memory_space<vmem>>, %arg3: memref<1x168xf32, #tpu.memory_space<vmem>>, %arg4: memref<5x168x160xbf16, #tpu.memory_space<vmem>>, %arg5: memref<1x160xf32, #tpu.memory_space<vmem>>, %arg6: memref<5x160x120xbf16, #tpu.memory_space<vmem>>, %arg7: memref<1x120xf32, #tpu.memory_space<vmem>>, %arg8: memref<120x84xbf16, #tpu.memory_space<vmem>>, %arg9: memref<1x84xf32, #tpu.memory_space<vmem>>, %arg10: memref<84x128xbf16, #tpu.memory_space<vmem>>, %arg11: memref<1x128xf32, #tpu.memory_space<vmem>>, %arg12: memref<2x128xf32, #tpu.memory_space<vmem>>, %arg13: memref<64x120xf32, #tpu.memory_space<vmem>>, %arg14: memref<2x120xf32, #tpu.memory_space<vmem>>) attributes {dimension_semantics = [#tpu.dimension_semantics<parallel>], iteration_bounds = array<i64: 1>, scalar_prefetch = 0 : i64, scratch_operands = 2 : i64, tpu.core_type = #tpu.core_type<tc>, window_params = [{transform_indices = @transform_0, window_bounds = array<i64: 64, 96>}, {pipeline_mode = #tpu.pipeline_mode<synchronous>, transform_indices = @transform_1, window_bounds = array<i64: 5, 96, 168>}, {pipeline_mode = #tpu.pipeline_mode<synchronous>, transform_indices = @transform_2, window_bounds = array<i64: 1, 168>}, {pipeline_mode = #tpu.pipeline_mode<synchronous>, transform_indices = @transform_3, window_bounds = array<i64: 5, 168, 160>}, {pipeline_mode = #tpu.pipeline_mode<synchronous>, transform_indices = @transform_4, window_bounds = array<i64: 1, 160>}, {pipeline_mode = #tpu.pipeline_mode<synchronous>, transform_indices = @transform_5, window_bounds = array<i64: 5, 160, 120>}, {pipeline_mode = #tpu.pipeline_mode<synchronous>, transform_indices = @transform_6, window_bounds = array<i64: 1, 120>}, {pipeline_mode = #tpu.pipeline_mode<synchronous>, transform_indices = @transform_7, window_bounds = array<i64: 120, 84>}, {pipeline_mode = #tpu.pipeline_mode<synchronous>, transform_indices = @transform_8, window_bounds = array<i64: 1, 84>}, {pipeline_mode = #tpu.pipeline_mode<synchronous>, transform_indices = @transform_9, window_bounds = array<i64: 84, 128>}, {pipeline_mode = #tpu.pipeline_mode<synchronous>, transform_indices = @transform_10, window_bounds = array<i64: 1, 128>}, {transform_indices = @transform_11, window_bounds = array<i64: 2, 128>}]} {
    %c0 = arith.constant 0 : index
    %c0_0 = arith.constant 0 : index
    %0 = vector.load %arg1[%c0, %c0_0] : memref<64x96xbf16, #tpu.memory_space<vmem>>, vector<64x96xbf16>
    %1 = arith.extf %0 : vector<64x96xbf16> to vector<64x96xf32>
    %cst = arith.constant 0.000000e+00 : f32
    %2 = vector.broadcast %cst : f32 to vector<64x168xf32>
    %3 = arith.truncf %1 : vector<64x96xf32> to vector<64x96xbf16>
    %c0_1 = arith.constant 0 : index
    %c0_2 = arith.constant 0 : index
    %c0_3 = arith.constant 0 : index
    %4 = vector.load %arg2[%c0_1, %c0_2, %c0_3] : memref<5x96x168xbf16, #tpu.memory_space<vmem>>, vector<1x96x168xbf16>
    %5 = vector.shape_cast %4 : vector<1x96x168xbf16> to vector<96x168xbf16>
    %cst_4 = arith.constant dense<0.000000e+00> : vector<64x168xf32>
    %6 = tpu.matmul %3, %5, %cst_4 {dimension_numbers = #tpu.dot_dimension_numbers<[1], [0], [0], [1], [0, 0, 1, 1], [], []>} : vector<64x96xbf16>, vector<96x168xbf16>, vector<64x168xf32> -> vector<64x168xf32>
    %7 = arith.addf %2, %6 : vector<64x168xf32>
    %c63_i32 = arith.constant 63 : i32
    %8 = tpu.dynamic_rotate %1 by %c63_i32 dim 0 : vector<64x96xf32>, i32 -> vector<64x96xf32>
    %9 = arith.truncf %8 : vector<64x96xf32> to vector<64x96xbf16>
    %c1 = arith.constant 1 : index
    %c0_5 = arith.constant 0 : index
    %c0_6 = arith.constant 0 : index
    %10 = vector.load %arg2[%c1, %c0_5, %c0_6] : memref<5x96x168xbf16, #tpu.memory_space<vmem>>, vector<1x96x168xbf16>
    %11 = vector.shape_cast %10 : vector<1x96x168xbf16> to vector<96x168xbf16>
    %cst_7 = arith.constant dense<0.000000e+00> : vector<64x168xf32>
    %12 = tpu.matmul %9, %11, %cst_7 {dimension_numbers = #tpu.dot_dimension_numbers<[1], [0], [0], [1], [0, 0, 1, 1], [], []>} : vector<64x96xbf16>, vector<96x168xbf16>, vector<64x168xf32> -> vector<64x168xf32>
    %13 = arith.addf %7, %12 : vector<64x168xf32>
    %c62_i32 = arith.constant 62 : i32
    %14 = tpu.dynamic_rotate %1 by %c62_i32 dim 0 : vector<64x96xf32>, i32 -> vector<64x96xf32>
    %15 = arith.truncf %14 : vector<64x96xf32> to vector<64x96xbf16>
    %c2 = arith.constant 2 : index
    %c0_8 = arith.constant 0 : index
    %c0_9 = arith.constant 0 : index
    %16 = vector.load %arg2[%c2, %c0_8, %c0_9] : memref<5x96x168xbf16, #tpu.memory_space<vmem>>, vector<1x96x168xbf16>
    %17 = vector.shape_cast %16 : vector<1x96x168xbf16> to vector<96x168xbf16>
    %cst_10 = arith.constant dense<0.000000e+00> : vector<64x168xf32>
    %18 = tpu.matmul %15, %17, %cst_10 {dimension_numbers = #tpu.dot_dimension_numbers<[1], [0], [0], [1], [0, 0, 1, 1], [], []>} : vector<64x96xbf16>, vector<96x168xbf16>, vector<64x168xf32> -> vector<64x168xf32>
    %19 = arith.addf %13, %18 : vector<64x168xf32>
    %c61_i32 = arith.constant 61 : i32
    %20 = tpu.dynamic_rotate %1 by %c61_i32 dim 0 : vector<64x96xf32>, i32 -> vector<64x96xf32>
    %21 = arith.truncf %20 : vector<64x96xf32> to vector<64x96xbf16>
    %c3 = arith.constant 3 : index
    %c0_11 = arith.constant 0 : index
    %c0_12 = arith.constant 0 : index
    %22 = vector.load %arg2[%c3, %c0_11, %c0_12] : memref<5x96x168xbf16, #tpu.memory_space<vmem>>, vector<1x96x168xbf16>
    %23 = vector.shape_cast %22 : vector<1x96x168xbf16> to vector<96x168xbf16>
    %cst_13 = arith.constant dense<0.000000e+00> : vector<64x168xf32>
    %24 = tpu.matmul %21, %23, %cst_13 {dimension_numbers = #tpu.dot_dimension_numbers<[1], [0], [0], [1], [0, 0, 1, 1], [], []>} : vector<64x96xbf16>, vector<96x168xbf16>, vector<64x168xf32> -> vector<64x168xf32>
    %25 = arith.addf %19, %24 : vector<64x168xf32>
    %c60_i32 = arith.constant 60 : i32
    %26 = tpu.dynamic_rotate %1 by %c60_i32 dim 0 : vector<64x96xf32>, i32 -> vector<64x96xf32>
    %27 = arith.truncf %26 : vector<64x96xf32> to vector<64x96xbf16>
    %c4 = arith.constant 4 : index
    %c0_14 = arith.constant 0 : index
    %c0_15 = arith.constant 0 : index
    %28 = vector.load %arg2[%c4, %c0_14, %c0_15] : memref<5x96x168xbf16, #tpu.memory_space<vmem>>, vector<1x96x168xbf16>
    %29 = vector.shape_cast %28 : vector<1x96x168xbf16> to vector<96x168xbf16>
    %cst_16 = arith.constant dense<0.000000e+00> : vector<64x168xf32>
    %30 = tpu.matmul %27, %29, %cst_16 {dimension_numbers = #tpu.dot_dimension_numbers<[1], [0], [0], [1], [0, 0, 1, 1], [], []>} : vector<64x96xbf16>, vector<96x168xbf16>, vector<64x168xf32> -> vector<64x168xf32>
    %31 = arith.addf %25, %30 : vector<64x168xf32>
    %c0_17 = arith.constant 0 : index
    %c0_18 = arith.constant 0 : index
    %32 = vector.load %arg3[%c0_17, %c0_18] : memref<1x168xf32, #tpu.memory_space<vmem>>, vector<1x168xf32>
    %33 = vector.broadcast %32 : vector<1x168xf32> to vector<64x168xf32>
    %34 = arith.addf %31, %33 : vector<64x168xf32>
    %cst_19 = arith.constant 0.000000e+00 : f32
    %35 = vector.broadcast %cst_19 : f32 to vector<64x168xf32>
    %36 = arith.maximumf %34, %35 : vector<64x168xf32>
    %c162_i32 = arith.constant 162 : i32
    %37 = tpu.dynamic_rotate %36 by %c162_i32 dim 1 : vector<64x168xf32>, i32 -> vector<64x168xf32>
    %38 = arith.maximumf %36, %37 : vector<64x168xf32>
    %c63_i32_20 = arith.constant 63 : i32
    %39 = tpu.dynamic_rotate %38 by %c63_i32_20 dim 0 : vector<64x168xf32>, i32 -> vector<64x168xf32>
    %40 = arith.maximumf %38, %39 : vector<64x168xf32>
    %cst_21 = arith.constant 0.000000e+00 : f32
    %41 = vector.broadcast %cst_21 : f32 to vector<64x160xf32>
    %42 = arith.truncf %40 : vector<64x168xf32> to vector<64x168xbf16>
    %c0_22 = arith.constant 0 : index
    %c0_23 = arith.constant 0 : index
    %c0_24 = arith.constant 0 : index
    %43 = vector.load %arg4[%c0_22, %c0_23, %c0_24] : memref<5x168x160xbf16, #tpu.memory_space<vmem>>, vector<1x168x160xbf16>
    %44 = vector.shape_cast %43 : vector<1x168x160xbf16> to vector<168x160xbf16>
    %cst_25 = arith.constant dense<0.000000e+00> : vector<64x160xf32>
    %45 = tpu.matmul %42, %44, %cst_25 {dimension_numbers = #tpu.dot_dimension_numbers<[1], [0], [0], [1], [0, 0, 1, 1], [], []>} : vector<64x168xbf16>, vector<168x160xbf16>, vector<64x160xf32> -> vector<64x160xf32>
    %46 = arith.addf %41, %45 : vector<64x160xf32>
    %c62_i32_26 = arith.constant 62 : i32
    %47 = tpu.dynamic_rotate %40 by %c62_i32_26 dim 0 : vector<64x168xf32>, i32 -> vector<64x168xf32>
    %48 = arith.truncf %47 : vector<64x168xf32> to vector<64x168xbf16>
    %c1_27 = arith.constant 1 : index
    %c0_28 = arith.constant 0 : index
    %c0_29 = arith.constant 0 : index
    %49 = vector.load %arg4[%c1_27, %c0_28, %c0_29] : memref<5x168x160xbf16, #tpu.memory_space<vmem>>, vector<1x168x160xbf16>
    %50 = vector.shape_cast %49 : vector<1x168x160xbf16> to vector<168x160xbf16>
    %cst_30 = arith.constant dense<0.000000e+00> : vector<64x160xf32>
    %51 = tpu.matmul %48, %50, %cst_30 {dimension_numbers = #tpu.dot_dimension_numbers<[1], [0], [0], [1], [0, 0, 1, 1], [], []>} : vector<64x168xbf16>, vector<168x160xbf16>, vector<64x160xf32> -> vector<64x160xf32>
    %52 = arith.addf %46, %51 : vector<64x160xf32>
    %c60_i32_31 = arith.constant 60 : i32
    %53 = tpu.dynamic_rotate %40 by %c60_i32_31 dim 0 : vector<64x168xf32>, i32 -> vector<64x168xf32>
    %54 = arith.truncf %53 : vector<64x168xf32> to vector<64x168xbf16>
    %c2_32 = arith.constant 2 : index
    %c0_33 = arith.constant 0 : index
    %c0_34 = arith.constant 0 : index
    %55 = vector.load %arg4[%c2_32, %c0_33, %c0_34] : memref<5x168x160xbf16, #tpu.memory_space<vmem>>, vector<1x168x160xbf16>
    %56 = vector.shape_cast %55 : vector<1x168x160xbf16> to vector<168x160xbf16>
    %cst_35 = arith.constant dense<0.000000e+00> : vector<64x160xf32>
    %57 = tpu.matmul %54, %56, %cst_35 {dimension_numbers = #tpu.dot_dimension_numbers<[1], [0], [0], [1], [0, 0, 1, 1], [], []>} : vector<64x168xbf16>, vector<168x160xbf16>, vector<64x160xf32> -> vector<64x160xf32>
    %58 = arith.addf %52, %57 : vector<64x160xf32>
    %c58_i32 = arith.constant 58 : i32
    %59 = tpu.dynamic_rotate %40 by %c58_i32 dim 0 : vector<64x168xf32>, i32 -> vector<64x168xf32>
    %60 = arith.truncf %59 : vector<64x168xf32> to vector<64x168xbf16>
    %c3_36 = arith.constant 3 : index
    %c0_37 = arith.constant 0 : index
    %c0_38 = arith.constant 0 : index
    %61 = vector.load %arg4[%c3_36, %c0_37, %c0_38] : memref<5x168x160xbf16, #tpu.memory_space<vmem>>, vector<1x168x160xbf16>
    %62 = vector.shape_cast %61 : vector<1x168x160xbf16> to vector<168x160xbf16>
    %cst_39 = arith.constant dense<0.000000e+00> : vector<64x160xf32>
    %63 = tpu.matmul %60, %62, %cst_39 {dimension_numbers = #tpu.dot_dimension_numbers<[1], [0], [0], [1], [0, 0, 1, 1], [], []>} : vector<64x168xbf16>, vector<168x160xbf16>, vector<64x160xf32> -> vector<64x160xf32>
    %64 = arith.addf %58, %63 : vector<64x160xf32>
    %c56_i32 = arith.constant 56 : i32
    %65 = tpu.dynamic_rotate %40 by %c56_i32 dim 0 : vector<64x168xf32>, i32 -> vector<64x168xf32>
    %66 = arith.truncf %65 : vector<64x168xf32> to vector<64x168xbf16>
    %c4_40 = arith.constant 4 : index
    %c0_41 = arith.constant 0 : index
    %c0_42 = arith.constant 0 : index
    %67 = vector.load %arg4[%c4_40, %c0_41, %c0_42] : memref<5x168x160xbf16, #tpu.memory_space<vmem>>, vector<1x168x160xbf16>
    %68 = vector.shape_cast %67 : vector<1x168x160xbf16> to vector<168x160xbf16>
    %cst_43 = arith.constant dense<0.000000e+00> : vector<64x160xf32>
    %69 = tpu.matmul %66, %68, %cst_43 {dimension_numbers = #tpu.dot_dimension_numbers<[1], [0], [0], [1], [0, 0, 1, 1], [], []>} : vector<64x168xbf16>, vector<168x160xbf16>, vector<64x160xf32> -> vector<64x160xf32>
    %70 = arith.addf %64, %69 : vector<64x160xf32>
    %c0_44 = arith.constant 0 : index
    %c0_45 = arith.constant 0 : index
    %71 = vector.load %arg5[%c0_44, %c0_45] : memref<1x160xf32, #tpu.memory_space<vmem>>, vector<1x160xf32>
    %72 = vector.broadcast %71 : vector<1x160xf32> to vector<64x160xf32>
    %73 = arith.addf %70, %72 : vector<64x160xf32>
    %cst_46 = arith.constant 0.000000e+00 : f32
    %74 = vector.broadcast %cst_46 : f32 to vector<64x160xf32>
    %75 = arith.maximumf %73, %74 : vector<64x160xf32>
    %c144_i32 = arith.constant 144 : i32
    %76 = tpu.dynamic_rotate %75 by %c144_i32 dim 1 : vector<64x160xf32>, i32 -> vector<64x160xf32>
    %77 = arith.maximumf %75, %76 : vector<64x160xf32>
    %c62_i32_47 = arith.constant 62 : i32
    %78 = tpu.dynamic_rotate %77 by %c62_i32_47 dim 0 : vector<64x160xf32>, i32 -> vector<64x160xf32>
    %79 = arith.maximumf %77, %78 : vector<64x160xf32>
    %cst_48 = arith.constant 0.000000e+00 : f32
    %80 = vector.broadcast %cst_48 : f32 to vector<64x120xf32>
    %81 = arith.truncf %79 : vector<64x160xf32> to vector<64x160xbf16>
    %c0_49 = arith.constant 0 : index
    %c0_50 = arith.constant 0 : index
    %c0_51 = arith.constant 0 : index
    %82 = vector.load %arg6[%c0_49, %c0_50, %c0_51] : memref<5x160x120xbf16, #tpu.memory_space<vmem>>, vector<1x160x120xbf16>
    %83 = vector.shape_cast %82 : vector<1x160x120xbf16> to vector<160x120xbf16>
    %cst_52 = arith.constant dense<0.000000e+00> : vector<64x120xf32>
    %84 = tpu.matmul %81, %83, %cst_52 {dimension_numbers = #tpu.dot_dimension_numbers<[1], [0], [0], [1], [0, 0, 1, 1], [], []>} : vector<64x160xbf16>, vector<160x120xbf16>, vector<64x120xf32> -> vector<64x120xf32>
    %85 = arith.addf %80, %84 : vector<64x120xf32>
    %c60_i32_53 = arith.constant 60 : i32
    %86 = tpu.dynamic_rotate %79 by %c60_i32_53 dim 0 : vector<64x160xf32>, i32 -> vector<64x160xf32>
    %87 = arith.truncf %86 : vector<64x160xf32> to vector<64x160xbf16>
    %c1_54 = arith.constant 1 : index
    %c0_55 = arith.constant 0 : index
    %c0_56 = arith.constant 0 : index
    %88 = vector.load %arg6[%c1_54, %c0_55, %c0_56] : memref<5x160x120xbf16, #tpu.memory_space<vmem>>, vector<1x160x120xbf16>
    %89 = vector.shape_cast %88 : vector<1x160x120xbf16> to vector<160x120xbf16>
    %cst_57 = arith.constant dense<0.000000e+00> : vector<64x120xf32>
    %90 = tpu.matmul %87, %89, %cst_57 {dimension_numbers = #tpu.dot_dimension_numbers<[1], [0], [0], [1], [0, 0, 1, 1], [], []>} : vector<64x160xbf16>, vector<160x120xbf16>, vector<64x120xf32> -> vector<64x120xf32>
    %91 = arith.addf %85, %90 : vector<64x120xf32>
    %c56_i32_58 = arith.constant 56 : i32
    %92 = tpu.dynamic_rotate %79 by %c56_i32_58 dim 0 : vector<64x160xf32>, i32 -> vector<64x160xf32>
    %93 = arith.truncf %92 : vector<64x160xf32> to vector<64x160xbf16>
    %c2_59 = arith.constant 2 : index
    %c0_60 = arith.constant 0 : index
    %c0_61 = arith.constant 0 : index
    %94 = vector.load %arg6[%c2_59, %c0_60, %c0_61] : memref<5x160x120xbf16, #tpu.memory_space<vmem>>, vector<1x160x120xbf16>
    %95 = vector.shape_cast %94 : vector<1x160x120xbf16> to vector<160x120xbf16>
    %cst_62 = arith.constant dense<0.000000e+00> : vector<64x120xf32>
    %96 = tpu.matmul %93, %95, %cst_62 {dimension_numbers = #tpu.dot_dimension_numbers<[1], [0], [0], [1], [0, 0, 1, 1], [], []>} : vector<64x160xbf16>, vector<160x120xbf16>, vector<64x120xf32> -> vector<64x120xf32>
    %97 = arith.addf %91, %96 : vector<64x120xf32>
    %c52_i32 = arith.constant 52 : i32
    %98 = tpu.dynamic_rotate %79 by %c52_i32 dim 0 : vector<64x160xf32>, i32 -> vector<64x160xf32>
    %99 = arith.truncf %98 : vector<64x160xf32> to vector<64x160xbf16>
    %c3_63 = arith.constant 3 : index
    %c0_64 = arith.constant 0 : index
    %c0_65 = arith.constant 0 : index
    %100 = vector.load %arg6[%c3_63, %c0_64, %c0_65] : memref<5x160x120xbf16, #tpu.memory_space<vmem>>, vector<1x160x120xbf16>
    %101 = vector.shape_cast %100 : vector<1x160x120xbf16> to vector<160x120xbf16>
    %cst_66 = arith.constant dense<0.000000e+00> : vector<64x120xf32>
    %102 = tpu.matmul %99, %101, %cst_66 {dimension_numbers = #tpu.dot_dimension_numbers<[1], [0], [0], [1], [0, 0, 1, 1], [], []>} : vector<64x160xbf16>, vector<160x120xbf16>, vector<64x120xf32> -> vector<64x120xf32>
    %103 = arith.addf %97, %102 : vector<64x120xf32>
    %c48_i32 = arith.constant 48 : i32
    %104 = tpu.dynamic_rotate %79 by %c48_i32 dim 0 : vector<64x160xf32>, i32 -> vector<64x160xf32>
    %105 = arith.truncf %104 : vector<64x160xf32> to vector<64x160xbf16>
    %c4_67 = arith.constant 4 : index
    %c0_68 = arith.constant 0 : index
    %c0_69 = arith.constant 0 : index
    %106 = vector.load %arg6[%c4_67, %c0_68, %c0_69] : memref<5x160x120xbf16, #tpu.memory_space<vmem>>, vector<1x160x120xbf16>
    %107 = vector.shape_cast %106 : vector<1x160x120xbf16> to vector<160x120xbf16>
    %cst_70 = arith.constant dense<0.000000e+00> : vector<64x120xf32>
    %108 = tpu.matmul %105, %107, %cst_70 {dimension_numbers = #tpu.dot_dimension_numbers<[1], [0], [0], [1], [0, 0, 1, 1], [], []>} : vector<64x160xbf16>, vector<160x120xbf16>, vector<64x120xf32> -> vector<64x120xf32>
    %109 = arith.addf %103, %108 : vector<64x120xf32>
    %c0_71 = arith.constant 0 : index
    %c0_72 = arith.constant 0 : index
    %110 = vector.load %arg7[%c0_71, %c0_72] : memref<1x120xf32, #tpu.memory_space<vmem>>, vector<1x120xf32>
    %111 = vector.broadcast %110 : vector<1x120xf32> to vector<64x120xf32>
    %112 = arith.addf %109, %111 : vector<64x120xf32>
    %cst_73 = arith.constant 0.000000e+00 : f32
    %113 = vector.broadcast %cst_73 : f32 to vector<64x120xf32>
    %114 = arith.maximumf %112, %113 : vector<64x120xf32>
    %c0_74 = arith.constant 0 : index
    %c0_75 = arith.constant 0 : index
    %115 = vector.load %arg13[%c0_74, %c0_75] : memref<64x120xf32, #tpu.memory_space<vmem>>, vector<64x120xf32>
    tpu.vector_store %arg13[%c0_74, %c0_75], %114 {strides = array<i32>} : memref<64x120xf32, #tpu.memory_space<vmem>>, vector<64x120xf32>,
    %c0_76 = arith.constant 0 : index
    %c0_77 = arith.constant 0 : index
    %116 = vector.load %arg13[%c0_76, %c0_77] : memref<64x120xf32, #tpu.memory_space<vmem>>, vector<1x120xf32>
    %c0_78 = arith.constant 0 : index
    %c0_79 = arith.constant 0 : index
    %117 = vector.load %arg14[%c0_78, %c0_79] : memref<2x120xf32, #tpu.memory_space<vmem>>, vector<1x120xf32>
    tpu.vector_store %arg14[%c0_78, %c0_79], %116 {strides = array<i32>} : memref<2x120xf32, #tpu.memory_space<vmem>>, vector<1x120xf32>,
    %c32 = arith.constant 32 : index
    %c0_80 = arith.constant 0 : index
    %118 = vector.load %arg13[%c32, %c0_80] : memref<64x120xf32, #tpu.memory_space<vmem>>, vector<1x120xf32>
    %c1_81 = arith.constant 1 : index
    %c0_82 = arith.constant 0 : index
    %119 = vector.load %arg14[%c1_81, %c0_82] : memref<2x120xf32, #tpu.memory_space<vmem>>, vector<1x120xf32>
    tpu.vector_store %arg14[%c1_81, %c0_82], %118 {strides = array<i32>} : memref<2x120xf32, #tpu.memory_space<vmem>>, vector<1x120xf32>,
    %c0_83 = arith.constant 0 : index
    %c0_84 = arith.constant 0 : index
    %120 = vector.load %arg14[%c0_83, %c0_84] : memref<2x120xf32, #tpu.memory_space<vmem>>, vector<2x120xf32>
    %121 = arith.truncf %120 : vector<2x120xf32> to vector<2x120xbf16>
    %c0_85 = arith.constant 0 : index
    %c0_86 = arith.constant 0 : index
    %122 = vector.load %arg8[%c0_85, %c0_86] : memref<120x84xbf16, #tpu.memory_space<vmem>>, vector<120x84xbf16>
    %cst_87 = arith.constant dense<0.000000e+00> : vector<2x84xf32>
    %123 = tpu.matmul %121, %122, %cst_87 {dimension_numbers = #tpu.dot_dimension_numbers<[1], [0], [0], [1], [0, 0, 1, 1], [], []>} : vector<2x120xbf16>, vector<120x84xbf16>, vector<2x84xf32> -> vector<2x84xf32>
    %c0_88 = arith.constant 0 : index
    %c0_89 = arith.constant 0 : index
    %124 = vector.load %arg9[%c0_88, %c0_89] : memref<1x84xf32, #tpu.memory_space<vmem>>, vector<1x84xf32>
    %125 = vector.broadcast %124 : vector<1x84xf32> to vector<2x84xf32>
    %126 = arith.addf %123, %125 : vector<2x84xf32>
    %cst_90 = arith.constant 0.000000e+00 : f32
    %127 = vector.broadcast %cst_90 : f32 to vector<2x84xf32>
    %128 = arith.maximumf %126, %127 : vector<2x84xf32>
    %129 = arith.truncf %128 : vector<2x84xf32> to vector<2x84xbf16>
    %c0_91 = arith.constant 0 : index
    %c0_92 = arith.constant 0 : index
    %130 = vector.load %arg10[%c0_91, %c0_92] : memref<84x128xbf16, #tpu.memory_space<vmem>>, vector<84x128xbf16>
    %cst_93 = arith.constant dense<0.000000e+00> : vector<2x128xf32>
    %131 = tpu.matmul %129, %130, %cst_93 {dimension_numbers = #tpu.dot_dimension_numbers<[1], [0], [0], [1], [0, 0, 1, 1], [], []>} : vector<2x84xbf16>, vector<84x128xbf16>, vector<2x128xf32> -> vector<2x128xf32>
    %c0_94 = arith.constant 0 : index
    %c0_95 = arith.constant 0 : index
    %132 = vector.load %arg11[%c0_94, %c0_95] : memref<1x128xf32, #tpu.memory_space<vmem>>, vector<1x128xf32>
    %133 = vector.broadcast %132 : vector<1x128xf32> to vector<2x128xf32>
    %134 = arith.addf %131, %133 : vector<2x128xf32>
    %c0_96 = arith.constant 0 : index
    %c0_97 = arith.constant 0 : index
    %135 = vector.load %arg12[%c0_96, %c0_97] : memref<2x128xf32, #tpu.memory_space<vmem>>, vector<2x128xf32>
    tpu.vector_store %arg12[%c0_96, %c0_97], %134 {strides = array<i32>} : memref<2x128xf32, #tpu.memory_space<vmem>>, vector<2x128xf32>,
    return
  }
  func.func @transform_0(%arg0: i32) -> (i32, i32) {
    %c0_i32 = arith.constant 0 : i32
    %c0_i32_0 = arith.constant 0 : i32
    return %arg0, %c0_i32 : i32, i32
  }
  func.func @transform_1(%arg0: i32) -> (i32, i32, i32) {
    %c0_i32 = arith.constant 0 : i32
    %c0_i32_0 = arith.constant 0 : i32
    %c0_i32_1 = arith.constant 0 : i32
    %c0_i32_2 = arith.constant 0 : i32
    return %c0_i32, %c0_i32_0, %c0_i32_1 : i32, i32, i32
  }
  func.func @transform_2(%arg0: i32) -> (i32, i32) {
    %c0_i32 = arith.constant 0 : i32
    %c0_i32_0 = arith.constant 0 : i32
    %c0_i32_1 = arith.constant 0 : i32
    return %c0_i32, %c0_i32_0 : i32, i32
  }
  func.func @transform_3(%arg0: i32) -> (i32, i32, i32) {
    %c0_i32 = arith.constant 0 : i32
    %c0_i32_0 = arith.constant 0 : i32
    %c0_i32_1 = arith.constant 0 : i32
    %c0_i32_2 = arith.constant 0 : i32
    return %c0_i32, %c0_i32_0, %c0_i32_1 : i32, i32, i32
  }
  func.func @transform_4(%arg0: i32) -> (i32, i32) {
    %c0_i32 = arith.constant 0 : i32
    %c0_i32_0 = arith.constant 0 : i32
    %c0_i32_1 = arith.constant 0 : i32
    return %c0_i32, %c0_i32_0 : i32, i32
  }
  func.func @transform_5(%arg0: i32) -> (i32, i32, i32) {
    %c0_i32 = arith.constant 0 : i32
    %c0_i32_0 = arith.constant 0 : i32
    %c0_i32_1 = arith.constant 0 : i32
    %c0_i32_2 = arith.constant 0 : i32
    return %c0_i32, %c0_i32_0, %c0_i32_1 : i32, i32, i32
  }
  func.func @transform_6(%arg0: i32) -> (i32, i32) {
    %c0_i32 = arith.constant 0 : i32
    %c0_i32_0 = arith.constant 0 : i32
    %c0_i32_1 = arith.constant 0 : i32
    return %c0_i32, %c0_i32_0 : i32, i32
  }
  func.func @transform_7(%arg0: i32) -> (i32, i32) {
    %c0_i32 = arith.constant 0 : i32
    %c0_i32_0 = arith.constant 0 : i32
    %c0_i32_1 = arith.constant 0 : i32
    return %c0_i32, %c0_i32_0 : i32, i32
  }
  func.func @transform_8(%arg0: i32) -> (i32, i32) {
    %c0_i32 = arith.constant 0 : i32
    %c0_i32_0 = arith.constant 0 : i32
    %c0_i32_1 = arith.constant 0 : i32
    return %c0_i32, %c0_i32_0 : i32, i32
  }
  func.func @transform_9(%arg0: i32) -> (i32, i32) {
    %c0_i32 = arith.constant 0 : i32
    %c0_i32_0 = arith.constant 0 : i32
    %c0_i32_1 = arith.constant 0 : i32
    return %c0_i32, %c0_i32_0 : i32, i32
  }
  func.func @transform_10(%arg0: i32) -> (i32, i32) {
    %c0_i32 = arith.constant 0 : i32
    %c0_i32_0 = arith.constant 0 : i32
    %c0_i32_1 = arith.constant 0 : i32
    return %c0_i32, %c0_i32_0 : i32, i32
  }
  func.func @transform_11(%arg0: i32) -> (i32, i32) {
    %c0_i32 = arith.constant 0 : i32
    %c0_i32_0 = arith.constant 0 : i32
    return %arg0, %c0_i32 : i32, i32
  }
}

</mosaic_0001>

<llo_original>
// kernel: net_forward.1
$region0: #{net_forward.1}
  #allocation0 [shape = 'u32[]', space=smem, size = 0x4, offset = 0x4, fixed_abs, tag = 'smem constant byte address 0x4 - core index']
  #allocation1 [shape = 'u32[144,128]{1,0:T(1,128)}', space=vmem, size = 0x12000, scoped, tag = 'internal scratch']
  #allocation2 [shape = 'f32[64,120]{1,0:T(8,128)}', space=vmem, size = 0x8000, scoped, tag = 'scratch operand']
  #allocation3 [shape = 'f32[2,120]{1,0:T(2,128)}', space=vmem, size = 0x400, scoped, tag = 'scratch operand']
  %s0 = inlined_call_operand.vmem [shape: bf16[64,96], index: 0, kind: input, shape index: {}]
  %s1 = inlined_call_operand.vmem [shape: bf16[5,96,168], index: 1, kind: input, shape index: {}]
  %s2 = inlined_call_operand.vmem [shape: f32[1,168], index: 2, kind: input, shape index: {}]
  %s3 = inlined_call_operand.vmem [shape: bf16[5,168,160], index: 3, kind: input, shape index: {}]
  %s4 = inlined_call_operand.vmem [shape: f32[1,160], index: 4, kind: input, shape index: {}]
  %s5 = inlined_call_operand.vmem [shape: bf16[5,160,120], index: 5, kind: input, shape index: {}]
  %s6 = inlined_call_operand.vmem [shape: f32[1,120], index: 6, kind: input, shape index: {}]
  %s7 = inlined_call_operand.vmem [shape: bf16[120,84], index: 7, kind: input, shape index: {}]
  %s8 = inlined_call_operand.vmem [shape: f32[1,84], index: 8, kind: input, shape index: {}]
  %s9 = inlined_call_operand.vmem [shape: bf16[84,128], index: 9, kind: input, shape index: {}]
  %s10 = inlined_call_operand.vmem [shape: f32[1,128], index: 10, kind: input, shape index: {}]
  %s11 = inlined_call_operand.hbm [shape: f32[2,128], index: 11, kind: output, shape index: {}]
  %s12 = sld [smem:[#allocation0]]
  $region54: #{net_forward.1} parent=0
    _
  %s14 = ssub.s32 1, %s12
  %s15 = scalar_select 0, %s14, %s12
  $region1: #{net_forward.1} parent=0
    #allocation4 [shape = 'u8[1024]{0}', space=vmem, size = 0x400, scoped, tag = 'output window, operand 0, single buffered']
    #allocation5 [shape = 's32[1]{0}', space=sflag, size = 0x4, scoped, tag = 'scoped memory for net_forward.1']
    %16 = vsyncpa [#allocation5], 0
    // Predicated region
    $region2: #{net_forward.1} parent=1 // pred_check
      _
    $region3: #{net_forward.1} parent=1 // pred_check_branch
      %18 = sbr.rel (0) target = $region5
    $region4: #{net_forward.1} parent=1 // pred_region
      _
    $region5: #{net_forward.1} parent=1 // pred_fallthru
      _
    // Predicated region
    $region6: #{net_forward.1} parent=1 // pred_check
      _
    $region7: #{net_forward.1} parent=1 // pred_check_branch
      %20 = sbr.rel (0) target = $region9
    $region8: #{net_forward.1} parent=1 // pred_region
      _
    $region9: #{net_forward.1} parent=1 // pred_fallthru
      _
    // Predicated region
    $region10: #{net_forward.1} parent=1 // pred_check
      _
    $region11: #{net_forward.1} parent=1 // pred_check_branch
      %22 = sbr.rel (0) target = $region13
    $region12: #{net_forward.1} parent=1 // pred_region
      _
    $region13: #{net_forward.1} parent=1 // pred_fallthru
      _
    // Predicated region
    $region14: #{net_forward.1} parent=1 // pred_check
      _
    $region15: #{net_forward.1} parent=1 // pred_check_branch
      %24 = sbr.rel (0) target = $region17
    $region16: #{net_forward.1} parent=1 // pred_region
      _
    $region17: #{net_forward.1} parent=1 // pred_fallthru
      _
    // Predicated region
    $region18: #{net_forward.1} parent=1 // pred_check
      _
    $region19: #{net_forward.1} parent=1 // pred_check_branch
      %26 = sbr.rel (0) target = $region21
    $region20: #{net_forward.1} parent=1 // pred_region
      _
    $region21: #{net_forward.1} parent=1 // pred_fallthru
      _
    // Predicated region
    $region22: #{net_forward.1} parent=1 // pred_check
      _
    $region23: #{net_forward.1} parent=1 // pred_check_branch
      %28 = sbr.rel (0) target = $region25
    $region24: #{net_forward.1} parent=1 // pred_region
      _
    $region25: #{net_forward.1} parent=1 // pred_fallthru
      _
    // Predicated region
    $region26: #{net_forward.1} parent=1 // pred_check
      _
    $region27: #{net_forward.1} parent=1 // pred_check_branch
      %30 = sbr.rel (0) target = $region29
    $region28: #{net_forward.1} parent=1 // pred_region
      _
    $region29: #{net_forward.1} parent=1 // pred_fallthru
      _
    // Predicated region
    $region30: #{net_forward.1} parent=1 // pred_check
      _
    $region31: #{net_forward.1} parent=1 // pred_check_branch
      %32 = sbr.rel (0) target = $region33
    $region32: #{net_forward.1} parent=1 // pred_region
      _
    $region33: #{net_forward.1} parent=1 // pred_fallthru
      _
    // Predicated region
    $region34: #{net_forward.1} parent=1 // pred_check
      _
    $region35: #{net_forward.1} parent=1 // pred_check_branch
      %34 = sbr.rel (0) target = $region37
    $region36: #{net_forward.1} parent=1 // pred_region
      _
    $region37: #{net_forward.1} parent=1 // pred_fallthru
      _
    // Predicated region
    $region38: #{net_forward.1} parent=1 // pred_check
      _
    $region39: #{net_forward.1} parent=1 // pred_check_branch
      %36 = sbr.rel (0) target = $region41
    $region40: #{net_forward.1} parent=1 // pred_region
      _
    $region41: #{net_forward.1} parent=1 // pred_fallthru
      _
    // Predicated region
    $region42: #{net_forward.1} parent=1 // pred_check
      _
    $region43: #{net_forward.1} parent=1 // pred_check_branch
      %38 = sbr.rel (0) target = $region45
    $region44: #{net_forward.1} parent=1 // pred_region
      _
    $region45: #{net_forward.1} parent=1 // pred_fallthru
      _
    %v40 = vld [vmem:[%s0] sm:$0xf]
    %v41 = vld [vmem:[%s0 + $0x4] sm:$0xf]
    %v42 = vld [vmem:[%s0 + $0x8] sm:$0xf]
    %v43 = vld [vmem:[%s0 + $0xc] sm:$0xf]
    %v44 = vld [vmem:[%s0 + $0x10] sm:$0xf]
    %v45 = vld [vmem:[%s0 + $0x14] sm:$0xf]
    %v46 = vld [vmem:[%s0 + $0x18] sm:$0xf]
    %v47 = vld [vmem:[%s0 + $0x1c] sm:$0xf]
    %v48 = vunpack.c.l.bf16 %v40
    %v49 = vunpack.c.l.bf16 %v41
    %v50 = vunpack.c.l.bf16 %v42
    %v51 = vunpack.c.l.bf16 %v43
    %v52 = vunpack.c.l.bf16 %v44
    %v53 = vunpack.c.l.bf16 %v45
    %v54 = vunpack.c.l.bf16 %v46
    %v55 = vunpack.c.l.bf16 %v47
    %v56 = vld [vmem:[%s1] sm:$0xff]
    %v57 = vld [vmem:[%s1 + $0x8] sm:$0xff]
    %v58 = vld [vmem:[%s1 + $0x10] sm:$0xff]
    %v59 = vld [vmem:[%s1 + $0x18] sm:$0xff]
    %v60 = vld [vmem:[%s1 + $0x20] sm:$0xff]
    %v61 = vld [vmem:[%s1 + $0x28] sm:$0xff]
    %v62 = vld [vmem:[%s1 + $0x30] sm:$0xff]
    %v63 = vld [vmem:[%s1 + $0x38] sm:$0xff]
    %v64 = vld [vmem:[%s1 + $0x40] sm:$0xff]
    %v65 = vld [vmem:[%s1 + $0x48] sm:$0xff]
    %v66 = vld [vmem:[%s1 + $0x50] sm:$0xff]
    %v67 = vld [vmem:[%s1 + $0x58] sm:$0xff]
    %v68 = vrot.slane %v48, 1
    %v69 = vrot.slane %v49, 1
    %v70 = vrot.slane %v50, 1
    %v71 = vrot.slane %v51, 1
    %v72 = vrot.slane %v52, 1
    %v73 = vrot.slane %v53, 1
    %v74 = vrot.slane %v54, 1
    %v75 = vrot.slane %v55, 1
    %v76 = vlaneseq
    %v77 = vshrl.u32 %v76, 7
    %vm78 = vcmp.lt.s32.totalorder %v77, 7
    %v79 = vsel %vm78, %v74, %v75
    %v80 = vsel %vm78, %v73, %v74
    %v81 = vsel %vm78, %v72, %v73
    %v82 = vsel %vm78, %v71, %v72
    %v83 = vsel %vm78, %v70, %v71
    %v84 = vsel %vm78, %v69, %v70
    %v85 = vsel %vm78, %v68, %v69
    %v86 = vsel %vm78, %v75, %v68
    %v87 = vpack.c.bf16 %v84, %v85
    %v88 = vpack.c.bf16 %v82, %v83
    %v89 = vpack.c.bf16 %v80, %v81
    %v90 = vpack.c.bf16 %v86, %v79
    %s91 = scalar_lea.vmem %s1, 96
    %v92 = vld [vmem:[%s91] sm:$0xff]
    %v93 = vld [vmem:[%s91 + $0x8] sm:$0xff]
    %v94 = vld [vmem:[%s91 + $0x10] sm:$0xff]
    %v95 = vld [vmem:[%s91 + $0x18] sm:$0xff]
    %v96 = vld [vmem:[%s91 + $0x20] sm:$0xff]
    %v97 = vld [vmem:[%s91 + $0x28] sm:$0xff]
    %v98 = vld [vmem:[%s91 + $0x30] sm:$0xff]
    %v99 = vld [vmem:[%s91 + $0x38] sm:$0xff]
    %v100 = vld [vmem:[%s91 + $0x40] sm:$0xff]
    %v101 = vld [vmem:[%s91 + $0x48] sm:$0xff]
    %v102 = vld [vmem:[%s91 + $0x50] sm:$0xff]
    %v103 = vld [vmem:[%s91 + $0x58] sm:$0xff]
    %v116 = vunpack.c.l.b16 %v92
    %v117 = vunpack.c.h.b16 %v92
    %v118 = vunpack.c.l.b16 %v93
    %v119 = vunpack.c.h.b16 %v93
    %v120 = vunpack.c.l.b16 %v94
    %v121 = vunpack.c.h.b16 %v94
    %v122 = vunpack.c.l.b16 %v95
    %v123 = vunpack.c.h.b16 %v95
    %v124 = vunpack.c.l.b16 %v96
    %v125 = vunpack.c.h.b16 %v96
    %v126 = vunpack.c.l.b16 %v97
    %v127 = vunpack.c.h.b16 %v97
    %v128 = vunpack.c.l.b16 %v98
    %v129 = vunpack.c.h.b16 %v98
    %v130 = vunpack.c.l.b16 %v99
    %v131 = vunpack.c.h.b16 %v99
    %v132 = vunpack.c.l.b16 %v100
    %v133 = vunpack.c.h.b16 %v100
    %v134 = vunpack.c.l.b16 %v101
    %v135 = vunpack.c.h.b16 %v101
    %v136 = vunpack.c.l.b16 %v102
    %v137 = vunpack.c.h.b16 %v102
    %v138 = vunpack.c.l.b16 %v103
    %v139 = vunpack.c.h.b16 %v103
    %v140 = vpack.c.b16 %v118, %v116
    %v141 = vpack.c.b16 %v119, %v117
    %v142 = vpack.c.b16 %v122, %v120
    %v143 = vpack.c.b16 %v123, %v121
    %v144 = vpack.c.b16 %v126, %v124
    %v145 = vpack.c.b16 %v127, %v125
    %v146 = vpack.c.b16 %v130, %v128
    %v147 = vpack.c.b16 %v131, %v129
    %v148 = vpack.c.b16 %v134, %v132
    %v149 = vpack.c.b16 %v135, %v133
    %v150 = vpack.c.b16 %v138, %v136
    %v151 = vpack.c.b16 %v139, %v137
    %vm164 = vcmask 785408
    %v166 = vsel %vm164, %v87, 0
    %v169 = vsel %vm164, %v88, 0
    %v172 = vsel %vm164, %v89, 0
    %v175 = vsel %vm164, %v90, 0
    %177 = vmatprep.subr.bf16.mxu0 0
    %178 = vmatpush1.bf16.msra.mxu0 0
    %179 = vmatprep.subr.bf16.mxu0 0
    %180 = vmatpush1.bf16.msra.mxu0 0
    %181 = vmatprep.subr.bf16.mxu0 %v151
    %182 = vmatpush1.bf16.msra.mxu0 %v150
    %183 = vmatprep.subr.bf16.mxu0 %v149
    %184 = vmatpush1.bf16.msra.mxu0 %v148
    %185 = vmatprep.subr.bf16.mxu0 %v147
    %186 = vmatpush1.bf16.msra.mxu0 %v146
    %187 = vmatprep.subr.bf16.mxu0 %v145
    %188 = vmatpush1.bf16.msra.mxu0 %v144
    %189 = vmatprep.subr.bf16.mxu0 %v143
    %190 = vmatpush1.bf16.msra.mxu0 %v142
    %191 = vmatprep.subr.bf16.mxu0 %v141
    %192 = vmatpush1.bf16.msra.mxu0 %v140
    %193 = vmatprep.subr.bf16.mxu0 0
    %194 = vmatpush2.bf16.msra.mxu0 0
    %195 = vmatprep.subr.bf16.mxu0 0
    %196 = vmatpush2.bf16.msra.mxu0 0
    %197 = vmatprep.subr.bf16.mxu0 0
    %198 = vmatpush2.bf16.msra.mxu0 0
    %199 = vmatprep.subr.bf16.mxu0 0
    %200 = vmatpush2.bf16.msra.mxu0 0
    %201 = vmatprep.subr.bf16.mxu0 0
    %202 = vmatpush2.bf16.msra.mxu0 0
    %203 = vmatprep.subr.bf16.mxu0 0
    %204 = vmatpush2.bf16.msra.mxu0 0
    %205 = vmatprep.subr.bf16.mxu0 0
    %206 = vmatpush2.bf16.msra.mxu0 0
    %207 = vmatprep.subr.bf16.mxu0 0
    %208 = vmatpush2.bf16.msra.mxu0 0
    %209 = vmatprep.mubr.bf16.mxu0 0
    %210 = vmatmul.mubr.bf16.gmra.mxu0 %v166
    %v211 = vpop.f32.mrf.mxu0
    %v212 = vadd.f32 0.0, %v211
    %v213 = vpop.f32.mrf.mxu0
    %v214 = vadd.f32 0.0, %v213
    %v215 = vpop.f32.mrf.mxu0
    %v216 = vadd.f32 0.0, %v215
    %v217 = vpop.f32.mrf.mxu0
    %v218 = vadd.f32 0.0, %v217
    %219 = vmatprep.mubr.bf16.mxu0 0
    %220 = vmatmul.mubr.bf16.gmra.mxu0 %v169
    %v221 = vpop.f32.mrf.mxu0
    %v222 = vadd.f32 0.0, %v221
    %v223 = vpop.f32.mrf.mxu0
    %v224 = vadd.f32 0.0, %v223
    %v225 = vpop.f32.mrf.mxu0
    %v226 = vadd.f32 0.0, %v225
    %v227 = vpop.f32.mrf.mxu0
    %v228 = vadd.f32 0.0, %v227
    %229 = vmatprep.mubr.bf16.mxu0 0
    %230 = vmatmul.mubr.bf16.gmra.mxu0 %v172
    %v231 = vpop.f32.mrf.mxu0
    %v232 = vadd.f32 0.0, %v231
    %v233 = vpop.f32.mrf.mxu0
    %v234 = vadd.f32 0.0, %v233
    %v235 = vpop.f32.mrf.mxu0
    %v236 = vadd.f32 0.0, %v235
    %v237 = vpop.f32.mrf.mxu0
    %v238 = vadd.f32 0.0, %v237
    %239 = vmatprep.mubr.bf16.mxu0 0
    %240 = vmatmul.mubr.bf16.gmra.mxu0 %v175
    %v241 = vpop.f32.mrf.mxu0
    %v242 = vadd.f32 0.0, %v241
    %v243 = vpop.f32.mrf.mxu0
    %v244 = vadd.f32 0.0, %v243
    %v245 = vpop.f32.mrf.mxu0
    %v246 = vadd.f32 0.0, %v245
    %v247 = vpop.f32.mrf.mxu0
    %v248 = vadd.f32 0.0, %v247
    %249 = vdwg.mxu0
    %v258 = vunpack.c.l.b16 %v40
    %v259 = vunpack.c.l.b16 %v41
    %v260 = vunpack.c.l.b16 %v42
    %v261 = vunpack.c.l.b16 %v43
    %v262 = vunpack.c.l.b16 %v44
    %v263 = vunpack.c.l.b16 %v45
    %v264 = vunpack.c.l.b16 %v46
    %v265 = vunpack.c.l.b16 %v47
    %v266 = vpack.c.b16 %v259, %v258
    %v267 = vpack.c.b16 %v261, %v260
    %v268 = vpack.c.b16 %v263, %v262
    %v269 = vpack.c.b16 %v265, %v264
    %v282 = vunpack.c.l.b16 %v56
    %v283 = vunpack.c.h.b16 %v56
    %v284 = vunpack.c.l.b16 %v57
    %v285 = vunpack.c.h.b16 %v57
    %v286 = vunpack.c.l.b16 %v58
    %v287 = vunpack.c.h.b16 %v58
    %v288 = vunpack.c.l.b16 %v59
    %v289 = vunpack.c.h.b16 %v59
    %v290 = vunpack.c.l.b16 %v60
    %v291 = vunpack.c.h.b16 %v60
    %v292 = vunpack.c.l.b16 %v61
    %v293 = vunpack.c.h.b16 %v61
    %v294 = vunpack.c.l.b16 %v62
    %v295 = vunpack.c.h.b16 %v62
    %v296 = vunpack.c.l.b16 %v63
    %v297 = vunpack.c.h.b16 %v63
    %v298 = vunpack.c.l.b16 %v64
    %v299 = vunpack.c.h.b16 %v64
    %v300 = vunpack.c.l.b16 %v65
    %v301 = vunpack.c.h.b16 %v65
    %v302 = vunpack.c.l.b16 %v66
    %v303 = vunpack.c.h.b16 %v66
    %v304 = vunpack.c.l.b16 %v67
    %v305 = vunpack.c.h.b16 %v67
    %v306 = vpack.c.b16 %v284, %v282
    %v307 = vpack.c.b16 %v285, %v283
    %v308 = vpack.c.b16 %v288, %v286
    %v309 = vpack.c.b16 %v289, %v287
    %v310 = vpack.c.b16 %v292, %v290
    %v311 = vpack.c.b16 %v293, %v291
    %v312 = vpack.c.b16 %v296, %v294
    %v313 = vpack.c.b16 %v297, %v295
    %v314 = vpack.c.b16 %v300, %v298
    %v315 = vpack.c.b16 %v301, %v299
    %v316 = vpack.c.b16 %v304, %v302
    %v317 = vpack.c.b16 %v305, %v303
    %v331 = vsel %vm164, %v266, 0
    %v334 = vsel %vm164, %v267, 0
    %v337 = vsel %vm164, %v268, 0
    %v340 = vsel %vm164, %v269, 0
    %342 = vmatprep.subr.bf16.mxu0 0
    %343 = vmatpush1.bf16.msra.mxu0 0
    %344 = vmatprep.subr.bf16.mxu0 0
    %345 = vmatpush1.bf16.msra.mxu0 0
    %346 = vmatprep.subr.bf16.mxu0 %v317
    %347 = vmatpush1.bf16.msra.mxu0 %v316
    %348 = vmatprep.subr.bf16.mxu0 %v315
    %349 = vmatpush1.bf16.msra.mxu0 %v314
    %350 = vmatprep.subr.bf16.mxu0 %v313
    %351 = vmatpush1.bf16.msra.mxu0 %v312
    %352 = vmatprep.subr.bf16.mxu0 %v311
    %353 = vmatpush1.bf16.msra.mxu0 %v310
    %354 = vmatprep.subr.bf16.mxu0 %v309
    %355 = vmatpush1.bf16.msra.mxu0 %v308
    %356 = vmatprep.subr.bf16.mxu0 %v307
    %357 = vmatpush1.bf16.msra.mxu0 %v306
    %358 = vmatprep.subr.bf16.mxu0 0
    %359 = vmatpush2.bf16.msra.mxu0 0
    %360 = vmatprep.subr.bf16.mxu0 0
    %361 = vmatpush2.bf16.msra.mxu0 0
    %362 = vmatprep.subr.bf16.mxu0 0
    %363 = vmatpush2.bf16.msra.mxu0 0
    %364 = vmatprep.subr.bf16.mxu0 0
    %365 = vmatpush2.bf16.msra.mxu0 0
    %366 = vmatprep.subr.bf16.mxu0 0
    %367 = vmatpush2.bf16.msra.mxu0 0
    %368 = vmatprep.subr.bf16.mxu0 0
    %369 = vmatpush2.bf16.msra.mxu0 0
    %370 = vmatprep.subr.bf16.mxu0 0
    %371 = vmatpush2.bf16.msra.mxu0 0
    %372 = vmatprep.subr.bf16.mxu0 0
    %373 = vmatpush2.bf16.msra.mxu0 0
    %374 = vmatprep.mubr.bf16.mxu0 0
    %375 = vmatmul.mubr.bf16.gmra.mxu0 %v331
    %v376 = vpop.f32.mrf.mxu0
    %v377 = vadd.f32 %v212, %v376
    %v378 = vpop.f32.mrf.mxu0
    %v379 = vadd.f32 %v214, %v378
    %v380 = vpop.f32.mrf.mxu0
    %v381 = vadd.f32 %v216, %v380
    %v382 = vpop.f32.mrf.mxu0
    %v383 = vadd.f32 %v218, %v382
    %384 = vmatprep.mubr.bf16.mxu0 0
    %385 = vmatmul.mubr.bf16.gmra.mxu0 %v334
    %v386 = vpop.f32.mrf.mxu0
    %v387 = vadd.f32 %v222, %v386
    %v388 = vpop.f32.mrf.mxu0
    %v389 = vadd.f32 %v224, %v388
    %v390 = vpop.f32.mrf.mxu0
    %v391 = vadd.f32 %v226, %v390
    %v392 = vpop.f32.mrf.mxu0
    %v393 = vadd.f32 %v228, %v392
    %394 = vmatprep.mubr.bf16.mxu0 0
    %395 = vmatmul.mubr.bf16.gmra.mxu0 %v337
    %v396 = vpop.f32.mrf.mxu0
    %v397 = vadd.f32 %v232, %v396
    %v398 = vpop.f32.mrf.mxu0
    %v399 = vadd.f32 %v234, %v398
    %v400 = vpop.f32.mrf.mxu0
    %v401 = vadd.f32 %v236, %v400
    %v402 = vpop.f32.mrf.mxu0
    %v403 = vadd.f32 %v238, %v402
    %404 = vmatprep.mubr.bf16.mxu0 0
    %405 = vmatmul.mubr.bf16.gmra.mxu0 %v340
    %v406 = vpop.f32.mrf.mxu0
    %v407 = vadd.f32 %v242, %v406
    %v408 = vpop.f32.mrf.mxu0
    %v409 = vadd.f32 %v244, %v408
    %v410 = vpop.f32.mrf.mxu0
    %v411 = vadd.f32 %v246, %v410
    %v412 = vpop.f32.mrf.mxu0
    %v413 = vadd.f32 %v248, %v412
    %414 = vdwg.mxu0
    %v415 = vrot.slane %v48, 2
    %v416 = vrot.slane %v49, 2
    %v417 = vrot.slane %v50, 2
    %v418 = vrot.slane %v51, 2
    %v419 = vrot.slane %v52, 2
    %v420 = vrot.slane %v53, 2
    %v421 = vrot.slane %v54, 2
    %v422 = vrot.slane %v55, 2
    %vm423 = vcmp.lt.s32.totalorder %v77, 6
    %v424 = vsel %vm423, %v421, %v422
    %v425 = vsel %vm423, %v420, %v421
    %v426 = vsel %vm423, %v419, %v420
    %v427 = vsel %vm423, %v418, %v419
    %v428 = vsel %vm423, %v417, %v418
    %v429 = vsel %vm423, %v416, %v417
    %v430 = vsel %vm423, %v415, %v416
    %v431 = vsel %vm423, %v422, %v415
    %v432 = vpack.c.bf16 %v429, %v430
    %v433 = vpack.c.bf16 %v427, %v428
    %v434 = vpack.c.bf16 %v425, %v426
    %v435 = vpack.c.bf16 %v431, %v424
    %s436 = scalar_lea.vmem %s1, 192
    %v437 = vld [vmem:[%s436] sm:$0xff]
    %v438 = vld [vmem:[%s436 + $0x8] sm:$0xff]
    %v439 = vld [vmem:[%s436 + $0x10] sm:$0xff]
    %v440 = vld [vmem:[%s436 + $0x18] sm:$0xff]
    %v441 = vld [vmem:[%s436 + $0x20] sm:$0xff]
    %v442 = vld [vmem:[%s436 + $0x28] sm:$0xff]
    %v443 = vld [vmem:[%s436 + $0x30] sm:$0xff]
    %v444 = vld [vmem:[%s436 + $0x38] sm:$0xff]
    %v445 = vld [vmem:[%s436 + $0x40] sm:$0xff]
    %v446 = vld [vmem:[%s436 + $0x48] sm:$0xff]
    %v447 = vld [vmem:[%s436 + $0x50] sm:$0xff]
    %v448 = vld [vmem:[%s436 + $0x58] sm:$0xff]
    %v461 = vunpack.c.l.b16 %v437
    %v462 = vunpack.c.h.b16 %v437
    %v463 = vunpack.c.l.b16 %v438
    %v464 = vunpack.c.h.b16 %v438
    %v465 = vunpack.c.l.b16 %v439
    %v466 = vunpack.c.h.b16 %v439
    %v467 = vunpack.c.l.b16 %v440
    %v468 = vunpack.c.h.b16 %v440
    %v469 = vunpack.c.l.b16 %v441
    %v470 = vunpack.c.h.b16 %v441
    %v471 = vunpack.c.l.b16 %v442
    %v472 = vunpack.c.h.b16 %v442
    %v473 = vunpack.c.l.b16 %v443
    %v474 = vunpack.c.h.b16 %v443
    %v475 = vunpack.c.l.b16 %v444
    %v476 = vunpack.c.h.b16 %v444
    %v477 = vunpack.c.l.b16 %v445
    %v478 = vunpack.c.h.b16 %v445
    %v479 = vunpack.c.l.b16 %v446
    %v480 = vunpack.c.h.b16 %v446
    %v481 = vunpack.c.l.b16 %v447
    %v482 = vunpack.c.h.b16 %v447
    %v483 = vunpack.c.l.b16 %v448
    %v484 = vunpack.c.h.b16 %v448
    %v485 = vpack.c.b16 %v463, %v461
    %v486 = vpack.c.b16 %v464, %v462
    %v487 = vpack.c.b16 %v467, %v465
    %v488 = vpack.c.b16 %v468, %v466
    %v489 = vpack.c.b16 %v471, %v469
    %v490 = vpack.c.b16 %v472, %v470
    %v491 = vpack.c.b16 %v475, %v473
    %v492 = vpack.c.b16 %v476, %v474
    %v493 = vpack.c.b16 %v479, %v477
    %v494 = vpack.c.b16 %v480, %v478
    %v495 = vpack.c.b16 %v483, %v481
    %v496 = vpack.c.b16 %v484, %v482
    %v510 = vsel %vm164, %v432, 0
    %v513 = vsel %vm164, %v433, 0
    %v516 = vsel %vm164, %v434, 0
    %v519 = vsel %vm164, %v435, 0
    %521 = vmatprep.subr.bf16.mxu0 0
    %522 = vmatpush1.bf16.msra.mxu0 0
    %523 = vmatprep.subr.bf16.mxu0 0
    %524 = vmatpush1.bf16.msra.mxu0 0
    %525 = vmatprep.subr.bf16.mxu0 %v496
    %526 = vmatpush1.bf16.msra.mxu0 %v495
    %527 = vmatprep.subr.bf16.mxu0 %v494
    %528 = vmatpush1.bf16.msra.mxu0 %v493
    %529 = vmatprep.subr.bf16.mxu0 %v492
    %530 = vmatpush1.bf16.msra.mxu0 %v491
    %531 = vmatprep.subr.bf16.mxu0 %v490
    %532 = vmatpush1.bf16.msra.mxu0 %v489
    %533 = vmatprep.subr.bf16.mxu0 %v488
    %534 = vmatpush1.bf16.msra.mxu0 %v487
    %535 = vmatprep.subr.bf16.mxu0 %v486
    %536 = vmatpush1.bf16.msra.mxu0 %v485
    %537 = vmatprep.subr.bf16.mxu0 0
    %538 = vmatpush2.bf16.msra.mxu0 0
    %539 = vmatprep.subr.bf16.mxu0 0
    %540 = vmatpush2.bf16.msra.mxu0 0
    %541 = vmatprep.subr.bf16.mxu0 0
    %542 = vmatpush2.bf16.msra.mxu0 0
    %543 = vmatprep.subr.bf16.mxu0 0
    %544 = vmatpush2.bf16.msra.mxu0 0
    %545 = vmatprep.subr.bf16.mxu0 0
    %546 = vmatpush2.bf16.msra.mxu0 0
    %547 = vmatprep.subr.bf16.mxu0 0
    %548 = vmatpush2.bf16.msra.mxu0 0
    %549 = vmatprep.subr.bf16.mxu0 0
    %550 = vmatpush2.bf16.msra.mxu0 0
    %551 = vmatprep.subr.bf16.mxu0 0
    %552 = vmatpush2.bf16.msra.mxu0 0
    %553 = vmatprep.mubr.bf16.mxu0 0
    %554 = vmatmul.mubr.bf16.gmra.mxu0 %v510
    %v555 = vpop.f32.mrf.mxu0
    %v556 = vadd.f32 0.0, %v555
    %v557 = vpop.f32.mrf.mxu0
    %v558 = vadd.f32 0.0, %v557
    %v559 = vpop.f32.mrf.mxu0
    %v560 = vadd.f32 0.0, %v559
    %v561 = vpop.f32.mrf.mxu0
    %v562 = vadd.f32 0.0, %v561
    %563 = vmatprep.mubr.bf16.mxu0 0
    %564 = vmatmul.mubr.bf16.gmra.mxu0 %v513
    %v565 = vpop.f32.mrf.mxu0
    %v566 = vadd.f32 0.0, %v565
    %v567 = vpop.f32.mrf.mxu0
    %v568 = vadd.f32 0.0, %v567
    %v569 = vpop.f32.mrf.mxu0
    %v570 = vadd.f32 0.0, %v569
    %v571 = vpop.f32.mrf.mxu0
    %v572 = vadd.f32 0.0, %v571
    %573 = vmatprep.mubr.bf16.mxu0 0
    %574 = vmatmul.mubr.bf16.gmra.mxu0 %v516
    %v575 = vpop.f32.mrf.mxu0
    %v576 = vadd.f32 0.0, %v575
    %v577 = vpop.f32.mrf.mxu0
    %v578 = vadd.f32 0.0, %v577
    %v579 = vpop.f32.mrf.mxu0
    %v580 = vadd.f32 0.0, %v579
    %v581 = vpop.f32.mrf.mxu0
    %v582 = vadd.f32 0.0, %v581
    %583 = vmatprep.mubr.bf16.mxu0 0
    %584 = vmatmul.mubr.bf16.gmra.mxu0 %v519
    %v585 = vpop.f32.mrf.mxu0
    %v586 = vadd.f32 0.0, %v585
    %v587 = vpop.f32.mrf.mxu0
    %v588 = vadd.f32 0.0, %v587
    %v589 = vpop.f32.mrf.mxu0
    %v590 = vadd.f32 0.0, %v589
    %v591 = vpop.f32.mrf.mxu0
    %v592 = vadd.f32 0.0, %v591
    %593 = vdwg.mxu0
    %v594 = vadd.f32 %v377, %v556
    %v595 = vadd.f32 %v379, %v558
    %v596 = vadd.f32 %v381, %v560
    %v597 = vadd.f32 %v383, %v562
    %v598 = vadd.f32 %v387, %v566
    %v599 = vadd.f32 %v389, %v568
    %v600 = vadd.f32 %v391, %v570
    %v601 = vadd.f32 %v393, %v572
    %v602 = vadd.f32 %v397, %v576
    %v603 = vadd.f32 %v399, %v578
    %v604 = vadd.f32 %v401, %v580
    %v605 = vadd.f32 %v403, %v582
    %v606 = vadd.f32 %v407, %v586
    %v607 = vadd.f32 %v409, %v588
    %v608 = vadd.f32 %v411, %v590
    %v609 = vadd.f32 %v413, %v592
    %v610 = vrot.slane %v48, 3
    %v611 = vrot.slane %v49, 3
    %v612 = vrot.slane %v50, 3
    %v613 = vrot.slane %v51, 3
    %v614 = vrot.slane %v52, 3
    %v615 = vrot.slane %v53, 3
    %v616 = vrot.slane %v54, 3
    %v617 = vrot.slane %v55, 3
    %vm618 = vcmp.lt.s32.totalorder %v77, 5
    %v619 = vsel %vm618, %v616, %v617
    %v620 = vsel %vm618, %v615, %v616
    %v621 = vsel %vm618, %v614, %v615
    %v622 = vsel %vm618, %v613, %v614
    %v623 = vsel %vm618, %v612, %v613
    %v624 = vsel %vm618, %v611, %v612
    %v625 = vsel %vm618, %v610, %v611
    %v626 = vsel %vm618, %v617, %v610
    %v627 = vpack.c.bf16 %v624, %v625
    %v628 = vpack.c.bf16 %v622, %v623
    %v629 = vpack.c.bf16 %v620, %v621
    %v630 = vpack.c.bf16 %v626, %v619
    %s631 = scalar_lea.vmem %s1, 288
    %v632 = vld [vmem:[%s631] sm:$0xff]
    %v633 = vld [vmem:[%s631 + $0x8] sm:$0xff]
    %v634 = vld [vmem:[%s631 + $0x10] sm:$0xff]
    %v635 = vld [vmem:[%s631 + $0x18] sm:$0xff]
    %v636 = vld [vmem:[%s631 + $0x20] sm:$0xff]
    %v637 = vld [vmem:[%s631 + $0x28] sm:$0xff]
    %v638 = vld [vmem:[%s631 + $0x30] sm:$0xff]
    %v639 = vld [vmem:[%s631 + $0x38] sm:$0xff]
    %v640 = vld [vmem:[%s631 + $0x40] sm:$0xff]
    %v641 = vld [vmem:[%s631 + $0x48] sm:$0xff]
    %v642 = vld [vmem:[%s631 + $0x50] sm:$0xff]
    %v643 = vld [vmem:[%s631 + $0x58] sm:$0xff]
    %v656 = vunpack.c.l.b16 %v632
    %v657 = vunpack.c.h.b16 %v632
    %v658 = vunpack.c.l.b16 %v633
    %v659 = vunpack.c.h.b16 %v633
    %v660 = vunpack.c.l.b16 %v634
    %v661 = vunpack.c.h.b16 %v634
    %v662 = vunpack.c.l.b16 %v635
    %v663 = vunpack.c.h.b16 %v635
    %v664 = vunpack.c.l.b16 %v636
    %v665 = vunpack.c.h.b16 %v636
    %v666 = vunpack.c.l.b16 %v637
    %v667 = vunpack.c.h.b16 %v637
    %v668 = vunpack.c.l.b16 %v638
    %v669 = vunpack.c.h.b16 %v638
    %v670 = vunpack.c.l.b16 %v639
    %v671 = vunpack.c.h.b16 %v639
    %v672 = vunpack.c.l.b16 %v640
    %v673 = vunpack.c.h.b16 %v640
    %v674 = vunpack.c.l.b16 %v641
    %v675 = vunpack.c.h.b16 %v641
    %v676 = vunpack.c.l.b16 %v642
    %v677 = vunpack.c.h.b16 %v642
    %v678 = vunpack.c.l.b16 %v643
    %v679 = vunpack.c.h.b16 %v643
    %v680 = vpack.c.b16 %v658, %v656
    %v681 = vpack.c.b16 %v659, %v657
    %v682 = vpack.c.b16 %v662, %v660
    %v683 = vpack.c.b16 %v663, %v661
    %v684 = vpack.c.b16 %v666, %v664
    %v685 = vpack.c.b16 %v667, %v665
    %v686 = vpack.c.b16 %v670, %v668
    %v687 = vpack.c.b16 %v671, %v669
    %v688 = vpack.c.b16 %v674, %v672
    %v689 = vpack.c.b16 %v675, %v673
    %v690 = vpack.c.b16 %v678, %v676
    %v691 = vpack.c.b16 %v679, %v677
    %v705 = vsel %vm164, %v627, 0
    %v708 = vsel %vm164, %v628, 0
    %v711 = vsel %vm164, %v629, 0
    %v714 = vsel %vm164, %v630, 0
    %716 = vmatprep.subr.bf16.mxu0 0
    %717 = vmatpush1.bf16.msra.mxu0 0
    %718 = vmatprep.subr.bf16.mxu0 0
    %719 = vmatpush1.bf16.msra.mxu0 0
    %720 = vmatprep.subr.bf16.mxu0 %v691
    %721 = vmatpush1.bf16.msra.mxu0 %v690
    %722 = vmatprep.subr.bf16.mxu0 %v689
    %723 = vmatpush1.bf16.msra.mxu0 %v688
    %724 = vmatprep.subr.bf16.mxu0 %v687
    %725 = vmatpush1.bf16.msra.mxu0 %v686
    %726 = vmatprep.subr.bf16.mxu0 %v685
    %727 = vmatpush1.bf16.msra.mxu0 %v684
    %728 = vmatprep.subr.bf16.mxu0 %v683
    %729 = vmatpush1.bf16.msra.mxu0 %v682
    %730 = vmatprep.subr.bf16.mxu0 %v681
    %731 = vmatpush1.bf16.msra.mxu0 %v680
    %732 = vmatprep.subr.bf16.mxu0 0
    %733 = vmatpush2.bf16.msra.mxu0 0
    %734 = vmatprep.subr.bf16.mxu0 0
    %735 = vmatpush2.bf16.msra.mxu0 0
    %736 = vmatprep.subr.bf16.mxu0 0
    %737 = vmatpush2.bf16.msra.mxu0 0
    %738 = vmatprep.subr.bf16.mxu0 0
    %739 = vmatpush2.bf16.msra.mxu0 0
    %740 = vmatprep.subr.bf16.mxu0 0
    %741 = vmatpush2.bf16.msra.mxu0 0
    %742 = vmatprep.subr.bf16.mxu0 0
    %743 = vmatpush2.bf16.msra.mxu0 0
    %744 = vmatprep.subr.bf16.mxu0 0
    %745 = vmatpush2.bf16.msra.mxu0 0
    %746 = vmatprep.subr.bf16.mxu0 0
    %747 = vmatpush2.bf16.msra.mxu0 0
    %748 = vmatprep.mubr.bf16.mxu0 0
    %749 = vmatmul.mubr.bf16.gmra.mxu0 %v705
    %v750 = vpop.f32.mrf.mxu0
    %v751 = vadd.f32 0.0, %v750
    %v752 = vpop.f32.mrf.mxu0
    %v753 = vadd.f32 0.0, %v752
    %v754 = vpop.f32.mrf.mxu0
    %v755 = vadd.f32 0.0, %v754
    %v756 = vpop.f32.mrf.mxu0
    %v757 = vadd.f32 0.0, %v756
    %758 = vmatprep.mubr.bf16.mxu0 0
    %759 = vmatmul.mubr.bf16.gmra.mxu0 %v708
    %v760 = vpop.f32.mrf.mxu0
    %v761 = vadd.f32 0.0, %v760
    %v762 = vpop.f32.mrf.mxu0
    %v763 = vadd.f32 0.0, %v762
    %v764 = vpop.f32.mrf.mxu0
    %v765 = vadd.f32 0.0, %v764
    %v766 = vpop.f32.mrf.mxu0
    %v767 = vadd.f32 0.0, %v766
    %768 = vmatprep.mubr.bf16.mxu0 0
    %769 = vmatmul.mubr.bf16.gmra.mxu0 %v711
    %v770 = vpop.f32.mrf.mxu0
    %v771 = vadd.f32 0.0, %v770
    %v772 = vpop.f32.mrf.mxu0
    %v773 = vadd.f32 0.0, %v772
    %v774 = vpop.f32.mrf.mxu0
    %v775 = vadd.f32 0.0, %v774
    %v776 = vpop.f32.mrf.mxu0
    %v777 = vadd.f32 0.0, %v776
    %778 = vmatprep.mubr.bf16.mxu0 0
    %779 = vmatmul.mubr.bf16.gmra.mxu0 %v714
    %v780 = vpop.f32.mrf.mxu0
    %v781 = vadd.f32 0.0, %v780
    %v782 = vpop.f32.mrf.mxu0
    %v783 = vadd.f32 0.0, %v782
    %v784 = vpop.f32.mrf.mxu0
    %v785 = vadd.f32 0.0, %v784
    %v786 = vpop.f32.mrf.mxu0
    %v787 = vadd.f32 0.0, %v786
    %788 = vdwg.mxu0
    %v789 = vadd.f32 %v594, %v751
    %v790 = vadd.f32 %v595, %v753
    %v791 = vadd.f32 %v596, %v755
    %v792 = vadd.f32 %v597, %v757
    %v793 = vadd.f32 %v598, %v761
    %v794 = vadd.f32 %v599, %v763
    %v795 = vadd.f32 %v600, %v765
    %v796 = vadd.f32 %v601, %v767
    %v797 = vadd.f32 %v602, %v771
    %v798 = vadd.f32 %v603, %v773
    %v799 = vadd.f32 %v604, %v775
    %v800 = vadd.f32 %v605, %v777
    %v801 = vadd.f32 %v606, %v781
    %v802 = vadd.f32 %v607, %v783
    %v803 = vadd.f32 %v608, %v785
    %v804 = vadd.f32 %v609, %v787
    %v805 = vrot.slane %v48, 4
    %v806 = vrot.slane %v49, 4
    %v807 = vrot.slane %v50, 4
    %v808 = vrot.slane %v51, 4
    %v809 = vrot.slane %v52, 4
    %v810 = vrot.slane %v53, 4
    %v811 = vrot.slane %v54, 4
    %v812 = vrot.slane %v55, 4
    %vm813 = vcmp.lt.s32.totalorder %v77, 4
    %v814 = vsel %vm813, %v811, %v812
    %v815 = vsel %vm813, %v810, %v811
    %v816 = vsel %vm813, %v809, %v810
    %v817 = vsel %vm813, %v808, %v809
    %v818 = vsel %vm813, %v807, %v808
    %v819 = vsel %vm813, %v806, %v807
    %v820 = vsel %vm813, %v805, %v806
    %v821 = vsel %vm813, %v812, %v805
    %v822 = vpack.c.bf16 %v819, %v820
    %v823 = vpack.c.bf16 %v817, %v818
    %v824 = vpack.c.bf16 %v815, %v816
    %v825 = vpack.c.bf16 %v821, %v814
    %s826 = scalar_lea.vmem %s1, 384
    %v827 = vld [vmem:[%s826] sm:$0xff]
    %v828 = vld [vmem:[%s826 + $0x8] sm:$0xff]
    %v829 = vld [vmem:[%s826 + $0x10] sm:$0xff]
    %v830 = vld [vmem:[%s826 + $0x18] sm:$0xff]
    %v831 = vld [vmem:[%s826 + $0x20] sm:$0xff]
    %v832 = vld [vmem:[%s826 + $0x28] sm:$0xff]
    %v833 = vld [vmem:[%s826 + $0x30] sm:$0xff]
    %v834 = vld [vmem:[%s826 + $0x38] sm:$0xff]
    %v835 = vld [vmem:[%s826 + $0x40] sm:$0xff]
    %v836 = vld [vmem:[%s826 + $0x48] sm:$0xff]
    %v837 = vld [vmem:[%s826 + $0x50] sm:$0xff]
    %v838 = vld [vmem:[%s826 + $0x58] sm:$0xff]
    %v851 = vunpack.c.l.b16 %v827
    %v852 = vunpack.c.h.b16 %v827
    %v853 = vunpack.c.l.b16 %v828
    %v854 = vunpack.c.h.b16 %v828
    %v855 = vunpack.c.l.b16 %v829
    %v856 = vunpack.c.h.b16 %v829
    %v857 = vunpack.c.l.b16 %v830
    %v858 = vunpack.c.h.b16 %v830
    %v859 = vunpack.c.l.b16 %v831
    %v860 = vunpack.c.h.b16 %v831
    %v861 = vunpack.c.l.b16 %v832
    %v862 = vunpack.c.h.b16 %v832
    %v863 = vunpack.c.l.b16 %v833
    %v864 = vunpack.c.h.b16 %v833
    %v865 = vunpack.c.l.b16 %v834
    %v866 = vunpack.c.h.b16 %v834
    %v867 = vunpack.c.l.b16 %v835
    %v868 = vunpack.c.h.b16 %v835
    %v869 = vunpack.c.l.b16 %v836
    %v870 = vunpack.c.h.b16 %v836
    %v871 = vunpack.c.l.b16 %v837
    %v872 = vunpack.c.h.b16 %v837
    %v873 = vunpack.c.l.b16 %v838
    %v874 = vunpack.c.h.b16 %v838
    %v875 = vpack.c.b16 %v853, %v851
    %v876 = vpack.c.b16 %v854, %v852
    %v877 = vpack.c.b16 %v857, %v855
    %v878 = vpack.c.b16 %v858, %v856
    %v879 = vpack.c.b16 %v861, %v859
    %v880 = vpack.c.b16 %v862, %v860
    %v881 = vpack.c.b16 %v865, %v863
    %v882 = vpack.c.b16 %v866, %v864
    %v883 = vpack.c.b16 %v869, %v867
    %v884 = vpack.c.b16 %v870, %v868
    %v885 = vpack.c.b16 %v873, %v871
    %v886 = vpack.c.b16 %v874, %v872
    %v900 = vsel %vm164, %v822, 0
    %v903 = vsel %vm164, %v823, 0
    %v906 = vsel %vm164, %v824, 0
    %v909 = vsel %vm164, %v825, 0
    %911 = vmatprep.subr.bf16.mxu0 0
    %912 = vmatpush1.bf16.msra.mxu0 0
    %913 = vmatprep.subr.bf16.mxu0 0
    %914 = vmatpush1.bf16.msra.mxu0 0
    %915 = vmatprep.subr.bf16.mxu0 %v886
    %916 = vmatpush1.bf16.msra.mxu0 %v885
    %917 = vmatprep.subr.bf16.mxu0 %v884
    %918 = vmatpush1.bf16.msra.mxu0 %v883
    %919 = vmatprep.subr.bf16.mxu0 %v882
    %920 = vmatpush1.bf16.msra.mxu0 %v881
    %921 = vmatprep.subr.bf16.mxu0 %v880
    %922 = vmatpush1.bf16.msra.mxu0 %v879
    %923 = vmatprep.subr.bf16.mxu0 %v878
    %924 = vmatpush1.bf16.msra.mxu0 %v877
    %925 = vmatprep.subr.bf16.mxu0 %v876
    %926 = vmatpush1.bf16.msra.mxu0 %v875
    %927 = vmatprep.subr.bf16.mxu0 0
    %928 = vmatpush2.bf16.msra.mxu0 0
    %929 = vmatprep.subr.bf16.mxu0 0
    %930 = vmatpush2.bf16.msra.mxu0 0
    %931 = vmatprep.subr.bf16.mxu0 0
    %932 = vmatpush2.bf16.msra.mxu0 0
    %933 = vmatprep.subr.bf16.mxu0 0
    %934 = vmatpush2.bf16.msra.mxu0 0
    %935 = vmatprep.subr.bf16.mxu0 0
    %936 = vmatpush2.bf16.msra.mxu0 0
    %937 = vmatprep.subr.bf16.mxu0 0
    %938 = vmatpush2.bf16.msra.mxu0 0
    %939 = vmatprep.subr.bf16.mxu0 0
    %940 = vmatpush2.bf16.msra.mxu0 0
    %941 = vmatprep.subr.bf16.mxu0 0
    %942 = vmatpush2.bf16.msra.mxu0 0
    %943 = vmatprep.mubr.bf16.mxu0 0
    %944 = vmatmul.mubr.bf16.gmra.mxu0 %v900
    %v945 = vpop.f32.mrf.mxu0
    %v946 = vadd.f32 0.0, %v945
    %v947 = vpop.f32.mrf.mxu0
    %v948 = vadd.f32 0.0, %v947
    %v949 = vpop.f32.mrf.mxu0
    %v950 = vadd.f32 0.0, %v949
    %v951 = vpop.f32.mrf.mxu0
    %v952 = vadd.f32 0.0, %v951
    %953 = vmatprep.mubr.bf16.mxu0 0
    %954 = vmatmul.mubr.bf16.gmra.mxu0 %v903
    %v955 = vpop.f32.mrf.mxu0
    %v956 = vadd.f32 0.0, %v955
    %v957 = vpop.f32.mrf.mxu0
    %v958 = vadd.f32 0.0, %v957
    %v959 = vpop.f32.mrf.mxu0
    %v960 = vadd.f32 0.0, %v959
    %v961 = vpop.f32.mrf.mxu0
    %v962 = vadd.f32 0.0, %v961
    %963 = vmatprep.mubr.bf16.mxu0 0
    %964 = vmatmul.mubr.bf16.gmra.mxu0 %v906
    %v965 = vpop.f32.mrf.mxu0
    %v966 = vadd.f32 0.0, %v965
    %v967 = vpop.f32.mrf.mxu0
    %v968 = vadd.f32 0.0, %v967
    %v969 = vpop.f32.mrf.mxu0
    %v970 = vadd.f32 0.0, %v969
    %v971 = vpop.f32.mrf.mxu0
    %v972 = vadd.f32 0.0, %v971
    %973 = vmatprep.mubr.bf16.mxu0 0
    %974 = vmatmul.mubr.bf16.gmra.mxu0 %v909
    %v975 = vpop.f32.mrf.mxu0
    %v976 = vadd.f32 0.0, %v975
    %v977 = vpop.f32.mrf.mxu0
    %v978 = vadd.f32 0.0, %v977
    %v979 = vpop.f32.mrf.mxu0
    %v980 = vadd.f32 0.0, %v979
    %v981 = vpop.f32.mrf.mxu0
    %v982 = vadd.f32 0.0, %v981
    %983 = vdwg.mxu0
    %v984 = vadd.f32 %v789, %v946
    %v985 = vadd.f32 %v790, %v948
    %v986 = vadd.f32 %v791, %v950
    %v987 = vadd.f32 %v792, %v952
    %v988 = vadd.f32 %v793, %v956
    %v989 = vadd.f32 %v794, %v958
    %v990 = vadd.f32 %v795, %v960
    %v991 = vadd.f32 %v796, %v962
    %v992 = vadd.f32 %v797, %v966
    %v993 = vadd.f32 %v798, %v968
    %v994 = vadd.f32 %v799, %v970
    %v995 = vadd.f32 %v800, %v972
    %v996 = vadd.f32 %v801, %v976
    %v997 = vadd.f32 %v802, %v978
    %v998 = vadd.f32 %v803, %v980
    %v999 = vadd.f32 %v804, %v982
    %v1000 = vld [vmem:[%s2] sm:$0x3]
    %v1002 = vlaneseq
    %v1003 = vshrl.u32 %v1002, 7
    %v1004 = vsub.s32 0, %v1003
    %v1005 = vrot.slane %v1000, %v1004
    %v1006 = vlaneseq
    %v1007 = vshrl.u32 %v1006, 7
    %v1008 = vsub.s32 1, %v1007
    %v1009 = vrot.slane %v1000, %v1008
    %v1012 = vadd.f32 %v984, %v1005
    %v1013 = vadd.f32 %v985, %v1009
    %v1014 = vadd.f32 %v986, %v1005
    %v1015 = vadd.f32 %v987, %v1009
    %v1016 = vadd.f32 %v988, %v1005
    %v1017 = vadd.f32 %v989, %v1009
    %v1018 = vadd.f32 %v990, %v1005
    %v1019 = vadd.f32 %v991, %v1009
    %v1020 = vadd.f32 %v992, %v1005
    %v1021 = vadd.f32 %v993, %v1009
    %v1022 = vadd.f32 %v994, %v1005
    %v1023 = vadd.f32 %v995, %v1009
    %v1024 = vadd.f32 %v996, %v1005
    %v1025 = vadd.f32 %v997, %v1009
    %v1026 = vadd.f32 %v998, %v1005
    %v1027 = vadd.f32 %v999, %v1009
    %v1028 = vmax.f32 %v1012, 0.0
    %v1029 = vmax.f32 %v1013, 0.0
    %v1030 = vmax.f32 %v1014, 0.0
    %v1031 = vmax.f32 %v1015, 0.0
    %v1032 = vmax.f32 %v1016, 0.0
    %v1033 = vmax.f32 %v1017, 0.0
    %v1034 = vmax.f32 %v1018, 0.0
    %v1035 = vmax.f32 %v1019, 0.0
    %v1036 = vmax.f32 %v1020, 0.0
    %v1037 = vmax.f32 %v1021, 0.0
    %v1038 = vmax.f32 %v1022, 0.0
    %v1039 = vmax.f32 %v1023, 0.0
    %v1040 = vmax.f32 %v1024, 0.0
    %v1041 = vmax.f32 %v1025, 0.0
    %v1042 = vmax.f32 %v1026, 0.0
    %v1043 = vmax.f32 %v1027, 0.0
    %vm1044 = vcmask 1047872
    %1045 = vrot.lane.b32.xlu0 %v1028, 40
    %v1046 = vpop.permute.xlu0 %1045
    %1047 = vrot.lane.b32.xlu0 %v1030, 40
    %v1048 = vpop.permute.xlu0 %1047
    %1049 = vrot.lane.b32.xlu0 %v1032, 40
    %v1050 = vpop.permute.xlu0 %1049
    %1051 = vrot.lane.b32.xlu0 %v1034, 40
    %v1052 = vpop.permute.xlu0 %1051
    %1053 = vrot.lane.b32.xlu0 %v1036, 40
    %v1054 = vpop.permute.xlu0 %1053
    %1055 = vrot.lane.b32.xlu0 %v1038, 40
    %v1056 = vpop.permute.xlu0 %1055
    %1057 = vrot.lane.b32.xlu0 %v1040, 40
    %v1058 = vpop.permute.xlu0 %1057
    %1059 = vrot.lane.b32.xlu0 %v1042, 40
    %v1060 = vpop.permute.xlu0 %1059
    %v1061 = vsel %vm1044, %v1046, %v1029
    %v1062 = vsel %vm1044, %v1048, %v1031
    %v1063 = vsel %vm1044, %v1050, %v1033
    %v1064 = vsel %vm1044, %v1052, %v1035
    %v1065 = vsel %vm1044, %v1054, %v1037
    %v1066 = vsel %vm1044, %v1056, %v1039
    %v1067 = vsel %vm1044, %v1058, %v1041
    %v1068 = vsel %vm1044, %v1060, %v1043
    %1085 = vrot.lane.b32.xlu0 %v1028, 122
    %v1086 = vpop.permute.xlu0 %1085
    %1087 = vrot.lane.b32.xlu0 %v1061, 122
    %v1088 = vpop.permute.xlu0 %1087
    %1089 = vrot.lane.b32.xlu0 %v1030, 122
    %v1090 = vpop.permute.xlu0 %1089
    %1091 = vrot.lane.b32.xlu0 %v1062, 122
    %v1092 = vpop.permute.xlu0 %1091
    %1093 = vrot.lane.b32.xlu0 %v1032, 122
    %v1094 = vpop.permute.xlu0 %1093
    %1095 = vrot.lane.b32.xlu0 %v1063, 122
    %v1096 = vpop.permute.xlu0 %1095
    %1097 = vrot.lane.b32.xlu0 %v1034, 122
    %v1098 = vpop.permute.xlu0 %1097
    %1099 = vrot.lane.b32.xlu0 %v1064, 122
    %v1100 = vpop.permute.xlu0 %1099
    %1101 = vrot.lane.b32.xlu0 %v1036, 122
    %v1102 = vpop.permute.xlu0 %1101
    %1103 = vrot.lane.b32.xlu0 %v1065, 122
    %v1104 = vpop.permute.xlu0 %1103
    %1105 = vrot.lane.b32.xlu0 %v1038, 122
    %v1106 = vpop.permute.xlu0 %1105
    %1107 = vrot.lane.b32.xlu0 %v1066, 122
    %v1108 = vpop.permute.xlu0 %1107
    %1109 = vrot.lane.b32.xlu0 %v1040, 122
    %v1110 = vpop.permute.xlu0 %1109
    %1111 = vrot.lane.b32.xlu0 %v1067, 122
    %v1112 = vpop.permute.xlu0 %1111
    %1113 = vrot.lane.b32.xlu0 %v1042, 122
    %v1114 = vpop.permute.xlu0 %1113
    %1115 = vrot.lane.b32.xlu0 %v1068, 122
    %v1116 = vpop.permute.xlu0 %1115
    %vm1117 = vcmask 998400
    %v1118 = vsel %vm1117, %v1086, %v1088
    %v1119 = vsel %vm1117, %v1090, %v1092
    %v1120 = vsel %vm1117, %v1094, %v1096
    %v1121 = vsel %vm1117, %v1098, %v1100
    %v1122 = vsel %vm1117, %v1102, %v1104
    %v1123 = vsel %vm1117, %v1106, %v1108
    %v1124 = vsel %vm1117, %v1110, %v1112
    %v1125 = vsel %vm1117, %v1114, %v1116
    %v1142 = vmax.f32 %v1028, %v1118
    %v1143 = vmax.f32 %v1029, %v1088
    %v1144 = vmax.f32 %v1030, %v1119
    %v1145 = vmax.f32 %v1031, %v1092
    %v1146 = vmax.f32 %v1032, %v1120
    %v1147 = vmax.f32 %v1033, %v1096
    %v1148 = vmax.f32 %v1034, %v1121
    %v1149 = vmax.f32 %v1035, %v1100
    %v1150 = vmax.f32 %v1036, %v1122
    %v1151 = vmax.f32 %v1037, %v1104
    %v1152 = vmax.f32 %v1038, %v1123
    %v1153 = vmax.f32 %v1039, %v1108
    %v1154 = vmax.f32 %v1040, %v1124
    %v1155 = vmax.f32 %v1041, %v1112
    %v1156 = vmax.f32 %v1042, %v1125
    %v1157 = vmax.f32 %v1043, %v1116
    %v1158 = vrot.slane %v1142, 1
    %v1159 = vrot.slane %v1143, 1
    %v1160 = vrot.slane %v1144, 1
    %v1161 = vrot.slane %v1145, 1
    %v1162 = vrot.slane %v1146, 1
    %v1163 = vrot.slane %v1147, 1
    %v1164 = vrot.slane %v1148, 1
    %v1165 = vrot.slane %v1149, 1
    %v1166 = vrot.slane %v1150, 1
    %v1167 = vrot.slane %v1151, 1
    %v1168 = vrot.slane %v1152, 1
    %v1169 = vrot.slane %v1153, 1
    %v1170 = vrot.slane %v1154, 1
    %v1171 = vrot.slane %v1155, 1
    %v1172 = vrot.slane %v1156, 1
    %v1173 = vrot.slane %v1157, 1
    %v1174 = vsel %vm78, %v1170, %v1172
    %v1175 = vsel %vm78, %v1171, %v1173
    %v1176 = vsel %vm78, %v1168, %v1170
    %v1177 = vsel %vm78, %v1169, %v1171
    %v1178 = vsel %vm78, %v1166, %v1168
    %v1179 = vsel %vm78, %v1167, %v1169
    %v1180 = vsel %vm78, %v1164, %v1166
    %v1181 = vsel %vm78, %v1165, %v1167
    %v1182 = vsel %vm78, %v1162, %v1164
    %v1183 = vsel %vm78, %v1163, %v1165
    %v1184 = vsel %vm78, %v1160, %v1162
    %v1185 = vsel %vm78, %v1161, %v1163
    %v1186 = vsel %vm78, %v1158, %v1160
    %v1187 = vsel %vm78, %v1159, %v1161
    %v1188 = vsel %vm78, %v1172, %v1158
    %v1189 = vsel %vm78, %v1173, %v1159
    %v1190 = vmax.f32 %v1142, %v1186
    %v1191 = vmax.f32 %v1143, %v1187
    %v1192 = vmax.f32 %v1144, %v1184
    %v1193 = vmax.f32 %v1145, %v1185
    %v1194 = vmax.f32 %v1146, %v1182
    %v1195 = vmax.f32 %v1147, %v1183
    %v1196 = vmax.f32 %v1148, %v1180
    %v1197 = vmax.f32 %v1149, %v1181
    %v1198 = vmax.f32 %v1150, %v1178
    %v1199 = vmax.f32 %v1151, %v1179
    %v1200 = vmax.f32 %v1152, %v1176
    %v1201 = vmax.f32 %v1153, %v1177
    %v1202 = vmax.f32 %v1154, %v1174
    %v1203 = vmax.f32 %v1155, %v1175
    %v1204 = vmax.f32 %v1156, %v1188
    %v1205 = vmax.f32 %v1157, %v1189
    %v1206 = vpack.c.bf16 %v1192, %v1190
    %v1207 = vpack.c.bf16 %v1193, %v1191
    %v1208 = vpack.c.bf16 %v1196, %v1194
    %v1209 = vpack.c.bf16 %v1197, %v1195
    %v1210 = vpack.c.bf16 %v1200, %v1198
    %v1211 = vpack.c.bf16 %v1201, %v1199
    %v1212 = vpack.c.bf16 %v1204, %v1202
    %v1213 = vpack.c.bf16 %v1205, %v1203
    %v1214 = vld [vmem:[%s3] sm:$0xff]
    %v1215 = vld [vmem:[%s3 + $0x8] sm:$0xff]
    %v1216 = vld [vmem:[%s3 + $0x10] sm:$0xff]
    %v1217 = vld [vmem:[%s3 + $0x18] sm:$0xff]
    %v1218 = vld [vmem:[%s3 + $0x20] sm:$0xff]
    %v1219 = vld [vmem:[%s3 + $0x28] sm:$0xff]
    %v1220 = vld [vmem:[%s3 + $0x30] sm:$0xff]
    %v1221 = vld [vmem:[%s3 + $0x38] sm:$0xff]
    %v1222 = vld [vmem:[%s3 + $0x40] sm:$0xff]
    %v1223 = vld [vmem:[%s3 + $0x48] sm:$0xff]
    %v1224 = vld [vmem:[%s3 + $0x50] sm:$0xff]
    %v1225 = vld [vmem:[%s3 + $0x58] sm:$0xff]
    %v1226 = vld [vmem:[%s3 + $0x60] sm:$0xff]
    %v1227 = vld [vmem:[%s3 + $0x68] sm:$0xff]
    %v1228 = vld [vmem:[%s3 + $0x70] sm:$0xff]
    %v1229 = vld [vmem:[%s3 + $0x78] sm:$0xff]
    %v1230 = vld [vmem:[%s3 + $0x80] sm:$0xff]
    %v1231 = vld [vmem:[%s3 + $0x88] sm:$0xff]
    %v1232 = vld [vmem:[%s3 + $0x90] sm:$0xff]
    %v1233 = vld [vmem:[%s3 + $0x98] sm:$0xff]
    %v1234 = vld [vmem:[%s3 + $0xa0] sm:$0xff]
    %v1235 = vrot.slane %v1190, 2
    %v1236 = vrot.slane %v1191, 2
    %v1237 = vrot.slane %v1192, 2
    %v1238 = vrot.slane %v1193, 2
    %v1239 = vrot.slane %v1194, 2
    %v1240 = vrot.slane %v1195, 2
    %v1241 = vrot.slane %v1196, 2
    %v1242 = vrot.slane %v1197, 2
    %v1243 = vrot.slane %v1198, 2
    %v1244 = vrot.slane %v1199, 2
    %v1245 = vrot.slane %v1200, 2
    %v1246 = vrot.slane %v1201, 2
    %v1247 = vrot.slane %v1202, 2
    %v1248 = vrot.slane %v1203, 2
    %v1249 = vrot.slane %v1204, 2
    %v1250 = vrot.slane %v1205, 2
    %v1251 = vsel %vm423, %v1247, %v1249
    %v1252 = vsel %vm423, %v1248, %v1250
    %v1253 = vsel %vm423, %v1245, %v1247
    %v1254 = vsel %vm423, %v1246, %v1248
    %v1255 = vsel %vm423, %v1243, %v1245
    %v1256 = vsel %vm423, %v1244, %v1246
    %v1257 = vsel %vm423, %v1241, %v1243
    %v1258 = vsel %vm423, %v1242, %v1244
    %v1259 = vsel %vm423, %v1239, %v1241
    %v1260 = vsel %vm423, %v1240, %v1242
    %v1261 = vsel %vm423, %v1237, %v1239
    %v1262 = vsel %vm423, %v1238, %v1240
    %v1263 = vsel %vm423, %v1235, %v1237
    %v1264 = vsel %vm423, %v1236, %v1238
    %v1265 = vsel %vm423, %v1249, %v1235
    %v1266 = vsel %vm423, %v1250, %v1236
    %v1267 = vpack.c.bf16 %v1261, %v1263
    %v1268 = vpack.c.bf16 %v1262, %v1264
    %v1269 = vpack.c.bf16 %v1257, %v1259
    %v1270 = vpack.c.bf16 %v1258, %v1260
    %v1271 = vpack.c.bf16 %v1253, %v1255
    %v1272 = vpack.c.bf16 %v1254, %v1256
    %v1273 = vpack.c.bf16 %v1265, %v1251
    %v1274 = vpack.c.bf16 %v1266, %v1252
    %s1275 = scalar_lea.vmem %s3, 168
    %v1276 = vld [vmem:[%s1275] sm:$0xff]
    %v1277 = vld [vmem:[%s1275 + $0x8] sm:$0xff]
    %v1278 = vld [vmem:[%s1275 + $0x10] sm:$0xff]
    %v1279 = vld [vmem:[%s1275 + $0x18] sm:$0xff]
    %v1280 = vld [vmem:[%s1275 + $0x20] sm:$0xff]
    %v1281 = vld [vmem:[%s1275 + $0x28] sm:$0xff]
    %v1282 = vld [vmem:[%s1275 + $0x30] sm:$0xff]
    %v1283 = vld [vmem:[%s1275 + $0x38] sm:$0xff]
    %v1284 = vld [vmem:[%s1275 + $0x40] sm:$0xff]
    %v1285 = vld [vmem:[%s1275 + $0x48] sm:$0xff]
    %v1286 = vld [vmem:[%s1275 + $0x50] sm:$0xff]
    %v1287 = vld [vmem:[%s1275 + $0x58] sm:$0xff]
    %v1288 = vld [vmem:[%s1275 + $0x60] sm:$0xff]
    %v1289 = vld [vmem:[%s1275 + $0x68] sm:$0xff]
    %v1290 = vld [vmem:[%s1275 + $0x70] sm:$0xff]
    %v1291 = vld [vmem:[%s1275 + $0x78] sm:$0xff]
    %v1292 = vld [vmem:[%s1275 + $0x80] sm:$0xff]
    %v1293 = vld [vmem:[%s1275 + $0x88] sm:$0xff]
    %v1294 = vld [vmem:[%s1275 + $0x90] sm:$0xff]
    %v1295 = vld [vmem:[%s1275 + $0x98] sm:$0xff]
    %v1296 = vld [vmem:[%s1275 + $0xa0] sm:$0xff]
    %v1318 = vunpack.c.l.b16 %v1276
    %v1319 = vunpack.c.h.b16 %v1276
    %v1320 = vunpack.c.l.b16 %v1277
    %v1321 = vunpack.c.h.b16 %v1277
    %v1322 = vunpack.c.l.b16 %v1278
    %v1323 = vunpack.c.h.b16 %v1278
    %v1324 = vunpack.c.l.b16 %v1279
    %v1325 = vunpack.c.h.b16 %v1279
    %v1326 = vunpack.c.l.b16 %v1280
    %v1327 = vunpack.c.h.b16 %v1280
    %v1328 = vunpack.c.l.b16 %v1281
    %v1329 = vunpack.c.h.b16 %v1281
    %v1330 = vunpack.c.l.b16 %v1282
    %v1331 = vunpack.c.h.b16 %v1282
    %v1332 = vunpack.c.l.b16 %v1283
    %v1333 = vunpack.c.h.b16 %v1283
    %v1334 = vunpack.c.l.b16 %v1284
    %v1335 = vunpack.c.h.b16 %v1284
    %v1336 = vunpack.c.l.b16 %v1285
    %v1337 = vunpack.c.h.b16 %v1285
    %v1338 = vunpack.c.l.b16 %v1286
    %v1339 = vunpack.c.h.b16 %v1286
    %v1340 = vunpack.c.l.b16 %v1287
    %v1341 = vunpack.c.h.b16 %v1287
    %v1342 = vunpack.c.l.b16 %v1288
    %v1343 = vunpack.c.h.b16 %v1288
    %v1344 = vunpack.c.l.b16 %v1289
    %v1345 = vunpack.c.h.b16 %v1289
    %v1346 = vunpack.c.l.b16 %v1290
    %v1347 = vunpack.c.h.b16 %v1290
    %v1348 = vunpack.c.l.b16 %v1291
    %v1349 = vunpack.c.h.b16 %v1291
    %v1350 = vunpack.c.l.b16 %v1292
    %v1351 = vunpack.c.h.b16 %v1292
    %v1352 = vunpack.c.l.b16 %v1293
    %v1353 = vunpack.c.h.b16 %v1293
    %v1354 = vunpack.c.l.b16 %v1294
    %v1355 = vunpack.c.h.b16 %v1294
    %v1356 = vunpack.c.l.b16 %v1295
    %v1357 = vunpack.c.h.b16 %v1295
    %v1358 = vunpack.c.l.b16 %v1296
    %v1359 = vunpack.c.h.b16 %v1296
    %v1360 = vpack.c.b16 %v1320, %v1318
    %v1361 = vpack.c.b16 %v1321, %v1319
    %v1362 = vpack.c.b16 %v1324, %v1322
    %v1363 = vpack.c.b16 %v1325, %v1323
    %v1364 = vpack.c.b16 %v1328, %v1326
    %v1365 = vpack.c.b16 %v1329, %v1327
    %v1366 = vpack.c.b16 %v1332, %v1330
    %v1367 = vpack.c.b16 %v1333, %v1331
    %v1368 = vpack.c.b16 %v1336, %v1334
    %v1369 = vpack.c.b16 %v1337, %v1335
    %v1370 = vpack.c.b16 %v1340, %v1338
    %v1371 = vpack.c.b16 %v1341, %v1339
    %v1372 = vpack.c.b16 %v1344, %v1342
    %v1373 = vpack.c.b16 %v1345, %v1343
    %v1374 = vpack.c.b16 %v1348, %v1346
    %v1375 = vpack.c.b16 %v1349, %v1347
    %v1376 = vpack.c.b16 %v1352, %v1350
    %v1377 = vpack.c.b16 %v1353, %v1351
    %v1378 = vpack.c.b16 %v1356, %v1354
    %v1379 = vpack.c.b16 %v1357, %v1355
    %v1380 = vpack.c.b16 %v1358, %v1358
    %v1381 = vpack.c.b16 %v1359, %v1359
    %vm1402 = vcmask 326656
    %v1404 = vsel %vm1402, %v1268, 0
    %v1407 = vsel %vm1402, %v1270, 0
    %v1410 = vsel %vm1402, %v1272, 0
    %v1413 = vsel %vm1402, %v1274, 0
    %vm1415 = vcmask 1043456
    %v1417 = vsel %vm1415, %v1380, 0
    %v1420 = vsel %vm1415, %v1381, 0
    %1422 = vmatprep.subr.bf16.mxu0 %v1375
    %1423 = vmatpush1.bf16.msra.mxu0 %v1374
    %1424 = vmatprep.subr.bf16.mxu0 %v1373
    %1425 = vmatpush1.bf16.msra.mxu0 %v1372
    %1426 = vmatprep.subr.bf16.mxu0 %v1371
    %1427 = vmatpush1.bf16.msra.mxu0 %v1370
    %1428 = vmatprep.subr.bf16.mxu0 %v1369
    %1429 = vmatpush1.bf16.msra.mxu0 %v1368
    %1430 = vmatprep.subr.bf16.mxu0 %v1367
    %1431 = vmatpush1.bf16.msra.mxu0 %v1366
    %1432 = vmatprep.subr.bf16.mxu0 %v1365
    %1433 = vmatpush1.bf16.msra.mxu0 %v1364
    %1434 = vmatprep.subr.bf16.mxu0 %v1363
    %1435 = vmatpush1.bf16.msra.mxu0 %v1362
    %1436 = vmatprep.subr.bf16.mxu0 %v1361
    %1437 = vmatpush1.bf16.msra.mxu0 %v1360
    %1438 = vmatprep.subr.bf16.mxu0 0
    %1439 = vmatpush2.bf16.msra.mxu0 0
    %1440 = vmatprep.subr.bf16.mxu0 0
    %1441 = vmatpush2.bf16.msra.mxu0 0
    %1442 = vmatprep.subr.bf16.mxu0 0
    %1443 = vmatpush2.bf16.msra.mxu0 0
    %1444 = vmatprep.subr.bf16.mxu0 0
    %1445 = vmatpush2.bf16.msra.mxu0 0
    %1446 = vmatprep.subr.bf16.mxu0 0
    %1447 = vmatpush2.bf16.msra.mxu0 0
    %1448 = vmatprep.subr.bf16.mxu0 %v1420
    %1449 = vmatpush2.bf16.msra.mxu0 %v1417
    %1450 = vmatprep.subr.bf16.mxu0 %v1379
    %1451 = vmatpush2.bf16.msra.mxu0 %v1378
    %1452 = vmatprep.subr.bf16.mxu0 %v1377
    %1453 = vmatpush2.bf16.msra.mxu0 %v1376
    %1454 = vmatprep.mubr.bf16.mxu0 %v1404
    %1455 = vmatmul.mubr.bf16.gmra.mxu0 %v1267
    %v1456 = vpop.f32.mrf.mxu0
    %v1457 = vadd.f32 0.0, %v1456
    %v1458 = vpop.f32.mrf.mxu0
    %v1459 = vadd.f32 0.0, %v1458
    %v1460 = vpop.f32.mrf.mxu0
    %v1461 = vadd.f32 0.0, %v1460
    %v1462 = vpop.f32.mrf.mxu0
    %v1463 = vadd.f32 0.0, %v1462
    %1464 = vmatprep.mubr.bf16.mxu0 %v1407
    %1465 = vmatmul.mubr.bf16.gmra.mxu0 %v1269
    %v1466 = vpop.f32.mrf.mxu0
    %v1467 = vadd.f32 0.0, %v1466
    %v1468 = vpop.f32.mrf.mxu0
    %v1469 = vadd.f32 0.0, %v1468
    %v1470 = vpop.f32.mrf.mxu0
    %v1471 = vadd.f32 0.0, %v1470
    %v1472 = vpop.f32.mrf.mxu0
    %v1473 = vadd.f32 0.0, %v1472
    %1474 = vmatprep.mubr.bf16.mxu0 %v1410
    %1475 = vmatmul.mubr.bf16.gmra.mxu0 %v1271
    %v1476 = vpop.f32.mrf.mxu0
    %v1477 = vadd.f32 0.0, %v1476
    %v1478 = vpop.f32.mrf.mxu0
    %v1479 = vadd.f32 0.0, %v1478
    %v1480 = vpop.f32.mrf.mxu0
    %v1481 = vadd.f32 0.0, %v1480
    %v1482 = vpop.f32.mrf.mxu0
    %v1483 = vadd.f32 0.0, %v1482
    %1484 = vmatprep.mubr.bf16.mxu0 %v1413
    %1485 = vmatmul.mubr.bf16.gmra.mxu0 %v1273
    %v1486 = vpop.f32.mrf.mxu0
    %v1487 = vadd.f32 0.0, %v1486
    %v1488 = vpop.f32.mrf.mxu0
    %v1489 = vadd.f32 0.0, %v1488
    %v1490 = vpop.f32.mrf.mxu0
    %v1491 = vadd.f32 0.0, %v1490
    %v1492 = vpop.f32.mrf.mxu0
    %v1493 = vadd.f32 0.0, %v1492
    %1494 = vdwg.mxu0
    %v1516 = vunpack.c.l.b16 %v1214
    %v1517 = vunpack.c.h.b16 %v1214
    %v1518 = vunpack.c.l.b16 %v1215
    %v1519 = vunpack.c.h.b16 %v1215
    %v1520 = vunpack.c.l.b16 %v1216
    %v1521 = vunpack.c.h.b16 %v1216
    %v1522 = vunpack.c.l.b16 %v1217
    %v1523 = vunpack.c.h.b16 %v1217
    %v1524 = vunpack.c.l.b16 %v1218
    %v1525 = vunpack.c.h.b16 %v1218
    %v1526 = vunpack.c.l.b16 %v1219
    %v1527 = vunpack.c.h.b16 %v1219
    %v1528 = vunpack.c.l.b16 %v1220
    %v1529 = vunpack.c.h.b16 %v1220
    %v1530 = vunpack.c.l.b16 %v1221
    %v1531 = vunpack.c.h.b16 %v1221
    %v1532 = vunpack.c.l.b16 %v1222
    %v1533 = vunpack.c.h.b16 %v1222
    %v1534 = vunpack.c.l.b16 %v1223
    %v1535 = vunpack.c.h.b16 %v1223
    %v1536 = vunpack.c.l.b16 %v1224
    %v1537 = vunpack.c.h.b16 %v1224
    %v1538 = vunpack.c.l.b16 %v1225
    %v1539 = vunpack.c.h.b16 %v1225
    %v1540 = vunpack.c.l.b16 %v1226
    %v1541 = vunpack.c.h.b16 %v1226
    %v1542 = vunpack.c.l.b16 %v1227
    %v1543 = vunpack.c.h.b16 %v1227
    %v1544 = vunpack.c.l.b16 %v1228
    %v1545 = vunpack.c.h.b16 %v1228
    %v1546 = vunpack.c.l.b16 %v1229
    %v1547 = vunpack.c.h.b16 %v1229
    %v1548 = vunpack.c.l.b16 %v1230
    %v1549 = vunpack.c.h.b16 %v1230
    %v1550 = vunpack.c.l.b16 %v1231
    %v1551 = vunpack.c.h.b16 %v1231
    %v1552 = vunpack.c.l.b16 %v1232
    %v1553 = vunpack.c.h.b16 %v1232
    %v1554 = vunpack.c.l.b16 %v1233
    %v1555 = vunpack.c.h.b16 %v1233
    %v1556 = vunpack.c.l.b16 %v1234
    %v1557 = vunpack.c.h.b16 %v1234
    %v1558 = vpack.c.b16 %v1518, %v1516
    %v1559 = vpack.c.b16 %v1519, %v1517
    %v1560 = vpack.c.b16 %v1522, %v1520
    %v1561 = vpack.c.b16 %v1523, %v1521
    %v1562 = vpack.c.b16 %v1526, %v1524
    %v1563 = vpack.c.b16 %v1527, %v1525
    %v1564 = vpack.c.b16 %v1530, %v1528
    %v1565 = vpack.c.b16 %v1531, %v1529
    %v1566 = vpack.c.b16 %v1534, %v1532
    %v1567 = vpack.c.b16 %v1535, %v1533
    %v1568 = vpack.c.b16 %v1538, %v1536
    %v1569 = vpack.c.b16 %v1539, %v1537
    %v1570 = vpack.c.b16 %v1542, %v1540
    %v1571 = vpack.c.b16 %v1543, %v1541
    %v1572 = vpack.c.b16 %v1546, %v1544
    %v1573 = vpack.c.b16 %v1547, %v1545
    %v1574 = vpack.c.b16 %v1550, %v1548
    %v1575 = vpack.c.b16 %v1551, %v1549
    %v1576 = vpack.c.b16 %v1554, %v1552
    %v1577 = vpack.c.b16 %v1555, %v1553
    %v1578 = vpack.c.b16 %v1556, %v1556
    %v1579 = vpack.c.b16 %v1557, %v1557
    %v1601 = vsel %vm1402, %v1207, 0
    %v1604 = vsel %vm1402, %v1209, 0
    %v1607 = vsel %vm1402, %v1211, 0
    %v1610 = vsel %vm1402, %v1213, 0
    %v1613 = vsel %vm1415, %v1578, 0
    %v1616 = vsel %vm1415, %v1579, 0
    %1618 = vmatprep.subr.bf16.mxu0 %v1573
    %1619 = vmatpush1.bf16.msra.mxu0 %v1572
    %1620 = vmatprep.subr.bf16.mxu0 %v1571
    %1621 = vmatpush1.bf16.msra.mxu0 %v1570
    %1622 = vmatprep.subr.bf16.mxu0 %v1569
    %1623 = vmatpush1.bf16.msra.mxu0 %v1568
    %1624 = vmatprep.subr.bf16.mxu0 %v1567
    %1625 = vmatpush1.bf16.msra.mxu0 %v1566
    %1626 = vmatprep.subr.bf16.mxu0 %v1565
    %1627 = vmatpush1.bf16.msra.mxu0 %v1564
    %1628 = vmatprep.subr.bf16.mxu0 %v1563
    %1629 = vmatpush1.bf16.msra.mxu0 %v1562
    %1630 = vmatprep.subr.bf16.mxu0 %v1561
    %1631 = vmatpush1.bf16.msra.mxu0 %v1560
    %1632 = vmatprep.subr.bf16.mxu0 %v1559
    %1633 = vmatpush1.bf16.msra.mxu0 %v1558
    %1634 = vmatprep.subr.bf16.mxu0 0
    %1635 = vmatpush2.bf16.msra.mxu0 0
    %1636 = vmatprep.subr.bf16.mxu0 0
    %1637 = vmatpush2.bf16.msra.mxu0 0
    %1638 = vmatprep.subr.bf16.mxu0 0
    %1639 = vmatpush2.bf16.msra.mxu0 0
    %1640 = vmatprep.subr.bf16.mxu0 0
    %1641 = vmatpush2.bf16.msra.mxu0 0
    %1642 = vmatprep.subr.bf16.mxu0 0
    %1643 = vmatpush2.bf16.msra.mxu0 0
    %1644 = vmatprep.subr.bf16.mxu0 %v1616
    %1645 = vmatpush2.bf16.msra.mxu0 %v1613
    %1646 = vmatprep.subr.bf16.mxu0 %v1577
    %1647 = vmatpush2.bf16.msra.mxu0 %v1576
    %1648 = vmatprep.subr.bf16.mxu0 %v1575
    %1649 = vmatpush2.bf16.msra.mxu0 %v1574
    %1650 = vmatprep.mubr.bf16.mxu0 %v1601
    %1651 = vmatmul.mubr.bf16.gmra.mxu0 %v1206
    %v1652 = vpop.f32.mrf.mxu0
    %v1653 = vadd.f32 %v1457, %v1652
    %v1654 = vpop.f32.mrf.mxu0
    %v1655 = vadd.f32 %v1459, %v1654
    %v1656 = vpop.f32.mrf.mxu0
    %v1657 = vadd.f32 %v1461, %v1656
    %v1658 = vpop.f32.mrf.mxu0
    %v1659 = vadd.f32 %v1463, %v1658
    %1660 = vmatprep.mubr.bf16.mxu0 %v1604
    %1661 = vmatmul.mubr.bf16.gmra.mxu0 %v1208
    %v1662 = vpop.f32.mrf.mxu0
    %v1663 = vadd.f32 %v1467, %v1662
    %v1664 = vpop.f32.mrf.mxu0
    %v1665 = vadd.f32 %v1469, %v1664
    %v1666 = vpop.f32.mrf.mxu0
    %v1667 = vadd.f32 %v1471, %v1666
    %v1668 = vpop.f32.mrf.mxu0
    %v1669 = vadd.f32 %v1473, %v1668
    %1670 = vmatprep.mubr.bf16.mxu0 %v1607
    %1671 = vmatmul.mubr.bf16.gmra.mxu0 %v1210
    %v1672 = vpop.f32.mrf.mxu0
    %v1673 = vadd.f32 %v1477, %v1672
    %v1674 = vpop.f32.mrf.mxu0
    %v1675 = vadd.f32 %v1479, %v1674
    %v1676 = vpop.f32.mrf.mxu0
    %v1677 = vadd.f32 %v1481, %v1676
    %v1678 = vpop.f32.mrf.mxu0
    %v1679 = vadd.f32 %v1483, %v1678
    %1680 = vmatprep.mubr.bf16.mxu0 %v1610
    %1681 = vmatmul.mubr.bf16.gmra.mxu0 %v1212
    %v1682 = vpop.f32.mrf.mxu0
    %v1683 = vadd.f32 %v1487, %v1682
    %v1684 = vpop.f32.mrf.mxu0
    %v1685 = vadd.f32 %v1489, %v1684
    %v1686 = vpop.f32.mrf.mxu0
    %v1687 = vadd.f32 %v1491, %v1686
    %v1688 = vpop.f32.mrf.mxu0
    %v1689 = vadd.f32 %v1493, %v1688
    %1690 = vdwg.mxu0
    %v1691 = vrot.slane %v1190, 4
    %v1692 = vrot.slane %v1191, 4
    %v1693 = vrot.slane %v1192, 4
    %v1694 = vrot.slane %v1193, 4
    %v1695 = vrot.slane %v1194, 4
    %v1696 = vrot.slane %v1195, 4
    %v1697 = vrot.slane %v1196, 4
    %v1698 = vrot.slane %v1197, 4
    %v1699 = vrot.slane %v1198, 4
    %v1700 = vrot.slane %v1199, 4
    %v1701 = vrot.slane %v1200, 4
    %v1702 = vrot.slane %v1201, 4
    %v1703 = vrot.slane %v1202, 4
    %v1704 = vrot.slane %v1203, 4
    %v1705 = vrot.slane %v1204, 4
    %v1706 = vrot.slane %v1205, 4
    %v1707 = vsel %vm813, %v1703, %v1705
    %v1708 = vsel %vm813, %v1704, %v1706
    %v1709 = vsel %vm813, %v1701, %v1703
    %v1710 = vsel %vm813, %v1702, %v1704
    %v1711 = vsel %vm813, %v1699, %v1701
    %v1712 = vsel %vm813, %v1700, %v1702
    %v1713 = vsel %vm813, %v1697, %v1699
    %v1714 = vsel %vm813, %v1698, %v1700
    %v1715 = vsel %vm813, %v1695, %v1697
    %v1716 = vsel %vm813, %v1696, %v1698
    %v1717 = vsel %vm813, %v1693, %v1695
    %v1718 = vsel %vm813, %v1694, %v1696
    %v1719 = vsel %vm813, %v1691, %v1693
    %v1720 = vsel %vm813, %v1692, %v1694
    %v1721 = vsel %vm813, %v1705, %v1691
    %v1722 = vsel %vm813, %v1706, %v1692
    %v1723 = vpack.c.bf16 %v1717, %v1719
    %v1724 = vpack.c.bf16 %v1718, %v1720
    %v1725 = vpack.c.bf16 %v1713, %v1715
    %v1726 = vpack.c.bf16 %v1714, %v1716
    %v1727 = vpack.c.bf16 %v1709, %v1711
    %v1728 = vpack.c.bf16 %v1710, %v1712
    %v1729 = vpack.c.bf16 %v1721, %v1707
    %v1730 = vpack.c.bf16 %v1722, %v1708
    %s1731 = scalar_lea.vmem %s3, 336
    %v1732 = vld [vmem:[%s1731] sm:$0xff]
    %v1733 = vld [vmem:[%s1731 + $0x8] sm:$0xff]
    %v1734 = vld [vmem:[%s1731 + $0x10] sm:$0xff]
    %v1735 = vld [vmem:[%s1731 + $0x18] sm:$0xff]
    %v1736 = vld [vmem:[%s1731 + $0x20] sm:$0xff]
    %v1737 = vld [vmem:[%s1731 + $0x28] sm:$0xff]
    %v1738 = vld [vmem:[%s1731 + $0x30] sm:$0xff]
    %v1739 = vld [vmem:[%s1731 + $0x38] sm:$0xff]
    %v1740 = vld [vmem:[%s1731 + $0x40] sm:$0xff]
    %v1741 = vld [vmem:[%s1731 + $0x48] sm:$0xff]
    %v1742 = vld [vmem:[%s1731 + $0x50] sm:$0xff]
    %v1743 = vld [vmem:[%s1731 + $0x58] sm:$0xff]
    %v1744 = vld [vmem:[%s1731 + $0x60] sm:$0xff]
    %v1745 = vld [vmem:[%s1731 + $0x68] sm:$0xff]
    %v1746 = vld [vmem:[%s1731 + $0x70] sm:$0xff]
    %v1747 = vld [vmem:[%s1731 + $0x78] sm:$0xff]
    %v1748 = vld [vmem:[%s1731 + $0x80] sm:$0xff]
    %v1749 = vld [vmem:[%s1731 + $0x88] sm:$0xff]
    %v1750 = vld [vmem:[%s1731 + $0x90] sm:$0xff]
    %v1751 = vld [vmem:[%s1731 + $0x98] sm:$0xff]
    %v1752 = vld [vmem:[%s1731 + $0xa0] sm:$0xff]
    %v1774 = vunpack.c.l.b16 %v1732
    %v1775 = vunpack.c.h.b16 %v1732
    %v1776 = vunpack.c.l.b16 %v1733
    %v1777 = vunpack.c.h.b16 %v1733
    %v1778 = vunpack.c.l.b16 %v1734
    %v1779 = vunpack.c.h.b16 %v1734
    %v1780 = vunpack.c.l.b16 %v1735
    %v1781 = vunpack.c.h.b16 %v1735
    %v1782 = vunpack.c.l.b16 %v1736
    %v1783 = vunpack.c.h.b16 %v1736
    %v1784 = vunpack.c.l.b16 %v1737
    %v1785 = vunpack.c.h.b16 %v1737
    %v1786 = vunpack.c.l.b16 %v1738
    %v1787 = vunpack.c.h.b16 %v1738
    %v1788 = vunpack.c.l.b16 %v1739
    %v1789 = vunpack.c.h.b16 %v1739
    %v1790 = vunpack.c.l.b16 %v1740
    %v1791 = vunpack.c.h.b16 %v1740
    %v1792 = vunpack.c.l.b16 %v1741
    %v1793 = vunpack.c.h.b16 %v1741
    %v1794 = vunpack.c.l.b16 %v1742
    %v1795 = vunpack.c.h.b16 %v1742
    %v1796 = vunpack.c.l.b16 %v1743
    %v1797 = vunpack.c.h.b16 %v1743
    %v1798 = vunpack.c.l.b16 %v1744
    %v1799 = vunpack.c.h.b16 %v1744
    %v1800 = vunpack.c.l.b16 %v1745
    %v1801 = vunpack.c.h.b16 %v1745
    %v1802 = vunpack.c.l.b16 %v1746
    %v1803 = vunpack.c.h.b16 %v1746
    %v1804 = vunpack.c.l.b16 %v1747
    %v1805 = vunpack.c.h.b16 %v1747
    %v1806 = vunpack.c.l.b16 %v1748
    %v1807 = vunpack.c.h.b16 %v1748
    %v1808 = vunpack.c.l.b16 %v1749
    %v1809 = vunpack.c.h.b16 %v1749
    %v1810 = vunpack.c.l.b16 %v1750
    %v1811 = vunpack.c.h.b16 %v1750
    %v1812 = vunpack.c.l.b16 %v1751
    %v1813 = vunpack.c.h.b16 %v1751
    %v1814 = vunpack.c.l.b16 %v1752
    %v1815 = vunpack.c.h.b16 %v1752
    %v1816 = vpack.c.b16 %v1776, %v1774
    %v1817 = vpack.c.b16 %v1777, %v1775
    %v1818 = vpack.c.b16 %v1780, %v1778
    %v1819 = vpack.c.b16 %v1781, %v1779
    %v1820 = vpack.c.b16 %v1784, %v1782
    %v1821 = vpack.c.b16 %v1785, %v1783
    %v1822 = vpack.c.b16 %v1788, %v1786
    %v1823 = vpack.c.b16 %v1789, %v1787
    %v1824 = vpack.c.b16 %v1792, %v1790
    %v1825 = vpack.c.b16 %v1793, %v1791
    %v1826 = vpack.c.b16 %v1796, %v1794
    %v1827 = vpack.c.b16 %v1797, %v1795
    %v1828 = vpack.c.b16 %v1800, %v1798
    %v1829 = vpack.c.b16 %v1801, %v1799
    %v1830 = vpack.c.b16 %v1804, %v1802
    %v1831 = vpack.c.b16 %v1805, %v1803
    %v1832 = vpack.c.b16 %v1808, %v1806
    %v1833 = vpack.c.b16 %v1809, %v1807
    %v1834 = vpack.c.b16 %v1812, %v1810
    %v1835 = vpack.c.b16 %v1813, %v1811
    %v1836 = vpack.c.b16 %v1814, %v1814
    %v1837 = vpack.c.b16 %v1815, %v1815
    %v1859 = vsel %vm1402, %v1724, 0
    %v1862 = vsel %vm1402, %v1726, 0
    %v1865 = vsel %vm1402, %v1728, 0
    %v1868 = vsel %vm1402, %v1730, 0
    %v1871 = vsel %vm1415, %v1836, 0
    %v1874 = vsel %vm1415, %v1837, 0
    %1876 = vmatprep.subr.bf16.mxu0 %v1831
    %1877 = vmatpush1.bf16.msra.mxu0 %v1830
    %1878 = vmatprep.subr.bf16.mxu0 %v1829
    %1879 = vmatpush1.bf16.msra.mxu0 %v1828
    %1880 = vmatprep.subr.bf16.mxu0 %v1827
    %1881 = vmatpush1.bf16.msra.mxu0 %v1826
    %1882 = vmatprep.subr.bf16.mxu0 %v1825
    %1883 = vmatpush1.bf16.msra.mxu0 %v1824
    %1884 = vmatprep.subr.bf16.mxu0 %v1823
    %1885 = vmatpush1.bf16.msra.mxu0 %v1822
    %1886 = vmatprep.subr.bf16.mxu0 %v1821
    %1887 = vmatpush1.bf16.msra.mxu0 %v1820
    %1888 = vmatprep.subr.bf16.mxu0 %v1819
    %1889 = vmatpush1.bf16.msra.mxu0 %v1818
    %1890 = vmatprep.subr.bf16.mxu0 %v1817
    %1891 = vmatpush1.bf16.msra.mxu0 %v1816
    %1892 = vmatprep.subr.bf16.mxu0 0
    %1893 = vmatpush2.bf16.msra.mxu0 0
    %1894 = vmatprep.subr.bf16.mxu0 0
    %1895 = vmatpush2.bf16.msra.mxu0 0
    %1896 = vmatprep.subr.bf16.mxu0 0
    %1897 = vmatpush2.bf16.msra.mxu0 0
    %1898 = vmatprep.subr.bf16.mxu0 0
    %1899 = vmatpush2.bf16.msra.mxu0 0
    %1900 = vmatprep.subr.bf16.mxu0 0
    %1901 = vmatpush2.bf16.msra.mxu0 0
    %1902 = vmatprep.subr.bf16.mxu0 %v1874
    %1903 = vmatpush2.bf16.msra.mxu0 %v1871
    %1904 = vmatprep.subr.bf16.mxu0 %v1835
    %1905 = vmatpush2.bf16.msra.mxu0 %v1834
    %1906 = vmatprep.subr.bf16.mxu0 %v1833
    %1907 = vmatpush2.bf16.msra.mxu0 %v1832
    %1908 = vmatprep.mubr.bf16.mxu0 %v1859
    %1909 = vmatmul.mubr.bf16.gmra.mxu0 %v1723
    %v1910 = vpop.f32.mrf.mxu0
    %v1911 = vadd.f32 0.0, %v1910
    %v1912 = vpop.f32.mrf.mxu0
    %v1913 = vadd.f32 0.0, %v1912
    %v1914 = vpop.f32.mrf.mxu0
    %v1915 = vadd.f32 0.0, %v1914
    %v1916 = vpop.f32.mrf.mxu0
    %v1917 = vadd.f32 0.0, %v1916
    %1918 = vmatprep.mubr.bf16.mxu0 %v1862
    %1919 = vmatmul.mubr.bf16.gmra.mxu0 %v1725
    %v1920 = vpop.f32.mrf.mxu0
    %v1921 = vadd.f32 0.0, %v1920
    %v1922 = vpop.f32.mrf.mxu0
    %v1923 = vadd.f32 0.0, %v1922
    %v1924 = vpop.f32.mrf.mxu0
    %v1925 = vadd.f32 0.0, %v1924
    %v1926 = vpop.f32.mrf.mxu0
    %v1927 = vadd.f32 0.0, %v1926
    %1928 = vmatprep.mubr.bf16.mxu0 %v1865
    %1929 = vmatmul.mubr.bf16.gmra.mxu0 %v1727
    %v1930 = vpop.f32.mrf.mxu0
    %v1931 = vadd.f32 0.0, %v1930
    %v1932 = vpop.f32.mrf.mxu0
    %v1933 = vadd.f32 0.0, %v1932
    %v1934 = vpop.f32.mrf.mxu0
    %v1935 = vadd.f32 0.0, %v1934
    %v1936 = vpop.f32.mrf.mxu0
    %v1937 = vadd.f32 0.0, %v1936
    %1938 = vmatprep.mubr.bf16.mxu0 %v1868
    %1939 = vmatmul.mubr.bf16.gmra.mxu0 %v1729
    %v1940 = vpop.f32.mrf.mxu0
    %v1941 = vadd.f32 0.0, %v1940
    %v1942 = vpop.f32.mrf.mxu0
    %v1943 = vadd.f32 0.0, %v1942
    %v1944 = vpop.f32.mrf.mxu0
    %v1945 = vadd.f32 0.0, %v1944
    %v1946 = vpop.f32.mrf.mxu0
    %v1947 = vadd.f32 0.0, %v1946
    %1948 = vdwg.mxu0
    %v1949 = vadd.f32 %v1653, %v1911
    %v1950 = vadd.f32 %v1655, %v1913
    %v1951 = vadd.f32 %v1657, %v1915
    %v1952 = vadd.f32 %v1659, %v1917
    %v1953 = vadd.f32 %v1663, %v1921
    %v1954 = vadd.f32 %v1665, %v1923
    %v1955 = vadd.f32 %v1667, %v1925
    %v1956 = vadd.f32 %v1669, %v1927
    %v1957 = vadd.f32 %v1673, %v1931
    %v1958 = vadd.f32 %v1675, %v1933
    %v1959 = vadd.f32 %v1677, %v1935
    %v1960 = vadd.f32 %v1679, %v1937
    %v1961 = vadd.f32 %v1683, %v1941
    %v1962 = vadd.f32 %v1685, %v1943
    %v1963 = vadd.f32 %v1687, %v1945
    %v1964 = vadd.f32 %v1689, %v1947
    %v1965 = vrot.slane %v1190, 6
    %v1966 = vrot.slane %v1191, 6
    %v1967 = vrot.slane %v1192, 6
    %v1968 = vrot.slane %v1193, 6
    %v1969 = vrot.slane %v1194, 6
    %v1970 = vrot.slane %v1195, 6
    %v1971 = vrot.slane %v1196, 6
    %v1972 = vrot.slane %v1197, 6
    %v1973 = vrot.slane %v1198, 6
    %v1974 = vrot.slane %v1199, 6
    %v1975 = vrot.slane %v1200, 6
    %v1976 = vrot.slane %v1201, 6
    %v1977 = vrot.slane %v1202, 6
    %v1978 = vrot.slane %v1203, 6
    %v1979 = vrot.slane %v1204, 6
    %v1980 = vrot.slane %v1205, 6
    %vm1981 = vcmp.lt.s32.totalorder %v77, 2
    %v1982 = vsel %vm1981, %v1977, %v1979
    %v1983 = vsel %vm1981, %v1978, %v1980
    %v1984 = vsel %vm1981, %v1975, %v1977
    %v1985 = vsel %vm1981, %v1976, %v1978
    %v1986 = vsel %vm1981, %v1973, %v1975
    %v1987 = vsel %vm1981, %v1974, %v1976
    %v1988 = vsel %vm1981, %v1971, %v1973
    %v1989 = vsel %vm1981, %v1972, %v1974
    %v1990 = vsel %vm1981, %v1969, %v1971
    %v1991 = vsel %vm1981, %v1970, %v1972
    %v1992 = vsel %vm1981, %v1967, %v1969
    %v1993 = vsel %vm1981, %v1968, %v1970
    %v1994 = vsel %vm1981, %v1965, %v1967
    %v1995 = vsel %vm1981, %v1966, %v1968
    %v1996 = vsel %vm1981, %v1979, %v1965
    %v1997 = vsel %vm1981, %v1980, %v1966
    %v1998 = vpack.c.bf16 %v1992, %v1994
    %v1999 = vpack.c.bf16 %v1993, %v1995
    %v2000 = vpack.c.bf16 %v1988, %v1990
    %v2001 = vpack.c.bf16 %v1989, %v1991
    %v2002 = vpack.c.bf16 %v1984, %v1986
    %v2003 = vpack.c.bf16 %v1985, %v1987
    %v2004 = vpack.c.bf16 %v1996, %v1982
    %v2005 = vpack.c.bf16 %v1997, %v1983
    %s2006 = scalar_lea.vmem %s3, 504
    %v2007 = vld [vmem:[%s2006] sm:$0xff]
    %v2008 = vld [vmem:[%s2006 + $0x8] sm:$0xff]
    %v2009 = vld [vmem:[%s2006 + $0x10] sm:$0xff]
    %v2010 = vld [vmem:[%s2006 + $0x18] sm:$0xff]
    %v2011 = vld [vmem:[%s2006 + $0x20] sm:$0xff]
    %v2012 = vld [vmem:[%s2006 + $0x28] sm:$0xff]
    %v2013 = vld [vmem:[%s2006 + $0x30] sm:$0xff]
    %v2014 = vld [vmem:[%s2006 + $0x38] sm:$0xff]
    %v2015 = vld [vmem:[%s2006 + $0x40] sm:$0xff]
    %v2016 = vld [vmem:[%s2006 + $0x48] sm:$0xff]
    %v2017 = vld [vmem:[%s2006 + $0x50] sm:$0xff]
    %v2018 = vld [vmem:[%s2006 + $0x58] sm:$0xff]
    %v2019 = vld [vmem:[%s2006 + $0x60] sm:$0xff]
    %v2020 = vld [vmem:[%s2006 + $0x68] sm:$0xff]
    %v2021 = vld [vmem:[%s2006 + $0x70] sm:$0xff]
    %v2022 = vld [vmem:[%s2006 + $0x78] sm:$0xff]
    %v2023 = vld [vmem:[%s2006 + $0x80] sm:$0xff]
    %v2024 = vld [vmem:[%s2006 + $0x88] sm:$0xff]
    %v2025 = vld [vmem:[%s2006 + $0x90] sm:$0xff]
    %v2026 = vld [vmem:[%s2006 + $0x98] sm:$0xff]
    %v2027 = vld [vmem:[%s2006 + $0xa0] sm:$0xff]
    %v2049 = vunpack.c.l.b16 %v2007
    %v2050 = vunpack.c.h.b16 %v2007
    %v2051 = vunpack.c.l.b16 %v2008
    %v2052 = vunpack.c.h.b16 %v2008
    %v2053 = vunpack.c.l.b16 %v2009
    %v2054 = vunpack.c.h.b16 %v2009
    %v2055 = vunpack.c.l.b16 %v2010
    %v2056 = vunpack.c.h.b16 %v2010
    %v2057 = vunpack.c.l.b16 %v2011
    %v2058 = vunpack.c.h.b16 %v2011
    %v2059 = vunpack.c.l.b16 %v2012
    %v2060 = vunpack.c.h.b16 %v2012
    %v2061 = vunpack.c.l.b16 %v2013
    %v2062 = vunpack.c.h.b16 %v2013
    %v2063 = vunpack.c.l.b16 %v2014
    %v2064 = vunpack.c.h.b16 %v2014
    %v2065 = vunpack.c.l.b16 %v2015
    %v2066 = vunpack.c.h.b16 %v2015
    %v2067 = vunpack.c.l.b16 %v2016
    %v2068 = vunpack.c.h.b16 %v2016
    %v2069 = vunpack.c.l.b16 %v2017
    %v2070 = vunpack.c.h.b16 %v2017
    %v2071 = vunpack.c.l.b16 %v2018
    %v2072 = vunpack.c.h.b16 %v2018
    %v2073 = vunpack.c.l.b16 %v2019
    %v2074 = vunpack.c.h.b16 %v2019
    %v2075 = vunpack.c.l.b16 %v2020
    %v2076 = vunpack.c.h.b16 %v2020
    %v2077 = vunpack.c.l.b16 %v2021
    %v2078 = vunpack.c.h.b16 %v2021
    %v2079 = vunpack.c.l.b16 %v2022
    %v2080 = vunpack.c.h.b16 %v2022
    %v2081 = vunpack.c.l.b16 %v2023
    %v2082 = vunpack.c.h.b16 %v2023
    %v2083 = vunpack.c.l.b16 %v2024
    %v2084 = vunpack.c.h.b16 %v2024
    %v2085 = vunpack.c.l.b16 %v2025
    %v2086 = vunpack.c.h.b16 %v2025
    %v2087 = vunpack.c.l.b16 %v2026
    %v2088 = vunpack.c.h.b16 %v2026
    %v2089 = vunpack.c.l.b16 %v2027
    %v2090 = vunpack.c.h.b16 %v2027
    %v2091 = vpack.c.b16 %v2051, %v2049
    %v2092 = vpack.c.b16 %v2052, %v2050
    %v2093 = vpack.c.b16 %v2055, %v2053
    %v2094 = vpack.c.b16 %v2056, %v2054
    %v2095 = vpack.c.b16 %v2059, %v2057
    %v2096 = vpack.c.b16 %v2060, %v2058
    %v2097 = vpack.c.b16 %v2063, %v2061
    %v2098 = vpack.c.b16 %v2064, %v2062
    %v2099 = vpack.c.b16 %v2067, %v2065
    %v2100 = vpack.c.b16 %v2068, %v2066
    %v2101 = vpack.c.b16 %v2071, %v2069
    %v2102 = vpack.c.b16 %v2072, %v2070
    %v2103 = vpack.c.b16 %v2075, %v2073
    %v2104 = vpack.c.b16 %v2076, %v2074
    %v2105 = vpack.c.b16 %v2079, %v2077
    %v2106 = vpack.c.b16 %v2080, %v2078
    %v2107 = vpack.c.b16 %v2083, %v2081
    %v2108 = vpack.c.b16 %v2084, %v2082
    %v2109 = vpack.c.b16 %v2087, %v2085
    %v2110 = vpack.c.b16 %v2088, %v2086
    %v2111 = vpack.c.b16 %v2089, %v2089
    %v2112 = vpack.c.b16 %v2090, %v2090
    %v2134 = vsel %vm1402, %v1999, 0
    %v2137 = vsel %vm1402, %v2001, 0
    %v2140 = vsel %vm1402, %v2003, 0
    %v2143 = vsel %vm1402, %v2005, 0
    %v2146 = vsel %vm1415, %v2111, 0
    %v2149 = vsel %vm1415, %v2112, 0
    %2151 = vmatprep.subr.bf16.mxu0 %v2106
    %2152 = vmatpush1.bf16.msra.mxu0 %v2105
    %2153 = vmatprep.subr.bf16.mxu0 %v2104
    %2154 = vmatpush1.bf16.msra.mxu0 %v2103
    %2155 = vmatprep.subr.bf16.mxu0 %v2102
    %2156 = vmatpush1.bf16.msra.mxu0 %v2101
    %2157 = vmatprep.subr.bf16.mxu0 %v2100
    %2158 = vmatpush1.bf16.msra.mxu0 %v2099
    %2159 = vmatprep.subr.bf16.mxu0 %v2098
    %2160 = vmatpush1.bf16.msra.mxu0 %v2097
    %2161 = vmatprep.subr.bf16.mxu0 %v2096
    %2162 = vmatpush1.bf16.msra.mxu0 %v2095
    %2163 = vmatprep.subr.bf16.mxu0 %v2094
    %2164 = vmatpush1.bf16.msra.mxu0 %v2093
    %2165 = vmatprep.subr.bf16.mxu0 %v2092
    %2166 = vmatpush1.bf16.msra.mxu0 %v2091
    %2167 = vmatprep.subr.bf16.mxu0 0
    %2168 = vmatpush2.bf16.msra.mxu0 0
    %2169 = vmatprep.subr.bf16.mxu0 0
    %2170 = vmatpush2.bf16.msra.mxu0 0
    %2171 = vmatprep.subr.bf16.mxu0 0
    %2172 = vmatpush2.bf16.msra.mxu0 0
    %2173 = vmatprep.subr.bf16.mxu0 0
    %2174 = vmatpush2.bf16.msra.mxu0 0
    %2175 = vmatprep.subr.bf16.mxu0 0
    %2176 = vmatpush2.bf16.msra.mxu0 0
    %2177 = vmatprep.subr.bf16.mxu0 %v2149
    %2178 = vmatpush2.bf16.msra.mxu0 %v2146
    %2179 = vmatprep.subr.bf16.mxu0 %v2110
    %2180 = vmatpush2.bf16.msra.mxu0 %v2109
    %2181 = vmatprep.subr.bf16.mxu0 %v2108
    %2182 = vmatpush2.bf16.msra.mxu0 %v2107
    %2183 = vmatprep.mubr.bf16.mxu0 %v2134
    %2184 = vmatmul.mubr.bf16.gmra.mxu0 %v1998
    %v2185 = vpop.f32.mrf.mxu0
    %v2186 = vadd.f32 0.0, %v2185
    %v2187 = vpop.f32.mrf.mxu0
    %v2188 = vadd.f32 0.0, %v2187
    %v2189 = vpop.f32.mrf.mxu0
    %v2190 = vadd.f32 0.0, %v2189
    %v2191 = vpop.f32.mrf.mxu0
    %v2192 = vadd.f32 0.0, %v2191
    %2193 = vmatprep.mubr.bf16.mxu0 %v2137
    %2194 = vmatmul.mubr.bf16.gmra.mxu0 %v2000
    %v2195 = vpop.f32.mrf.mxu0
    %v2196 = vadd.f32 0.0, %v2195
    %v2197 = vpop.f32.mrf.mxu0
    %v2198 = vadd.f32 0.0, %v2197
    %v2199 = vpop.f32.mrf.mxu0
    %v2200 = vadd.f32 0.0, %v2199
    %v2201 = vpop.f32.mrf.mxu0
    %v2202 = vadd.f32 0.0, %v2201
    %2203 = vmatprep.mubr.bf16.mxu0 %v2140
    %2204 = vmatmul.mubr.bf16.gmra.mxu0 %v2002
    %v2205 = vpop.f32.mrf.mxu0
    %v2206 = vadd.f32 0.0, %v2205
    %v2207 = vpop.f32.mrf.mxu0
    %v2208 = vadd.f32 0.0, %v2207
    %v2209 = vpop.f32.mrf.mxu0
    %v2210 = vadd.f32 0.0, %v2209
    %v2211 = vpop.f32.mrf.mxu0
    %v2212 = vadd.f32 0.0, %v2211
    %2213 = vmatprep.mubr.bf16.mxu0 %v2143
    %2214 = vmatmul.mubr.bf16.gmra.mxu0 %v2004
    %v2215 = vpop.f32.mrf.mxu0
    %v2216 = vadd.f32 0.0, %v2215
    %v2217 = vpop.f32.mrf.mxu0
    %v2218 = vadd.f32 0.0, %v2217
    %v2219 = vpop.f32.mrf.mxu0
    %v2220 = vadd.f32 0.0, %v2219
    %v2221 = vpop.f32.mrf.mxu0
    %v2222 = vadd.f32 0.0, %v2221
    %2223 = vdwg.mxu0
    %v2224 = vadd.f32 %v1949, %v2186
    %v2225 = vadd.f32 %v1950, %v2188
    %v2226 = vadd.f32 %v1951, %v2190
    %v2227 = vadd.f32 %v1952, %v2192
    %v2228 = vadd.f32 %v1953, %v2196
    %v2229 = vadd.f32 %v1954, %v2198
    %v2230 = vadd.f32 %v1955, %v2200
    %v2231 = vadd.f32 %v1956, %v2202
    %v2232 = vadd.f32 %v1957, %v2206
    %v2233 = vadd.f32 %v1958, %v2208
    %v2234 = vadd.f32 %v1959, %v2210
    %v2235 = vadd.f32 %v1960, %v2212
    %v2236 = vadd.f32 %v1961, %v2216
    %v2237 = vadd.f32 %v1962, %v2218
    %v2238 = vadd.f32 %v1963, %v2220
    %v2239 = vadd.f32 %v1964, %v2222
    %v2240 = vpack.c.bf16 %v1194, %v1192
    %v2241 = vpack.c.bf16 %v1195, %v1193
    %v2242 = vpack.c.bf16 %v1198, %v1196
    %v2243 = vpack.c.bf16 %v1199, %v1197
    %v2244 = vpack.c.bf16 %v1202, %v1200
    %v2245 = vpack.c.bf16 %v1203, %v1201
    %v2246 = vpack.c.bf16 %v1190, %v1204
    %v2247 = vpack.c.bf16 %v1191, %v1205
    %s2248 = scalar_lea.vmem %s3, 672
    %v2249 = vld [vmem:[%s2248] sm:$0xff]
    %v2250 = vld [vmem:[%s2248 + $0x8] sm:$0xff]
    %v2251 = vld [vmem:[%s2248 + $0x10] sm:$0xff]
    %v2252 = vld [vmem:[%s2248 + $0x18] sm:$0xff]
    %v2253 = vld [vmem:[%s2248 + $0x20] sm:$0xff]
    %v2254 = vld [vmem:[%s2248 + $0x28] sm:$0xff]
    %v2255 = vld [vmem:[%s2248 + $0x30] sm:$0xff]
    %v2256 = vld [vmem:[%s2248 + $0x38] sm:$0xff]
    %v2257 = vld [vmem:[%s2248 + $0x40] sm:$0xff]
    %v2258 = vld [vmem:[%s2248 + $0x48] sm:$0xff]
    %v2259 = vld [vmem:[%s2248 + $0x50] sm:$0xff]
    %v2260 = vld [vmem:[%s2248 + $0x58] sm:$0xff]
    %v2261 = vld [vmem:[%s2248 + $0x60] sm:$0xff]
    %v2262 = vld [vmem:[%s2248 + $0x68] sm:$0xff]
    %v2263 = vld [vmem:[%s2248 + $0x70] sm:$0xff]
    %v2264 = vld [vmem:[%s2248 + $0x78] sm:$0xff]
    %v2265 = vld [vmem:[%s2248 + $0x80] sm:$0xff]
    %v2266 = vld [vmem:[%s2248 + $0x88] sm:$0xff]
    %v2267 = vld [vmem:[%s2248 + $0x90] sm:$0xff]
    %v2268 = vld [vmem:[%s2248 + $0x98] sm:$0xff]
    %v2269 = vld [vmem:[%s2248 + $0xa0] sm:$0xff]
    %v2291 = vunpack.c.l.b16 %v2249
    %v2292 = vunpack.c.h.b16 %v2249
    %v2293 = vunpack.c.l.b16 %v2250
    %v2294 = vunpack.c.h.b16 %v2250
    %v2295 = vunpack.c.l.b16 %v2251
    %v2296 = vunpack.c.h.b16 %v2251
    %v2297 = vunpack.c.l.b16 %v2252
    %v2298 = vunpack.c.h.b16 %v2252
    %v2299 = vunpack.c.l.b16 %v2253
    %v2300 = vunpack.c.h.b16 %v2253
    %v2301 = vunpack.c.l.b16 %v2254
    %v2302 = vunpack.c.h.b16 %v2254
    %v2303 = vunpack.c.l.b16 %v2255
    %v2304 = vunpack.c.h.b16 %v2255
    %v2305 = vunpack.c.l.b16 %v2256
    %v2306 = vunpack.c.h.b16 %v2256
    %v2307 = vunpack.c.l.b16 %v2257
    %v2308 = vunpack.c.h.b16 %v2257
    %v2309 = vunpack.c.l.b16 %v2258
    %v2310 = vunpack.c.h.b16 %v2258
    %v2311 = vunpack.c.l.b16 %v2259
    %v2312 = vunpack.c.h.b16 %v2259
    %v2313 = vunpack.c.l.b16 %v2260
    %v2314 = vunpack.c.h.b16 %v2260
    %v2315 = vunpack.c.l.b16 %v2261
    %v2316 = vunpack.c.h.b16 %v2261
    %v2317 = vunpack.c.l.b16 %v2262
    %v2318 = vunpack.c.h.b16 %v2262
    %v2319 = vunpack.c.l.b16 %v2263
    %v2320 = vunpack.c.h.b16 %v2263
    %v2321 = vunpack.c.l.b16 %v2264
    %v2322 = vunpack.c.h.b16 %v2264
    %v2323 = vunpack.c.l.b16 %v2265
    %v2324 = vunpack.c.h.b16 %v2265
    %v2325 = vunpack.c.l.b16 %v2266
    %v2326 = vunpack.c.h.b16 %v2266
    %v2327 = vunpack.c.l.b16 %v2267
    %v2328 = vunpack.c.h.b16 %v2267
    %v2329 = vunpack.c.l.b16 %v2268
    %v2330 = vunpack.c.h.b16 %v2268
    %v2331 = vunpack.c.l.b16 %v2269
    %v2332 = vunpack.c.h.b16 %v2269
    %v2333 = vpack.c.b16 %v2293, %v2291
    %v2334 = vpack.c.b16 %v2294, %v2292
    %v2335 = vpack.c.b16 %v2297, %v2295
    %v2336 = vpack.c.b16 %v2298, %v2296
    %v2337 = vpack.c.b16 %v2301, %v2299
    %v2338 = vpack.c.b16 %v2302, %v2300
    %v2339 = vpack.c.b16 %v2305, %v2303
    %v2340 = vpack.c.b16 %v2306, %v2304
    %v2341 = vpack.c.b16 %v2309, %v2307
    %v2342 = vpack.c.b16 %v2310, %v2308
    %v2343 = vpack.c.b16 %v2313, %v2311
    %v2344 = vpack.c.b16 %v2314, %v2312
    %v2345 = vpack.c.b16 %v2317, %v2315
    %v2346 = vpack.c.b16 %v2318, %v2316
    %v2347 = vpack.c.b16 %v2321, %v2319
    %v2348 = vpack.c.b16 %v2322, %v2320
    %v2349 = vpack.c.b16 %v2325, %v2323
    %v2350 = vpack.c.b16 %v2326, %v2324
    %v2351 = vpack.c.b16 %v2329, %v2327
    %v2352 = vpack.c.b16 %v2330, %v2328
    %v2353 = vpack.c.b16 %v2331, %v2331
    %v2354 = vpack.c.b16 %v2332, %v2332
    %v2376 = vsel %vm1402, %v2241, 0
    %v2379 = vsel %vm1402, %v2243, 0
    %v2382 = vsel %vm1402, %v2245, 0
    %v2385 = vsel %vm1402, %v2247, 0
    %v2388 = vsel %vm1415, %v2353, 0
    %v2391 = vsel %vm1415, %v2354, 0
    %2393 = vmatprep.subr.bf16.mxu0 %v2348
    %2394 = vmatpush1.bf16.msra.mxu0 %v2347
    %2395 = vmatprep.subr.bf16.mxu0 %v2346
    %2396 = vmatpush1.bf16.msra.mxu0 %v2345
    %2397 = vmatprep.subr.bf16.mxu0 %v2344
    %2398 = vmatpush1.bf16.msra.mxu0 %v2343
    %2399 = vmatprep.subr.bf16.mxu0 %v2342
    %2400 = vmatpush1.bf16.msra.mxu0 %v2341
    %2401 = vmatprep.subr.bf16.mxu0 %v2340
    %2402 = vmatpush1.bf16.msra.mxu0 %v2339
    %2403 = vmatprep.subr.bf16.mxu0 %v2338
    %2404 = vmatpush1.bf16.msra.mxu0 %v2337
    %2405 = vmatprep.subr.bf16.mxu0 %v2336
    %2406 = vmatpush1.bf16.msra.mxu0 %v2335
    %2407 = vmatprep.subr.bf16.mxu0 %v2334
    %2408 = vmatpush1.bf16.msra.mxu0 %v2333
    %2409 = vmatprep.subr.bf16.mxu0 0
    %2410 = vmatpush2.bf16.msra.mxu0 0
    %2411 = vmatprep.subr.bf16.mxu0 0
    %2412 = vmatpush2.bf16.msra.mxu0 0
    %2413 = vmatprep.subr.bf16.mxu0 0
    %2414 = vmatpush2.bf16.msra.mxu0 0
    %2415 = vmatprep.subr.bf16.mxu0 0
    %2416 = vmatpush2.bf16.msra.mxu0 0
    %2417 = vmatprep.subr.bf16.mxu0 0
    %2418 = vmatpush2.bf16.msra.mxu0 0
    %2419 = vmatprep.subr.bf16.mxu0 %v2391
    %2420 = vmatpush2.bf16.msra.mxu0 %v2388
    %2421 = vmatprep.subr.bf16.mxu0 %v2352
    %2422 = vmatpush2.bf16.msra.mxu0 %v2351
    %2423 = vmatprep.subr.bf16.mxu0 %v2350
    %2424 = vmatpush2.bf16.msra.mxu0 %v2349
    %2425 = vmatprep.mubr.bf16.mxu0 %v2376
    %2426 = vmatmul.mubr.bf16.gmra.mxu0 %v2240
    %v2427 = vpop.f32.mrf.mxu0
    %v2428 = vadd.f32 0.0, %v2427
    %v2429 = vpop.f32.mrf.mxu0
    %v2430 = vadd.f32 0.0, %v2429
    %v2431 = vpop.f32.mrf.mxu0
    %v2432 = vadd.f32 0.0, %v2431
    %v2433 = vpop.f32.mrf.mxu0
    %v2434 = vadd.f32 0.0, %v2433
    %2435 = vmatprep.mubr.bf16.mxu0 %v2379
    %2436 = vmatmul.mubr.bf16.gmra.mxu0 %v2242
    %v2437 = vpop.f32.mrf.mxu0
    %v2438 = vadd.f32 0.0, %v2437
    %v2439 = vpop.f32.mrf.mxu0
    %v2440 = vadd.f32 0.0, %v2439
    %v2441 = vpop.f32.mrf.mxu0
    %v2442 = vadd.f32 0.0, %v2441
    %v2443 = vpop.f32.mrf.mxu0
    %v2444 = vadd.f32 0.0, %v2443
    %2445 = vmatprep.mubr.bf16.mxu0 %v2382
    %2446 = vmatmul.mubr.bf16.gmra.mxu0 %v2244
    %v2447 = vpop.f32.mrf.mxu0
    %v2448 = vadd.f32 0.0, %v2447
    %v2449 = vpop.f32.mrf.mxu0
    %v2450 = vadd.f32 0.0, %v2449
    %v2451 = vpop.f32.mrf.mxu0
    %v2452 = vadd.f32 0.0, %v2451
    %v2453 = vpop.f32.mrf.mxu0
    %v2454 = vadd.f32 0.0, %v2453
    %2455 = vmatprep.mubr.bf16.mxu0 %v2385
    %2456 = vmatmul.mubr.bf16.gmra.mxu0 %v2246
    %v2457 = vpop.f32.mrf.mxu0
    %v2458 = vadd.f32 0.0, %v2457
    %v2459 = vpop.f32.mrf.mxu0
    %v2460 = vadd.f32 0.0, %v2459
    %v2461 = vpop.f32.mrf.mxu0
    %v2462 = vadd.f32 0.0, %v2461
    %v2463 = vpop.f32.mrf.mxu0
    %v2464 = vadd.f32 0.0, %v2463
    %2465 = vdwg.mxu0
    %v2466 = vadd.f32 %v2224, %v2428
    %v2467 = vadd.f32 %v2225, %v2430
    %v2468 = vadd.f32 %v2226, %v2432
    %v2469 = vadd.f32 %v2227, %v2434
    %v2470 = vadd.f32 %v2228, %v2438
    %v2471 = vadd.f32 %v2229, %v2440
    %v2472 = vadd.f32 %v2230, %v2442
    %v2473 = vadd.f32 %v2231, %v2444
    %v2474 = vadd.f32 %v2232, %v2448
    %v2475 = vadd.f32 %v2233, %v2450
    %v2476 = vadd.f32 %v2234, %v2452
    %v2477 = vadd.f32 %v2235, %v2454
    %v2478 = vadd.f32 %v2236, %v2458
    %v2479 = vadd.f32 %v2237, %v2460
    %v2480 = vadd.f32 %v2238, %v2462
    %v2481 = vadd.f32 %v2239, %v2464
    %v2482 = vld [vmem:[%s4] sm:$0x3]
    %v2484 = vlaneseq
    %v2485 = vshrl.u32 %v2484, 7
    %v2486 = vsub.s32 0, %v2485
    %v2487 = vrot.slane %v2482, %v2486
    %v2488 = vlaneseq
    %v2489 = vshrl.u32 %v2488, 7
    %v2490 = vsub.s32 1, %v2489
    %v2491 = vrot.slane %v2482, %v2490
    %v2494 = vadd.f32 %v2466, %v2487
    %v2495 = vadd.f32 %v2467, %v2491
    %v2496 = vadd.f32 %v2468, %v2487
    %v2497 = vadd.f32 %v2469, %v2491
    %v2498 = vadd.f32 %v2470, %v2487
    %v2499 = vadd.f32 %v2471, %v2491
    %v2500 = vadd.f32 %v2472, %v2487
    %v2501 = vadd.f32 %v2473, %v2491
    %v2502 = vadd.f32 %v2474, %v2487
    %v2503 = vadd.f32 %v2475, %v2491
    %v2504 = vadd.f32 %v2476, %v2487
    %v2505 = vadd.f32 %v2477, %v2491
    %v2506 = vadd.f32 %v2478, %v2487
    %v2507 = vadd.f32 %v2479, %v2491
    %v2508 = vadd.f32 %v2480, %v2487
    %v2509 = vadd.f32 %v2481, %v2491
    %v2510 = vmax.f32 %v2494, 0.0
    %v2511 = vmax.f32 %v2495, 0.0
    %v2512 = vmax.f32 %v2496, 0.0
    %v2513 = vmax.f32 %v2497, 0.0
    %v2514 = vmax.f32 %v2498, 0.0
    %v2515 = vmax.f32 %v2499, 0.0
    %v2516 = vmax.f32 %v2500, 0.0
    %v2517 = vmax.f32 %v2501, 0.0
    %v2518 = vmax.f32 %v2502, 0.0
    %v2519 = vmax.f32 %v2503, 0.0
    %v2520 = vmax.f32 %v2504, 0.0
    %v2521 = vmax.f32 %v2505, 0.0
    %v2522 = vmax.f32 %v2506, 0.0
    %v2523 = vmax.f32 %v2507, 0.0
    %v2524 = vmax.f32 %v2508, 0.0
    %v2525 = vmax.f32 %v2509, 0.0
    %vm2526 = vcmask 1047808
    %2527 = vrot.lane.b32.xlu0 %v2510, 32
    %v2528 = vpop.permute.xlu0 %2527
    %2529 = vrot.lane.b32.xlu0 %v2512, 32
    %v2530 = vpop.permute.xlu0 %2529
    %2531 = vrot.lane.b32.xlu0 %v2514, 32
    %v2532 = vpop.permute.xlu0 %2531
    %2533 = vrot.lane.b32.xlu0 %v2516, 32
    %v2534 = vpop.permute.xlu0 %2533
    %2535 = vrot.lane.b32.xlu0 %v2518, 32
    %v2536 = vpop.permute.xlu0 %2535
    %2537 = vrot.lane.b32.xlu0 %v2520, 32
    %v2538 = vpop.permute.xlu0 %2537
    %2539 = vrot.lane.b32.xlu0 %v2522, 32
    %v2540 = vpop.permute.xlu0 %2539
    %2541 = vrot.lane.b32.xlu0 %v2524, 32
    %v2542 = vpop.permute.xlu0 %2541
    %v2543 = vsel %vm2526, %v2528, %v2511
    %v2544 = vsel %vm2526, %v2530, %v2513
    %v2545 = vsel %vm2526, %v2532, %v2515
    %v2546 = vsel %vm2526, %v2534, %v2517
    %v2547 = vsel %vm2526, %v2536, %v2519
    %v2548 = vsel %vm2526, %v2538, %v2521
    %v2549 = vsel %vm2526, %v2540, %v2523
    %v2550 = vsel %vm2526, %v2542, %v2525
    %2567 = vrot.lane.b32.xlu0 %v2510, 112
    %v2568 = vpop.permute.xlu0 %2567
    %2569 = vrot.lane.b32.xlu0 %v2543, 112
    %v2570 = vpop.permute.xlu0 %2569
    %2571 = vrot.lane.b32.xlu0 %v2512, 112
    %v2572 = vpop.permute.xlu0 %2571
    %2573 = vrot.lane.b32.xlu0 %v2544, 112
    %v2574 = vpop.permute.xlu0 %2573
    %2575 = vrot.lane.b32.xlu0 %v2514, 112
    %v2576 = vpop.permute.xlu0 %2575
    %2577 = vrot.lane.b32.xlu0 %v2545, 112
    %v2578 = vpop.permute.xlu0 %2577
    %2579 = vrot.lane.b32.xlu0 %v2516, 112
    %v2580 = vpop.permute.xlu0 %2579
    %2581 = vrot.lane.b32.xlu0 %v2546, 112
    %v2582 = vpop.permute.xlu0 %2581
    %2583 = vrot.lane.b32.xlu0 %v2518, 112
    %v2584 = vpop.permute.xlu0 %2583
    %2585 = vrot.lane.b32.xlu0 %v2547, 112
    %v2586 = vpop.permute.xlu0 %2585
    %2587 = vrot.lane.b32.xlu0 %v2520, 112
    %v2588 = vpop.permute.xlu0 %2587
    %2589 = vrot.lane.b32.xlu0 %v2548, 112
    %v2590 = vpop.permute.xlu0 %2589
    %2591 = vrot.lane.b32.xlu0 %v2522, 112
    %v2592 = vpop.permute.xlu0 %2591
    %2593 = vrot.lane.b32.xlu0 %v2549, 112
    %v2594 = vpop.permute.xlu0 %2593
    %2595 = vrot.lane.b32.xlu0 %v2524, 112
    %v2596 = vpop.permute.xlu0 %2595
    %2597 = vrot.lane.b32.xlu0 %v2550, 112
    %v2598 = vpop.permute.xlu0 %2597
    %vm2599 = vcmask 916480
    %v2600 = vsel %vm2599, %v2568, %v2570
    %v2601 = vsel %vm2599, %v2572, %v2574
    %v2602 = vsel %vm2599, %v2576, %v2578
    %v2603 = vsel %vm2599, %v2580, %v2582
    %v2604 = vsel %vm2599, %v2584, %v2586
    %v2605 = vsel %vm2599, %v2588, %v2590
    %v2606 = vsel %vm2599, %v2592, %v2594
    %v2607 = vsel %vm2599, %v2596, %v2598
    %v2624 = vmax.f32 %v2510, %v2600
    %v2625 = vmax.f32 %v2511, %v2570
    %v2626 = vmax.f32 %v2512, %v2601
    %v2627 = vmax.f32 %v2513, %v2574
    %v2628 = vmax.f32 %v2514, %v2602
    %v2629 = vmax.f32 %v2515, %v2578
    %v2630 = vmax.f32 %v2516, %v2603
    %v2631 = vmax.f32 %v2517, %v2582
    %v2632 = vmax.f32 %v2518, %v2604
    %v2633 = vmax.f32 %v2519, %v2586
    %v2634 = vmax.f32 %v2520, %v2605
    %v2635 = vmax.f32 %v2521, %v2590
    %v2636 = vmax.f32 %v2522, %v2606
    %v2637 = vmax.f32 %v2523, %v2594
    %v2638 = vmax.f32 %v2524, %v2607
    %v2639 = vmax.f32 %v2525, %v2598
    %v2640 = vrot.slane %v2624, 2
    %v2641 = vrot.slane %v2625, 2
    %v2642 = vrot.slane %v2626, 2
    %v2643 = vrot.slane %v2627, 2
    %v2644 = vrot.slane %v2628, 2
    %v2645 = vrot.slane %v2629, 2
    %v2646 = vrot.slane %v2630, 2
    %v2647 = vrot.slane %v2631, 2
    %v2648 = vrot.slane %v2632, 2
    %v2649 = vrot.slane %v2633, 2
    %v2650 = vrot.slane %v2634, 2
    %v2651 = vrot.slane %v2635, 2
    %v2652 = vrot.slane %v2636, 2
    %v2653 = vrot.slane %v2637, 2
    %v2654 = vrot.slane %v2638, 2
    %v2655 = vrot.slane %v2639, 2
    %v2656 = vsel %vm423, %v2652, %v2654
    %v2657 = vsel %vm423, %v2653, %v2655
    %v2658 = vsel %vm423, %v2650, %v2652
    %v2659 = vsel %vm423, %v2651, %v2653
    %v2660 = vsel %vm423, %v2648, %v2650
    %v2661 = vsel %vm423, %v2649, %v2651
    %v2662 = vsel %vm423, %v2646, %v2648
    %v2663 = vsel %vm423, %v2647, %v2649
    %v2664 = vsel %vm423, %v2644, %v2646
    %v2665 = vsel %vm423, %v2645, %v2647
    %v2666 = vsel %vm423, %v2642, %v2644
    %v2667 = vsel %vm423, %v2643, %v2645
    %v2668 = vsel %vm423, %v2640, %v2642
    %v2669 = vsel %vm423, %v2641, %v2643
    %v2670 = vsel %vm423, %v2654, %v2640
    %v2671 = vsel %vm423, %v2655, %v2641
    %v2672 = vmax.f32 %v2624, %v2668
    %v2673 = vmax.f32 %v2625, %v2669
    %v2674 = vmax.f32 %v2626, %v2666
    %v2675 = vmax.f32 %v2627, %v2667
    %v2676 = vmax.f32 %v2628, %v2664
    %v2677 = vmax.f32 %v2629, %v2665
    %v2678 = vmax.f32 %v2630, %v2662
    %v2679 = vmax.f32 %v2631, %v2663
    %v2680 = vmax.f32 %v2632, %v2660
    %v2681 = vmax.f32 %v2633, %v2661
    %v2682 = vmax.f32 %v2634, %v2658
    %v2683 = vmax.f32 %v2635, %v2659
    %v2684 = vmax.f32 %v2636, %v2656
    %v2685 = vmax.f32 %v2637, %v2657
    %v2686 = vmax.f32 %v2638, %v2670
    %v2687 = vmax.f32 %v2639, %v2671
    %v2688 = vpack.c.bf16 %v2674, %v2672
    %v2689 = vpack.c.bf16 %v2675, %v2673
    %v2690 = vpack.c.bf16 %v2678, %v2676
    %v2691 = vpack.c.bf16 %v2679, %v2677
    %v2692 = vpack.c.bf16 %v2682, %v2680
    %v2693 = vpack.c.bf16 %v2683, %v2681
    %v2694 = vpack.c.bf16 %v2686, %v2684
    %v2695 = vpack.c.bf16 %v2687, %v2685
    %v2696 = vld [vmem:[%s5] sm:$0xf]
    %v2697 = vld [vmem:[%s5 + $0x4] sm:$0xf]
    %v2698 = vld [vmem:[%s5 + $0x8] sm:$0xf]
    %v2699 = vld [vmem:[%s5 + $0xc] sm:$0xf]
    %v2700 = vld [vmem:[%s5 + $0x10] sm:$0xf]
    %v2701 = vld [vmem:[%s5 + $0x14] sm:$0xf]
    %v2702 = vld [vmem:[%s5 + $0x18] sm:$0xf]
    %v2703 = vld [vmem:[%s5 + $0x1c] sm:$0xf]
    %v2704 = vld [vmem:[%s5 + $0x20] sm:$0xf]
    %v2705 = vld [vmem:[%s5 + $0x24] sm:$0xf]
    %v2706 = vld [vmem:[%s5 + $0x28] sm:$0xf]
    %v2707 = vld [vmem:[%s5 + $0x2c] sm:$0xf]
    %v2708 = vld [vmem:[%s5 + $0x30] sm:$0xf]
    %v2709 = vld [vmem:[%s5 + $0x34] sm:$0xf]
    %v2710 = vld [vmem:[%s5 + $0x38] sm:$0xf]
    %v2711 = vld [vmem:[%s5 + $0x3c] sm:$0xf]
    %v2712 = vld [vmem:[%s5 + $0x40] sm:$0xf]
    %v2713 = vld [vmem:[%s5 + $0x44] sm:$0xf]
    %v2714 = vld [vmem:[%s5 + $0x48] sm:$0xf]
    %v2715 = vld [vmem:[%s5 + $0x4c] sm:$0xf]
    %v2716 = vrot.slane %v2672, 4
    %v2717 = vrot.slane %v2673, 4
    %v2718 = vrot.slane %v2674, 4
    %v2719 = vrot.slane %v2675, 4
    %v2720 = vrot.slane %v2676, 4
    %v2721 = vrot.slane %v2677, 4
    %v2722 = vrot.slane %v2678, 4
    %v2723 = vrot.slane %v2679, 4
    %v2724 = vrot.slane %v2680, 4
    %v2725 = vrot.slane %v2681, 4
    %v2726 = vrot.slane %v2682, 4
    %v2727 = vrot.slane %v2683, 4
    %v2728 = vrot.slane %v2684, 4
    %v2729 = vrot.slane %v2685, 4
    %v2730 = vrot.slane %v2686, 4
    %v2731 = vrot.slane %v2687, 4
    %v2732 = vsel %vm813, %v2728, %v2730
    %v2733 = vsel %vm813, %v2729, %v2731
    %v2734 = vsel %vm813, %v2726, %v2728
    %v2735 = vsel %vm813, %v2727, %v2729
    %v2736 = vsel %vm813, %v2724, %v2726
    %v2737 = vsel %vm813, %v2725, %v2727
    %v2738 = vsel %vm813, %v2722, %v2724
    %v2739 = vsel %vm813, %v2723, %v2725
    %v2740 = vsel %vm813, %v2720, %v2722
    %v2741 = vsel %vm813, %v2721, %v2723
    %v2742 = vsel %vm813, %v2718, %v2720
    %v2743 = vsel %vm813, %v2719, %v2721
    %v2744 = vsel %vm813, %v2716, %v2718
    %v2745 = vsel %vm813, %v2717, %v2719
    %v2746 = vsel %vm813, %v2730, %v2716
    %v2747 = vsel %vm813, %v2731, %v2717
    %v2748 = vpack.c.bf16 %v2742, %v2744
    %v2749 = vpack.c.bf16 %v2743, %v2745
    %v2750 = vpack.c.bf16 %v2738, %v2740
    %v2751 = vpack.c.bf16 %v2739, %v2741
    %v2752 = vpack.c.bf16 %v2734, %v2736
    %v2753 = vpack.c.bf16 %v2735, %v2737
    %v2754 = vpack.c.bf16 %v2746, %v2732
    %v2755 = vpack.c.bf16 %v2747, %v2733
    %s2756 = scalar_lea.vmem %s5, 80
    %v2757 = vld [vmem:[%s2756] sm:$0xf]
    %v2758 = vld [vmem:[%s2756 + $0x4] sm:$0xf]
    %v2759 = vld [vmem:[%s2756 + $0x8] sm:$0xf]
    %v2760 = vld [vmem:[%s2756 + $0xc] sm:$0xf]
    %v2761 = vld [vmem:[%s2756 + $0x10] sm:$0xf]
    %v2762 = vld [vmem:[%s2756 + $0x14] sm:$0xf]
    %v2763 = vld [vmem:[%s2756 + $0x18] sm:$0xf]
    %v2764 = vld [vmem:[%s2756 + $0x1c] sm:$0xf]
    %v2765 = vld [vmem:[%s2756 + $0x20] sm:$0xf]
    %v2766 = vld [vmem:[%s2756 + $0x24] sm:$0xf]
    %v2767 = vld [vmem:[%s2756 + $0x28] sm:$0xf]
    %v2768 = vld [vmem:[%s2756 + $0x2c] sm:$0xf]
    %v2769 = vld [vmem:[%s2756 + $0x30] sm:$0xf]
    %v2770 = vld [vmem:[%s2756 + $0x34] sm:$0xf]
    %v2771 = vld [vmem:[%s2756 + $0x38] sm:$0xf]
    %v2772 = vld [vmem:[%s2756 + $0x3c] sm:$0xf]
    %v2773 = vld [vmem:[%s2756 + $0x40] sm:$0xf]
    %v2774 = vld [vmem:[%s2756 + $0x44] sm:$0xf]
    %v2775 = vld [vmem:[%s2756 + $0x48] sm:$0xf]
    %v2776 = vld [vmem:[%s2756 + $0x4c] sm:$0xf]
    %v2797 = vunpack.c.l.b16 %v2757
    %v2798 = vunpack.c.l.b16 %v2758
    %v2799 = vunpack.c.l.b16 %v2759
    %v2800 = vunpack.c.l.b16 %v2760
    %v2801 = vunpack.c.l.b16 %v2761
    %v2802 = vunpack.c.l.b16 %v2762
    %v2803 = vunpack.c.l.b16 %v2763
    %v2804 = vunpack.c.l.b16 %v2764
    %v2805 = vunpack.c.l.b16 %v2765
    %v2806 = vunpack.c.l.b16 %v2766
    %v2807 = vunpack.c.l.b16 %v2767
    %v2808 = vunpack.c.l.b16 %v2768
    %v2809 = vunpack.c.l.b16 %v2769
    %v2810 = vunpack.c.l.b16 %v2770
    %v2811 = vunpack.c.l.b16 %v2771
    %v2812 = vunpack.c.l.b16 %v2772
    %v2813 = vunpack.c.l.b16 %v2773
    %v2814 = vunpack.c.l.b16 %v2774
    %v2815 = vunpack.c.l.b16 %v2775
    %v2816 = vunpack.c.l.b16 %v2776
    %v2817 = vpack.c.b16 %v2798, %v2797
    %v2818 = vpack.c.b16 %v2800, %v2799
    %v2819 = vpack.c.b16 %v2802, %v2801
    %v2820 = vpack.c.b16 %v2804, %v2803
    %v2821 = vpack.c.b16 %v2806, %v2805
    %v2822 = vpack.c.b16 %v2808, %v2807
    %v2823 = vpack.c.b16 %v2810, %v2809
    %v2824 = vpack.c.b16 %v2812, %v2811
    %v2825 = vpack.c.b16 %v2814, %v2813
    %v2826 = vpack.c.b16 %v2816, %v2815
    %vm2837 = vcmask 261120
    %v2839 = vsel %vm2837, %v2749, 0
    %v2842 = vsel %vm2837, %v2751, 0
    %v2845 = vsel %vm2837, %v2753, 0
    %v2848 = vsel %vm2837, %v2755, 0
    %2850 = vmatprep.subr.bf16.mxu0 0
    %2851 = vmatpush1.bf16.msra.mxu0 %v2824
    %2852 = vmatprep.subr.bf16.mxu0 0
    %2853 = vmatpush1.bf16.msra.mxu0 %v2823
    %2854 = vmatprep.subr.bf16.mxu0 0
    %2855 = vmatpush1.bf16.msra.mxu0 %v2822
    %2856 = vmatprep.subr.bf16.mxu0 0
    %2857 = vmatpush1.bf16.msra.mxu0 %v2821
    %2858 = vmatprep.subr.bf16.mxu0 0
    %2859 = vmatpush1.bf16.msra.mxu0 %v2820
    %2860 = vmatprep.subr.bf16.mxu0 0
    %2861 = vmatpush1.bf16.msra.mxu0 %v2819
    %2862 = vmatprep.subr.bf16.mxu0 0
    %2863 = vmatpush1.bf16.msra.mxu0 %v2818
    %2864 = vmatprep.subr.bf16.mxu0 0
    %2865 = vmatpush1.bf16.msra.mxu0 %v2817
    %2866 = vmatprep.subr.bf16.mxu0 0
    %2867 = vmatpush2.bf16.msra.mxu0 0
    %2868 = vmatprep.subr.bf16.mxu0 0
    %2869 = vmatpush2.bf16.msra.mxu0 0
    %2870 = vmatprep.subr.bf16.mxu0 0
    %2871 = vmatpush2.bf16.msra.mxu0 0
    %2872 = vmatprep.subr.bf16.mxu0 0
    %2873 = vmatpush2.bf16.msra.mxu0 0
    %2874 = vmatprep.subr.bf16.mxu0 0
    %2875 = vmatpush2.bf16.msra.mxu0 0
    %2876 = vmatprep.subr.bf16.mxu0 0
    %2877 = vmatpush2.bf16.msra.mxu0 0
    %2878 = vmatprep.subr.bf16.mxu0 0
    %2879 = vmatpush2.bf16.msra.mxu0 %v2826
    %2880 = vmatprep.subr.bf16.mxu0 0
    %2881 = vmatpush2.bf16.msra.mxu0 %v2825
    %2882 = vmatprep.mubr.bf16.mxu0 %v2839
    %2883 = vmatmul.mubr.bf16.gmra.mxu0 %v2748
    %v2884 = vpop.f32.mrf.mxu0
    %v2885 = vadd.f32 0.0, %v2884
    %v2886 = vpop.f32.mrf.mxu0
    %v2887 = vpop.f32.mrf.mxu0
    %v2888 = vadd.f32 0.0, %v2887
    %v2889 = vpop.f32.mrf.mxu0
    %2890 = vmatprep.mubr.bf16.mxu0 %v2842
    %2891 = vmatmul.mubr.bf16.gmra.mxu0 %v2750
    %v2892 = vpop.f32.mrf.mxu0
    %v2893 = vadd.f32 0.0, %v2892
    %v2894 = vpop.f32.mrf.mxu0
    %v2895 = vpop.f32.mrf.mxu0
    %v2896 = vadd.f32 0.0, %v2895
    %v2897 = vpop.f32.mrf.mxu0
    %2898 = vmatprep.mubr.bf16.mxu0 %v2845
    %2899 = vmatmul.mubr.bf16.gmra.mxu0 %v2752
    %v2900 = vpop.f32.mrf.mxu0
    %v2901 = vadd.f32 0.0, %v2900
    %v2902 = vpop.f32.mrf.mxu0
    %v2903 = vpop.f32.mrf.mxu0
    %v2904 = vadd.f32 0.0, %v2903
    %v2905 = vpop.f32.mrf.mxu0
    %2906 = vmatprep.mubr.bf16.mxu0 %v2848
    %2907 = vmatmul.mubr.bf16.gmra.mxu0 %v2754
    %v2908 = vpop.f32.mrf.mxu0
    %v2909 = vadd.f32 0.0, %v2908
    %v2910 = vpop.f32.mrf.mxu0
    %v2911 = vpop.f32.mrf.mxu0
    %v2912 = vadd.f32 0.0, %v2911
    %v2913 = vpop.f32.mrf.mxu0
    %2914 = vdwg.mxu0
    %v2935 = vunpack.c.l.b16 %v2696
    %v2936 = vunpack.c.l.b16 %v2697
    %v2937 = vunpack.c.l.b16 %v2698
    %v2938 = vunpack.c.l.b16 %v2699
    %v2939 = vunpack.c.l.b16 %v2700
    %v2940 = vunpack.c.l.b16 %v2701
    %v2941 = vunpack.c.l.b16 %v2702
    %v2942 = vunpack.c.l.b16 %v2703
    %v2943 = vunpack.c.l.b16 %v2704
    %v2944 = vunpack.c.l.b16 %v2705
    %v2945 = vunpack.c.l.b16 %v2706
    %v2946 = vunpack.c.l.b16 %v2707
    %v2947 = vunpack.c.l.b16 %v2708
    %v2948 = vunpack.c.l.b16 %v2709
    %v2949 = vunpack.c.l.b16 %v2710
    %v2950 = vunpack.c.l.b16 %v2711
    %v2951 = vunpack.c.l.b16 %v2712
    %v2952 = vunpack.c.l.b16 %v2713
    %v2953 = vunpack.c.l.b16 %v2714
    %v2954 = vunpack.c.l.b16 %v2715
    %v2955 = vpack.c.b16 %v2936, %v2935
    %v2956 = vpack.c.b16 %v2938, %v2937
    %v2957 = vpack.c.b16 %v2940, %v2939
    %v2958 = vpack.c.b16 %v2942, %v2941
    %v2959 = vpack.c.b16 %v2944, %v2943
    %v2960 = vpack.c.b16 %v2946, %v2945
    %v2961 = vpack.c.b16 %v2948, %v2947
    %v2962 = vpack.c.b16 %v2950, %v2949
    %v2963 = vpack.c.b16 %v2952, %v2951
    %v2964 = vpack.c.b16 %v2954, %v2953
    %v2976 = vsel %vm2837, %v2689, 0
    %v2979 = vsel %vm2837, %v2691, 0
    %v2982 = vsel %vm2837, %v2693, 0
    %v2985 = vsel %vm2837, %v2695, 0
    %2987 = vmatprep.subr.bf16.mxu0 0
    %2988 = vmatpush1.bf16.msra.mxu0 %v2962
    %2989 = vmatprep.subr.bf16.mxu0 0
    %2990 = vmatpush1.bf16.msra.mxu0 %v2961
    %2991 = vmatprep.subr.bf16.mxu0 0
    %2992 = vmatpush1.bf16.msra.mxu0 %v2960
    %2993 = vmatprep.subr.bf16.mxu0 0
    %2994 = vmatpush1.bf16.msra.mxu0 %v2959
    %2995 = vmatprep.subr.bf16.mxu0 0
    %2996 = vmatpush1.bf16.msra.mxu0 %v2958
    %2997 = vmatprep.subr.bf16.mxu0 0
    %2998 = vmatpush1.bf16.msra.mxu0 %v2957
    %2999 = vmatprep.subr.bf16.mxu0 0
    %3000 = vmatpush1.bf16.msra.mxu0 %v2956
    %3001 = vmatprep.subr.bf16.mxu0 0
    %3002 = vmatpush1.bf16.msra.mxu0 %v2955
    %3003 = vmatprep.subr.bf16.mxu0 0
    %3004 = vmatpush2.bf16.msra.mxu0 0
    %3005 = vmatprep.subr.bf16.mxu0 0
    %3006 = vmatpush2.bf16.msra.mxu0 0
    %3007 = vmatprep.subr.bf16.mxu0 0
    %3008 = vmatpush2.bf16.msra.mxu0 0
    %3009 = vmatprep.subr.bf16.mxu0 0
    %3010 = vmatpush2.bf16.msra.mxu0 0
    %3011 = vmatprep.subr.bf16.mxu0 0
    %3012 = vmatpush2.bf16.msra.mxu0 0
    %3013 = vmatprep.subr.bf16.mxu0 0
    %3014 = vmatpush2.bf16.msra.mxu0 0
    %3015 = vmatprep.subr.bf16.mxu0 0
    %3016 = vmatpush2.bf16.msra.mxu0 %v2964
    %3017 = vmatprep.subr.bf16.mxu0 0
    %3018 = vmatpush2.bf16.msra.mxu0 %v2963
    %3019 = vmatprep.mubr.bf16.mxu0 %v2976
    %3020 = vmatmul.mubr.bf16.gmra.mxu0 %v2688
    %v3021 = vpop.f32.mrf.mxu0
    %v3022 = vadd.f32 %v2885, %v3021
    %v3023 = vpop.f32.mrf.mxu0
    %v3024 = vpop.f32.mrf.mxu0
    %v3025 = vadd.f32 %v2888, %v3024
    %v3026 = vpop.f32.mrf.mxu0
    %3027 = vmatprep.mubr.bf16.mxu0 %v2979
    %3028 = vmatmul.mubr.bf16.gmra.mxu0 %v2690
    %v3029 = vpop.f32.mrf.mxu0
    %v3030 = vadd.f32 %v2893, %v3029
    %v3031 = vpop.f32.mrf.mxu0
    %v3032 = vpop.f32.mrf.mxu0
    %v3033 = vadd.f32 %v2896, %v3032
    %v3034 = vpop.f32.mrf.mxu0
    %3035 = vmatprep.mubr.bf16.mxu0 %v2982
    %3036 = vmatmul.mubr.bf16.gmra.mxu0 %v2692
    %v3037 = vpop.f32.mrf.mxu0
    %v3038 = vadd.f32 %v2901, %v3037
    %v3039 = vpop.f32.mrf.mxu0
    %v3040 = vpop.f32.mrf.mxu0
    %v3041 = vadd.f32 %v2904, %v3040
    %v3042 = vpop.f32.mrf.mxu0
    %3043 = vmatprep.mubr.bf16.mxu0 %v2985
    %3044 = vmatmul.mubr.bf16.gmra.mxu0 %v2694
    %v3045 = vpop.f32.mrf.mxu0
    %v3046 = vadd.f32 %v2909, %v3045
    %v3047 = vpop.f32.mrf.mxu0
    %v3048 = vpop.f32.mrf.mxu0
    %v3049 = vadd.f32 %v2912, %v3048
    %v3050 = vpop.f32.mrf.mxu0
    %3051 = vdwg.mxu0
    %v3052 = vpack.c.bf16 %v2676, %v2674
    %v3053 = vpack.c.bf16 %v2677, %v2675
    %v3054 = vpack.c.bf16 %v2680, %v2678
    %v3055 = vpack.c.bf16 %v2681, %v2679
    %v3056 = vpack.c.bf16 %v2684, %v2682
    %v3057 = vpack.c.bf16 %v2685, %v2683
    %v3058 = vpack.c.bf16 %v2672, %v2686
    %v3059 = vpack.c.bf16 %v2673, %v2687
    %s3060 = scalar_lea.vmem %s5, 160
    %v3061 = vld [vmem:[%s3060] sm:$0xf]
    %v3062 = vld [vmem:[%s3060 + $0x4] sm:$0xf]
    %v3063 = vld [vmem:[%s3060 + $0x8] sm:$0xf]
    %v3064 = vld [vmem:[%s3060 + $0xc] sm:$0xf]
    %v3065 = vld [vmem:[%s3060 + $0x10] sm:$0xf]
    %v3066 = vld [vmem:[%s3060 + $0x14] sm:$0xf]
    %v3067 = vld [vmem:[%s3060 + $0x18] sm:$0xf]
    %v3068 = vld [vmem:[%s3060 + $0x1c] sm:$0xf]
    %v3069 = vld [vmem:[%s3060 + $0x20] sm:$0xf]
    %v3070 = vld [vmem:[%s3060 + $0x24] sm:$0xf]
    %v3071 = vld [vmem:[%s3060 + $0x28] sm:$0xf]
    %v3072 = vld [vmem:[%s3060 + $0x2c] sm:$0xf]
    %v3073 = vld [vmem:[%s3060 + $0x30] sm:$0xf]
    %v3074 = vld [vmem:[%s3060 + $0x34] sm:$0xf]
    %v3075 = vld [vmem:[%s3060 + $0x38] sm:$0xf]
    %v3076 = vld [vmem:[%s3060 + $0x3c] sm:$0xf]
    %v3077 = vld [vmem:[%s3060 + $0x40] sm:$0xf]
    %v3078 = vld [vmem:[%s3060 + $0x44] sm:$0xf]
    %v3079 = vld [vmem:[%s3060 + $0x48] sm:$0xf]
    %v3080 = vld [vmem:[%s3060 + $0x4c] sm:$0xf]
    %v3101 = vunpack.c.l.b16 %v3061
    %v3102 = vunpack.c.l.b16 %v3062
    %v3103 = vunpack.c.l.b16 %v3063
    %v3104 = vunpack.c.l.b16 %v3064
    %v3105 = vunpack.c.l.b16 %v3065
    %v3106 = vunpack.c.l.b16 %v3066
    %v3107 = vunpack.c.l.b16 %v3067
    %v3108 = vunpack.c.l.b16 %v3068
    %v3109 = vunpack.c.l.b16 %v3069
    %v3110 = vunpack.c.l.b16 %v3070
    %v3111 = vunpack.c.l.b16 %v3071
    %v3112 = vunpack.c.l.b16 %v3072
    %v3113 = vunpack.c.l.b16 %v3073
    %v3114 = vunpack.c.l.b16 %v3074
    %v3115 = vunpack.c.l.b16 %v3075
    %v3116 = vunpack.c.l.b16 %v3076
    %v3117 = vunpack.c.l.b16 %v3077
    %v3118 = vunpack.c.l.b16 %v3078
    %v3119 = vunpack.c.l.b16 %v3079
    %v3120 = vunpack.c.l.b16 %v3080
    %v3121 = vpack.c.b16 %v3102, %v3101
    %v3122 = vpack.c.b16 %v3104, %v3103
    %v3123 = vpack.c.b16 %v3106, %v3105
    %v3124 = vpack.c.b16 %v3108, %v3107
    %v3125 = vpack.c.b16 %v3110, %v3109
    %v3126 = vpack.c.b16 %v3112, %v3111
    %v3127 = vpack.c.b16 %v3114, %v3113
    %v3128 = vpack.c.b16 %v3116, %v3115
    %v3129 = vpack.c.b16 %v3118, %v3117
    %v3130 = vpack.c.b16 %v3120, %v3119
    %v3142 = vsel %vm2837, %v3053, 0
    %v3145 = vsel %vm2837, %v3055, 0
    %v3148 = vsel %vm2837, %v3057, 0
    %v3151 = vsel %vm2837, %v3059, 0
    %3153 = vmatprep.subr.bf16.mxu0 0
    %3154 = vmatpush1.bf16.msra.mxu0 %v3128
    %3155 = vmatprep.subr.bf16.mxu0 0
    %3156 = vmatpush1.bf16.msra.mxu0 %v3127
    %3157 = vmatprep.subr.bf16.mxu0 0
    %3158 = vmatpush1.bf16.msra.mxu0 %v3126
    %3159 = vmatprep.subr.bf16.mxu0 0
    %3160 = vmatpush1.bf16.msra.mxu0 %v3125
    %3161 = vmatprep.subr.bf16.mxu0 0
    %3162 = vmatpush1.bf16.msra.mxu0 %v3124
    %3163 = vmatprep.subr.bf16.mxu0 0
    %3164 = vmatpush1.bf16.msra.mxu0 %v3123
    %3165 = vmatprep.subr.bf16.mxu0 0
    %3166 = vmatpush1.bf16.msra.mxu0 %v3122
    %3167 = vmatprep.subr.bf16.mxu0 0
    %3168 = vmatpush1.bf16.msra.mxu0 %v3121
    %3169 = vmatprep.subr.bf16.mxu0 0
    %3170 = vmatpush2.bf16.msra.mxu0 0
    %3171 = vmatprep.subr.bf16.mxu0 0
    %3172 = vmatpush2.bf16.msra.mxu0 0
    %3173 = vmatprep.subr.bf16.mxu0 0
    %3174 = vmatpush2.bf16.msra.mxu0 0
    %3175 = vmatprep.subr.bf16.mxu0 0
    %3176 = vmatpush2.bf16.msra.mxu0 0
    %3177 = vmatprep.subr.bf16.mxu0 0
    %3178 = vmatpush2.bf16.msra.mxu0 0
    %3179 = vmatprep.subr.bf16.mxu0 0
    %3180 = vmatpush2.bf16.msra.mxu0 0
    %3181 = vmatprep.subr.bf16.mxu0 0
    %3182 = vmatpush2.bf16.msra.mxu0 %v3130
    %3183 = vmatprep.subr.bf16.mxu0 0
    %3184 = vmatpush2.bf16.msra.mxu0 %v3129
    %3185 = vmatprep.mubr.bf16.mxu0 %v3142
    %3186 = vmatmul.mubr.bf16.gmra.mxu0 %v3052
    %v3187 = vpop.f32.mrf.mxu0
    %v3188 = vadd.f32 0.0, %v3187
    %v3189 = vpop.f32.mrf.mxu0
    %v3190 = vpop.f32.mrf.mxu0
    %v3191 = vadd.f32 0.0, %v3190
    %v3192 = vpop.f32.mrf.mxu0
    %3193 = vmatprep.mubr.bf16.mxu0 %v3145
    %3194 = vmatmul.mubr.bf16.gmra.mxu0 %v3054
    %v3195 = vpop.f32.mrf.mxu0
    %v3196 = vadd.f32 0.0, %v3195
    %v3197 = vpop.f32.mrf.mxu0
    %v3198 = vpop.f32.mrf.mxu0
    %v3199 = vadd.f32 0.0, %v3198
    %v3200 = vpop.f32.mrf.mxu0
    %3201 = vmatprep.mubr.bf16.mxu0 %v3148
    %3202 = vmatmul.mubr.bf16.gmra.mxu0 %v3056
    %v3203 = vpop.f32.mrf.mxu0
    %v3204 = vadd.f32 0.0, %v3203
    %v3205 = vpop.f32.mrf.mxu0
    %v3206 = vpop.f32.mrf.mxu0
    %v3207 = vadd.f32 0.0, %v3206
    %v3208 = vpop.f32.mrf.mxu0
    %3209 = vmatprep.mubr.bf16.mxu0 %v3151
    %3210 = vmatmul.mubr.bf16.gmra.mxu0 %v3058
    %v3211 = vpop.f32.mrf.mxu0
    %v3212 = vadd.f32 0.0, %v3211
    %v3213 = vpop.f32.mrf.mxu0
    %v3214 = vpop.f32.mrf.mxu0
    %v3215 = vadd.f32 0.0, %v3214
    %v3216 = vpop.f32.mrf.mxu0
    %3217 = vdwg.mxu0
    %v3218 = vadd.f32 %v3022, %v3188
    %v3219 = vadd.f32 %v3025, %v3191
    %v3220 = vadd.f32 %v3030, %v3196
    %v3221 = vadd.f32 %v3033, %v3199
    %v3222 = vadd.f32 %v3038, %v3204
    %v3223 = vadd.f32 %v3041, %v3207
    %v3224 = vadd.f32 %v3046, %v3212
    %v3225 = vadd.f32 %v3049, %v3215
    %v3226 = vpack.c.bf16 %v2740, %v2742
    %v3227 = vpack.c.bf16 %v2741, %v2743
    %v3228 = vpack.c.bf16 %v2736, %v2738
    %v3229 = vpack.c.bf16 %v2737, %v2739
    %v3230 = vpack.c.bf16 %v2732, %v2734
    %v3231 = vpack.c.bf16 %v2733, %v2735
    %v3232 = vpack.c.bf16 %v2744, %v2746
    %v3233 = vpack.c.bf16 %v2745, %v2747
    %s3234 = scalar_lea.vmem %s5, 240
    %v3235 = vld [vmem:[%s3234] sm:$0xf]
    %v3236 = vld [vmem:[%s3234 + $0x4] sm:$0xf]
    %v3237 = vld [vmem:[%s3234 + $0x8] sm:$0xf]
    %v3238 = vld [vmem:[%s3234 + $0xc] sm:$0xf]
    %v3239 = vld [vmem:[%s3234 + $0x10] sm:$0xf]
    %v3240 = vld [vmem:[%s3234 + $0x14] sm:$0xf]
    %v3241 = vld [vmem:[%s3234 + $0x18] sm:$0xf]
    %v3242 = vld [vmem:[%s3234 + $0x1c] sm:$0xf]
    %v3243 = vld [vmem:[%s3234 + $0x20] sm:$0xf]
    %v3244 = vld [vmem:[%s3234 + $0x24] sm:$0xf]
    %v3245 = vld [vmem:[%s3234 + $0x28] sm:$0xf]
    %v3246 = vld [vmem:[%s3234 + $0x2c] sm:$0xf]
    %v3247 = vld [vmem:[%s3234 + $0x30] sm:$0xf]
    %v3248 = vld [vmem:[%s3234 + $0x34] sm:$0xf]
    %v3249 = vld [vmem:[%s3234 + $0x38] sm:$0xf]
    %v3250 = vld [vmem:[%s3234 + $0x3c] sm:$0xf]
    %v3251 = vld [vmem:[%s3234 + $0x40] sm:$0xf]
    %v3252 = vld [vmem:[%s3234 + $0x44] sm:$0xf]
    %v3253 = vld [vmem:[%s3234 + $0x48] sm:$0xf]
    %v3254 = vld [vmem:[%s3234 + $0x4c] sm:$0xf]
    %v3275 = vunpack.c.l.b16 %v3235
    %v3276 = vunpack.c.l.b16 %v3236
    %v3277 = vunpack.c.l.b16 %v3237
    %v3278 = vunpack.c.l.b16 %v3238
    %v3279 = vunpack.c.l.b16 %v3239
    %v3280 = vunpack.c.l.b16 %v3240
    %v3281 = vunpack.c.l.b16 %v3241
    %v3282 = vunpack.c.l.b16 %v3242
    %v3283 = vunpack.c.l.b16 %v3243
    %v3284 = vunpack.c.l.b16 %v3244
    %v3285 = vunpack.c.l.b16 %v3245
    %v3286 = vunpack.c.l.b16 %v3246
    %v3287 = vunpack.c.l.b16 %v3247
    %v3288 = vunpack.c.l.b16 %v3248
    %v3289 = vunpack.c.l.b16 %v3249
    %v3290 = vunpack.c.l.b16 %v3250
    %v3291 = vunpack.c.l.b16 %v3251
    %v3292 = vunpack.c.l.b16 %v3252
    %v3293 = vunpack.c.l.b16 %v3253
    %v3294 = vunpack.c.l.b16 %v3254
    %v3295 = vpack.c.b16 %v3276, %v3275
    %v3296 = vpack.c.b16 %v3278, %v3277
    %v3297 = vpack.c.b16 %v3280, %v3279
    %v3298 = vpack.c.b16 %v3282, %v3281
    %v3299 = vpack.c.b16 %v3284, %v3283
    %v3300 = vpack.c.b16 %v3286, %v3285
    %v3301 = vpack.c.b16 %v3288, %v3287
    %v3302 = vpack.c.b16 %v3290, %v3289
    %v3303 = vpack.c.b16 %v3292, %v3291
    %v3304 = vpack.c.b16 %v3294, %v3293
    %v3316 = vsel %vm2837, %v3227, 0
    %v3319 = vsel %vm2837, %v3229, 0
    %v3322 = vsel %vm2837, %v3231, 0
    %v3325 = vsel %vm2837, %v3233, 0
    %3327 = vmatprep.subr.bf16.mxu0 0
    %3328 = vmatpush1.bf16.msra.mxu0 %v3302
    %3329 = vmatprep.subr.bf16.mxu0 0
    %3330 = vmatpush1.bf16.msra.mxu0 %v3301
    %3331 = vmatprep.subr.bf16.mxu0 0
    %3332 = vmatpush1.bf16.msra.mxu0 %v3300
    %3333 = vmatprep.subr.bf16.mxu0 0
    %3334 = vmatpush1.bf16.msra.mxu0 %v3299
    %3335 = vmatprep.subr.bf16.mxu0 0
    %3336 = vmatpush1.bf16.msra.mxu0 %v3298
    %3337 = vmatprep.subr.bf16.mxu0 0
    %3338 = vmatpush1.bf16.msra.mxu0 %v3297
    %3339 = vmatprep.subr.bf16.mxu0 0
    %3340 = vmatpush1.bf16.msra.mxu0 %v3296
    %3341 = vmatprep.subr.bf16.mxu0 0
    %3342 = vmatpush1.bf16.msra.mxu0 %v3295
    %3343 = vmatprep.subr.bf16.mxu0 0
    %3344 = vmatpush2.bf16.msra.mxu0 0
    %3345 = vmatprep.subr.bf16.mxu0 0
    %3346 = vmatpush2.bf16.msra.mxu0 0
    %3347 = vmatprep.subr.bf16.mxu0 0
    %3348 = vmatpush2.bf16.msra.mxu0 0
    %3349 = vmatprep.subr.bf16.mxu0 0
    %3350 = vmatpush2.bf16.msra.mxu0 0
    %3351 = vmatprep.subr.bf16.mxu0 0
    %3352 = vmatpush2.bf16.msra.mxu0 0
    %3353 = vmatprep.subr.bf16.mxu0 0
    %3354 = vmatpush2.bf16.msra.mxu0 0
    %3355 = vmatprep.subr.bf16.mxu0 0
    %3356 = vmatpush2.bf16.msra.mxu0 %v3304
    %3357 = vmatprep.subr.bf16.mxu0 0
    %3358 = vmatpush2.bf16.msra.mxu0 %v3303
    %3359 = vmatprep.mubr.bf16.mxu0 %v3316
    %3360 = vmatmul.mubr.bf16.gmra.mxu0 %v3226
    %v3361 = vpop.f32.mrf.mxu0
    %v3362 = vadd.f32 0.0, %v3361
    %v3363 = vpop.f32.mrf.mxu0
    %v3364 = vpop.f32.mrf.mxu0
    %v3365 = vadd.f32 0.0, %v3364
    %v3366 = vpop.f32.mrf.mxu0
    %3367 = vmatprep.mubr.bf16.mxu0 %v3319
    %3368 = vmatmul.mubr.bf16.gmra.mxu0 %v3228
    %v3369 = vpop.f32.mrf.mxu0
    %v3370 = vadd.f32 0.0, %v3369
    %v3371 = vpop.f32.mrf.mxu0
    %v3372 = vpop.f32.mrf.mxu0
    %v3373 = vadd.f32 0.0, %v3372
    %v3374 = vpop.f32.mrf.mxu0
    %3375 = vmatprep.mubr.bf16.mxu0 %v3322
    %3376 = vmatmul.mubr.bf16.gmra.mxu0 %v3230
    %v3377 = vpop.f32.mrf.mxu0
    %v3378 = vadd.f32 0.0, %v3377
    %v3379 = vpop.f32.mrf.mxu0
    %v3380 = vpop.f32.mrf.mxu0
    %v3381 = vadd.f32 0.0, %v3380
    %v3382 = vpop.f32.mrf.mxu0
    %3383 = vmatprep.mubr.bf16.mxu0 %v3325
    %3384 = vmatmul.mubr.bf16.gmra.mxu0 %v3232
    %v3385 = vpop.f32.mrf.mxu0
    %v3386 = vadd.f32 0.0, %v3385
    %v3387 = vpop.f32.mrf.mxu0
    %v3388 = vpop.f32.mrf.mxu0
    %v3389 = vadd.f32 0.0, %v3388
    %v3390 = vpop.f32.mrf.mxu0
    %3391 = vdwg.mxu0
    %v3392 = vadd.f32 %v3218, %v3362
    %v3393 = vadd.f32 %v3219, %v3365
    %v3394 = vadd.f32 %v3220, %v3370
    %v3395 = vadd.f32 %v3221, %v3373
    %v3396 = vadd.f32 %v3222, %v3378
    %v3397 = vadd.f32 %v3223, %v3381
    %v3398 = vadd.f32 %v3224, %v3386
    %v3399 = vadd.f32 %v3225, %v3389
    %s3400 = scalar_lea.vmem %s5, 320
    %v3401 = vld [vmem:[%s3400] sm:$0xf]
    %v3402 = vld [vmem:[%s3400 + $0x4] sm:$0xf]
    %v3403 = vld [vmem:[%s3400 + $0x8] sm:$0xf]
    %v3404 = vld [vmem:[%s3400 + $0xc] sm:$0xf]
    %v3405 = vld [vmem:[%s3400 + $0x10] sm:$0xf]
    %v3406 = vld [vmem:[%s3400 + $0x14] sm:$0xf]
    %v3407 = vld [vmem:[%s3400 + $0x18] sm:$0xf]
    %v3408 = vld [vmem:[%s3400 + $0x1c] sm:$0xf]
    %v3409 = vld [vmem:[%s3400 + $0x20] sm:$0xf]
    %v3410 = vld [vmem:[%s3400 + $0x24] sm:$0xf]
    %v3411 = vld [vmem:[%s3400 + $0x28] sm:$0xf]
    %v3412 = vld [vmem:[%s3400 + $0x2c] sm:$0xf]
    %v3413 = vld [vmem:[%s3400 + $0x30] sm:$0xf]
    %v3414 = vld [vmem:[%s3400 + $0x34] sm:$0xf]
    %v3415 = vld [vmem:[%s3400 + $0x38] sm:$0xf]
    %v3416 = vld [vmem:[%s3400 + $0x3c] sm:$0xf]
    %v3417 = vld [vmem:[%s3400 + $0x40] sm:$0xf]
    %v3418 = vld [vmem:[%s3400 + $0x44] sm:$0xf]
    %v3419 = vld [vmem:[%s3400 + $0x48] sm:$0xf]
    %v3420 = vld [vmem:[%s3400 + $0x4c] sm:$0xf]
    %v3441 = vunpack.c.l.b16 %v3401
    %v3442 = vunpack.c.l.b16 %v3402
    %v3443 = vunpack.c.l.b16 %v3403
    %v3444 = vunpack.c.l.b16 %v3404
    %v3445 = vunpack.c.l.b16 %v3405
    %v3446 = vunpack.c.l.b16 %v3406
    %v3447 = vunpack.c.l.b16 %v3407
    %v3448 = vunpack.c.l.b16 %v3408
    %v3449 = vunpack.c.l.b16 %v3409
    %v3450 = vunpack.c.l.b16 %v3410
    %v3451 = vunpack.c.l.b16 %v3411
    %v3452 = vunpack.c.l.b16 %v3412
    %v3453 = vunpack.c.l.b16 %v3413
    %v3454 = vunpack.c.l.b16 %v3414
    %v3455 = vunpack.c.l.b16 %v3415
    %v3456 = vunpack.c.l.b16 %v3416
    %v3457 = vunpack.c.l.b16 %v3417
    %v3458 = vunpack.c.l.b16 %v3418
    %v3459 = vunpack.c.l.b16 %v3419
    %v3460 = vunpack.c.l.b16 %v3420
    %v3461 = vpack.c.b16 %v3442, %v3441
    %v3462 = vpack.c.b16 %v3444, %v3443
    %v3463 = vpack.c.b16 %v3446, %v3445
    %v3464 = vpack.c.b16 %v3448, %v3447
    %v3465 = vpack.c.b16 %v3450, %v3449
    %v3466 = vpack.c.b16 %v3452, %v3451
    %v3467 = vpack.c.b16 %v3454, %v3453
    %v3468 = vpack.c.b16 %v3456, %v3455
    %v3469 = vpack.c.b16 %v3458, %v3457
    %v3470 = vpack.c.b16 %v3460, %v3459
    %3481 = vmatprep.subr.bf16.mxu0 0
    %3482 = vmatpush1.bf16.msra.mxu0 %v3468
    %3483 = vmatprep.subr.bf16.mxu0 0
    %3484 = vmatpush1.bf16.msra.mxu0 %v3467
    %3485 = vmatprep.subr.bf16.mxu0 0
    %3486 = vmatpush1.bf16.msra.mxu0 %v3466
    %3487 = vmatprep.subr.bf16.mxu0 0
    %3488 = vmatpush1.bf16.msra.mxu0 %v3465
    %3489 = vmatprep.subr.bf16.mxu0 0
    %3490 = vmatpush1.bf16.msra.mxu0 %v3464
    %3491 = vmatprep.subr.bf16.mxu0 0
    %3492 = vmatpush1.bf16.msra.mxu0 %v3463
    %3493 = vmatprep.subr.bf16.mxu0 0
    %3494 = vmatpush1.bf16.msra.mxu0 %v3462
    %3495 = vmatprep.subr.bf16.mxu0 0
    %3496 = vmatpush1.bf16.msra.mxu0 %v3461
    %3497 = vmatprep.subr.bf16.mxu0 0
    %3498 = vmatpush2.bf16.msra.mxu0 0
    %3499 = vmatprep.subr.bf16.mxu0 0
    %3500 = vmatpush2.bf16.msra.mxu0 0
    %3501 = vmatprep.subr.bf16.mxu0 0
    %3502 = vmatpush2.bf16.msra.mxu0 0
    %3503 = vmatprep.subr.bf16.mxu0 0
    %3504 = vmatpush2.bf16.msra.mxu0 0
    %3505 = vmatprep.subr.bf16.mxu0 0
    %3506 = vmatpush2.bf16.msra.mxu0 0
    %3507 = vmatprep.subr.bf16.mxu0 0
    %3508 = vmatpush2.bf16.msra.mxu0 0
    %3509 = vmatprep.subr.bf16.mxu0 0
    %3510 = vmatpush2.bf16.msra.mxu0 %v3470
    %3511 = vmatprep.subr.bf16.mxu0 0
    %3512 = vmatpush2.bf16.msra.mxu0 %v3469
    %3513 = vmatprep.mubr.bf16.mxu0 %v2979
    %3514 = vmatmul.mubr.bf16.gmra.mxu0 %v2690
    %v3515 = vpop.f32.mrf.mxu0
    %v3516 = vadd.f32 0.0, %v3515
    %v3517 = vpop.f32.mrf.mxu0
    %v3518 = vpop.f32.mrf.mxu0
    %v3519 = vadd.f32 0.0, %v3518
    %v3520 = vpop.f32.mrf.mxu0
    %3521 = vmatprep.mubr.bf16.mxu0 %v2982
    %3522 = vmatmul.mubr.bf16.gmra.mxu0 %v2692
    %v3523 = vpop.f32.mrf.mxu0
    %v3524 = vadd.f32 0.0, %v3523
    %v3525 = vpop.f32.mrf.mxu0
    %v3526 = vpop.f32.mrf.mxu0
    %v3527 = vadd.f32 0.0, %v3526
    %v3528 = vpop.f32.mrf.mxu0
    %3529 = vmatprep.mubr.bf16.mxu0 %v2985
    %3530 = vmatmul.mubr.bf16.gmra.mxu0 %v2694
    %v3531 = vpop.f32.mrf.mxu0
    %v3532 = vadd.f32 0.0, %v3531
    %v3533 = vpop.f32.mrf.mxu0
    %v3534 = vpop.f32.mrf.mxu0
    %v3535 = vadd.f32 0.0, %v3534
    %v3536 = vpop.f32.mrf.mxu0
    %3537 = vmatprep.mubr.bf16.mxu0 %v2976
    %3538 = vmatmul.mubr.bf16.gmra.mxu0 %v2688
    %v3539 = vpop.f32.mrf.mxu0
    %v3540 = vadd.f32 0.0, %v3539
    %v3541 = vpop.f32.mrf.mxu0
    %v3542 = vpop.f32.mrf.mxu0
    %v3543 = vadd.f32 0.0, %v3542
    %v3544 = vpop.f32.mrf.mxu0
    %3545 = vdwg.mxu0
    %v3546 = vadd.f32 %v3392, %v3516
    %v3547 = vadd.f32 %v3393, %v3519
    %v3548 = vadd.f32 %v3394, %v3524
    %v3549 = vadd.f32 %v3395, %v3527
    %v3550 = vadd.f32 %v3396, %v3532
    %v3551 = vadd.f32 %v3397, %v3535
    %v3552 = vadd.f32 %v3398, %v3540
    %v3553 = vadd.f32 %v3399, %v3543
    %v3554 = vld [vmem:[%s6] sm:$0x1]
    %v3556 = vlaneseq
    %v3557 = vshrl.u32 %v3556, 7
    %v3558 = vsub.s32 0, %v3557
    %v3559 = vrot.slane %v3554, %v3558
    %v3561 = vadd.f32 %v3546, %v3559
    %v3562 = vadd.f32 %v3547, %v3559
    %v3563 = vadd.f32 %v3548, %v3559
    %v3564 = vadd.f32 %v3549, %v3559
    %v3565 = vadd.f32 %v3550, %v3559
    %v3566 = vadd.f32 %v3551, %v3559
    %v3567 = vadd.f32 %v3552, %v3559
    %v3568 = vadd.f32 %v3553, %v3559
    %v3569 = vmax.f32 %v3561, 0.0
    %v3570 = vmax.f32 %v3562, 0.0
    %v3571 = vmax.f32 %v3563, 0.0
    %v3572 = vmax.f32 %v3564, 0.0
    %v3573 = vmax.f32 %v3565, 0.0
    %v3574 = vmax.f32 %v3566, 0.0
    %v3575 = vmax.f32 %v3567, 0.0
    %v3576 = vmax.f32 %v3568, 0.0
    %vm3577 = vcmask 982016
    %3578 = vst.msk [vmem:[#allocation2] sm:$0xff] %vm3577, %v3569
    %3579 = vst.msk [vmem:[#allocation2 + $0x8] sm:$0xff] %vm3577, %v3570
    %3580 = vst.msk [vmem:[#allocation2 + $0x10] sm:$0xff] %vm3577, %v3571
    %3581 = vst.msk [vmem:[#allocation2 + $0x18] sm:$0xff] %vm3577, %v3572
    %3582 = vst.msk [vmem:[#allocation2 + $0x20] sm:$0xff] %vm3577, %v3573
    %3583 = vst.msk [vmem:[#allocation2 + $0x28] sm:$0xff] %vm3577, %v3574
    %3584 = vst.msk [vmem:[#allocation2 + $0x30] sm:$0xff] %vm3577, %v3575
    %3585 = vst.msk [vmem:[#allocation2 + $0x38] sm:$0xff] %vm3577, %v3576
    %v3586 = vld [vmem:[#allocation2] sm:$0x1]
    %vm3587 = vcmask 974848
    %3588 = vst.msk [vmem:[#allocation3] sm:$0x1] %vm3587, %v3586
    %v3589 = vld [vmem:[#allocation2 + $0x20] sm:$0x1]
    %3590 = vst.msk [vmem:[#allocation3 + $0x1] sm:$0x1] %vm3587, %v3589
    %v3591 = vld [vmem:[#allocation3] sm:$0x3]
    %v3592 = vpack.c.bf16 %v3591, %v3591
    %v3593 = vld [vmem:[%s7] sm:$0xf]
    %v3594 = vld [vmem:[%s7 + $0x4] sm:$0xf]
    %v3595 = vld [vmem:[%s7 + $0x8] sm:$0xf]
    %v3596 = vld [vmem:[%s7 + $0xc] sm:$0xf]
    %v3597 = vld [vmem:[%s7 + $0x10] sm:$0xf]
    %v3598 = vld [vmem:[%s7 + $0x14] sm:$0xf]
    %v3599 = vld [vmem:[%s7 + $0x18] sm:$0xf]
    %v3600 = vld [vmem:[%s7 + $0x1c] sm:$0xf]
    %v3601 = vld [vmem:[%s7 + $0x20] sm:$0xf]
    %v3602 = vld [vmem:[%s7 + $0x24] sm:$0xf]
    %v3603 = vld [vmem:[%s7 + $0x28] sm:$0xf]
    %v3604 = vld [vmem:[%s7 + $0x2c] sm:$0xf]
    %v3605 = vld [vmem:[%s7 + $0x30] sm:$0xf]
    %v3606 = vld [vmem:[%s7 + $0x34] sm:$0xf]
    %v3607 = vld [vmem:[%s7 + $0x38] sm:$0xf]
    %v3608 = vld [vmem:[%s8] sm:$0x1]
    %v3610 = vlaneseq
    %v3611 = vshrl.u32 %v3610, 7
    %v3612 = vsub.s32 0, %v3611
    %v3613 = vrot.slane %v3608, %v3612
    %v3630 = vunpack.c.l.b16 %v3593
    %v3631 = vunpack.c.l.b16 %v3594
    %v3632 = vunpack.c.l.b16 %v3595
    %v3633 = vunpack.c.l.b16 %v3596
    %v3634 = vunpack.c.l.b16 %v3597
    %v3635 = vunpack.c.l.b16 %v3598
    %v3636 = vunpack.c.l.b16 %v3599
    %v3637 = vunpack.c.l.b16 %v3600
    %v3638 = vunpack.c.l.b16 %v3601
    %v3639 = vunpack.c.l.b16 %v3602
    %v3640 = vunpack.c.l.b16 %v3603
    %v3641 = vunpack.c.l.b16 %v3604
    %v3642 = vunpack.c.l.b16 %v3605
    %v3643 = vunpack.c.l.b16 %v3606
    %v3644 = vunpack.c.l.b16 %v3607
    %v3645 = vpack.c.b16 %v3631, %v3630
    %v3646 = vpack.c.b16 %v3633, %v3632
    %v3647 = vpack.c.b16 %v3635, %v3634
    %v3648 = vpack.c.b16 %v3637, %v3636
    %v3649 = vpack.c.b16 %v3639, %v3638
    %v3650 = vpack.c.b16 %v3641, %v3640
    %v3651 = vpack.c.b16 %v3643, %v3642
    %v3652 = vpack.c.b16 %v3644, %v3644
    %v3661 = vsel %vm3577, %v3592, 0
    %v3664 = vsel %vm1415, %v3652, 0
    %3666 = vmatprep.subr.bf16.mxu0 0
    %3667 = vmatpush1.bf16.msra.mxu0 %v3664
    %3668 = vmatprep.subr.bf16.mxu0 0
    %3669 = vmatpush1.bf16.msra.mxu0 %v3651
    %3670 = vmatprep.subr.bf16.mxu0 0
    %3671 = vmatpush1.bf16.msra.mxu0 %v3650
    %3672 = vmatprep.subr.bf16.mxu0 0
    %3673 = vmatpush1.bf16.msra.mxu0 %v3649
    %3674 = vmatprep.subr.bf16.mxu0 0
    %3675 = vmatpush1.bf16.msra.mxu0 %v3648
    %3676 = vmatprep.subr.bf16.mxu0 0
    %3677 = vmatpush1.bf16.msra.mxu0 %v3647
    %3678 = vmatprep.subr.bf16.mxu0 0
    %3679 = vmatpush1.bf16.msra.mxu0 %v3646
    %3680 = vmatprep.subr.bf16.mxu0 0
    %3681 = vmatpush1.bf16.msra.mxu0 %v3645
    %3682 = vmatprep.subr.bf16.mxu0 0
    %3683 = vmatpush2.bf16.msra.mxu0 0
    %3684 = vmatprep.subr.bf16.mxu0 0
    %3685 = vmatpush2.bf16.msra.mxu0 0
    %3686 = vmatprep.subr.bf16.mxu0 0
    %3687 = vmatpush2.bf16.msra.mxu0 0
    %3688 = vmatprep.subr.bf16.mxu0 0
    %3689 = vmatpush2.bf16.msra.mxu0 0
    %3690 = vmatprep.subr.bf16.mxu0 0
    %3691 = vmatpush2.bf16.msra.mxu0 0
    %3692 = vmatprep.subr.bf16.mxu0 0
    %3693 = vmatpush2.bf16.msra.mxu0 0
    %3694 = vmatprep.subr.bf16.mxu0 0
    %3695 = vmatpush2.bf16.msra.mxu0 0
    %3696 = vmatprep.subr.bf16.mxu0 0
    %3697 = vmatpush2.bf16.msra.mxu0 0
    %3698 = vmatprep.mubr.bf16.mxu0 0
    %3699 = vmatmul.mubr.bf16.gmra.mxu0 %v3661
    %v3700 = vpop.f32.mrf.mxu0
    %v3701 = vadd.f32 %v3613, %v3700
    %v3702 = vpop.f32.mrf.mxu0
    %v3703 = vpop.f32.mrf.mxu0
    %v3704 = vpop.f32.mrf.mxu0
    %3705 = vdwg.mxu0
    %v3706 = vmax.f32 %v3701, 0.0
    %v3707 = vpack.c.bf16 %v3706, %v3706
    %v3708 = vld [vmem:[%s9] sm:$0xf]
    %v3709 = vld [vmem:[%s9 + $0x4] sm:$0xf]
    %v3710 = vld [vmem:[%s9 + $0x8] sm:$0xf]
    %v3711 = vld [vmem:[%s9 + $0xc] sm:$0xf]
    %v3712 = vld [vmem:[%s9 + $0x10] sm:$0xf]
    %v3713 = vld [vmem:[%s9 + $0x14] sm:$0xf]
    %v3714 = vld [vmem:[%s9 + $0x18] sm:$0xf]
    %v3715 = vld [vmem:[%s9 + $0x1c] sm:$0xf]
    %v3716 = vld [vmem:[%s9 + $0x20] sm:$0xf]
    %v3717 = vld [vmem:[%s9 + $0x24] sm:$0xf]
    %v3718 = vld [vmem:[%s9 + $0x28] sm:$0x3]
    %v3719 = vld [vmem:[%s10] sm:$0x1]
    %v3721 = vlaneseq
    %v3722 = vshrl.u32 %v3721, 7
    %v3723 = vsub.s32 0, %v3722
    %v3724 = vrot.slane %v3719, %v3723
    %v3737 = vunpack.c.l.b16 %v3708
    %v3738 = vunpack.c.l.b16 %v3709
    %v3739 = vunpack.c.l.b16 %v3710
    %v3740 = vunpack.c.l.b16 %v3711
    %v3741 = vunpack.c.l.b16 %v3712
    %v3742 = vunpack.c.l.b16 %v3713
    %v3743 = vunpack.c.l.b16 %v3714
    %v3744 = vunpack.c.l.b16 %v3715
    %v3745 = vunpack.c.l.b16 %v3716
    %v3746 = vunpack.c.l.b16 %v3717
    %v3747 = vunpack.c.l.b16 %v3718
    %v3748 = vpack.c.b16 %v3738, %v3737
    %v3749 = vpack.c.b16 %v3740, %v3739
    %v3750 = vpack.c.b16 %v3742, %v3741
    %v3751 = vpack.c.b16 %v3744, %v3743
    %v3752 = vpack.c.b16 %v3746, %v3745
    %v3753 = vpack.c.b16 %v3747, %v3747
    %vm3759 = vcmask 687104
    %v3761 = vsel %vm3759, %v3707, 0
    %vm3763 = vcmask 1041408
    %v3765 = vsel %vm3763, %v3753, 0
    %3767 = vmatprep.subr.bf16.mxu0 0
    %3768 = vmatpush1.bf16.msra.mxu0 0
    %3769 = vmatprep.subr.bf16.mxu0 0
    %3770 = vmatpush1.bf16.msra.mxu0 0
    %3771 = vmatprep.subr.bf16.mxu0 0
    %3772 = vmatpush1.bf16.msra.mxu0 %v3765
    %3773 = vmatprep.subr.bf16.mxu0 0
    %3774 = vmatpush1.bf16.msra.mxu0 %v3752
    %3775 = vmatprep.subr.bf16.mxu0 0
    %3776 = vmatpush1.bf16.msra.mxu0 %v3751
    %3777 = vmatprep.subr.bf16.mxu0 0
    %3778 = vmatpush1.bf16.msra.mxu0 %v3750
    %3779 = vmatprep.subr.bf16.mxu0 0
    %3780 = vmatpush1.bf16.msra.mxu0 %v3749
    %3781 = vmatprep.subr.bf16.mxu0 0
    %3782 = vmatpush1.bf16.msra.mxu0 %v3748
    %3783 = vmatprep.subr.bf16.mxu0 0
    %3784 = vmatpush2.bf16.msra.mxu0 0
    %3785 = vmatprep.subr.bf16.mxu0 0
    %3786 = vmatpush2.bf16.msra.mxu0 0
    %3787 = vmatprep.subr.bf16.mxu0 0
    %3788 = vmatpush2.bf16.msra.mxu0 0
    %3789 = vmatprep.subr.bf16.mxu0 0
    %3790 = vmatpush2.bf16.msra.mxu0 0
    %3791 = vmatprep.subr.bf16.mxu0 0
    %3792 = vmatpush2.bf16.msra.mxu0 0
    %3793 = vmatprep.subr.bf16.mxu0 0
    %3794 = vmatpush2.bf16.msra.mxu0 0
    %3795 = vmatprep.subr.bf16.mxu0 0
    %3796 = vmatpush2.bf16.msra.mxu0 0
    %3797 = vmatprep.subr.bf16.mxu0 0
    %3798 = vmatpush2.bf16.msra.mxu0 0
    %3799 = vmatprep.mubr.bf16.mxu0 0
    %3800 = vmatmul.mubr.bf16.gmra.mxu0 %v3761
    %v3801 = vpop.f32.mrf.mxu0
    %v3802 = vadd.f32 %v3724, %v3801
    %v3803 = vpop.f32.mrf.mxu0
    %v3804 = vpop.f32.mrf.mxu0
    %v3805 = vpop.f32.mrf.mxu0
    %3806 = vdwg.mxu0
    %3807 = vst [vmem:[#allocation4] sm:$0x3] %v3802
    // Predicated region
    $region46: #{net_forward.1} parent=1 // pred_check
      _
    $region47: #{net_forward.1} parent=1 // pred_check_branch
      %3809 = sbr.rel (0) target = $region49
    $region48: #{net_forward.1} parent=1 // pred_region
      %s3811 = ssub.s32 32, 32
      %3812 = vsyncadd [#allocation5], %s3811
      %s3814 = sshll.u32 [#allocation4], 4
      %s3815 = int_to_ptr.vmem [resolvable:$true] %s3814
      %3817 = dma.vmem_to_hbm [thread:$0]  %s3815, 32, %s11, [#allocation5]
    $region49: #{net_forward.1} parent=1 // pred_fallthru
      _
    // Predicated region
    $region50: #{net_forward.1} parent=1 // pred_check
      _
    $region51: #{net_forward.1} parent=1 // pred_check_branch
      %3819 = sbr.rel (0) target = $region53
    $region52: #{net_forward.1} parent=1 // pred_region
      %3820 = dma.done [#allocation5], 32
    $region53: #{net_forward.1} parent=1 // pred_fallthru
      _
    %3821 = vsyncpa [#allocation5], 1

</llo_original>
